<compile_context>
chip_gen: v7x
topology: tpu7x:2x2x1
jax: 0.10.0
libtpu: 0.0.40
codegen_flags: <defaults>
</compile_context>

<pallas_src>
import functools

import jax
import jax.numpy as jnp
import numpy as np
from jax.experimental import pallas as pl
from jax.experimental.pallas import tpu as pltpu


# ----------------------------- Pallas kernels ------------------------------ #

def _conv_stats_kernel(x0_ref, x1_ref, x2_ref, w_ref, b_ref, o_ref, st_ref,
                       *, H, W2):
    """Conv3d(3x3x3, pad=1) for one (n, d) output plane + fused BN statistics.

    x{0,1,2}_ref: (1, 1, 2, Hp, Wp2, Cin) bf16 padded input slabs for depths
                  d, d+1, d+2, pre-split into even/odd input columns.
    w_ref:        (27*Cin, Cp) bf16 im2col-ordered conv weights.
    b_ref:        (1, Cp) f32 conv bias.
    o_ref:        (1, 1, 2, H*W2, Cp) bf16 conv output (w-even / w-odd halves).
    st_ref:       (1, 1, 2, Cp) f32 per-plane [sum; sum of squares].
    """
    Cin = x0_ref.shape[-1]
    HW2 = H * W2
    Cp = o_ref.shape[-1]

    # Even / odd input-column slabs for depths d, d+1, d+2 (loaded once).
    slabs = [(xr[0, 0, 0], xr[0, 0, 1]) for xr in (x0_ref, x1_ref, x2_ref)]

    def build_patch(parity):
        # im2col patch for output columns w = 2*j + parity: rows are (h, j),
        # columns ordered (kd, kh, kw, ci) to match w_ref's row order.
        cols = []
        for kd in range(3):
            for kh in range(3):
                for kw in range(3):
                    c = parity + kw            # input column = 2*j + c
                    src = slabs[kd][c % 2]     # even / odd column slab
                    j0 = c // 2                # 0 or 1: contiguous static slice
                    cols.append(src[kh:kh + H, j0:j0 + W2, :])
        patch = jnp.concatenate(cols, axis=-1)          # (H, W2, 27*Cin) bf16
        return patch.reshape(HW2, 27 * Cin)

    patch = jnp.concatenate([build_patch(0), build_patch(1)], axis=0)

    # One fat MXU matmul per plane (M=2*H*W2, K=27*Cin, N=Cp), f32 accumulate.
    y = jnp.dot(patch, w_ref[...], preferred_element_type=jnp.float32)
    y = y + b_ref[...]                                   # conv bias, (1, Cp)

    yq = y.astype(jnp.bfloat16)                          # storage precision
    o_ref[0, 0] = yq.reshape(2, HW2, Cp)

    # Fused BN batch-statistic partials, computed from exactly what is stored.
    yf = yq.astype(jnp.float32)
    st_ref[0, 0] = jnp.concatenate(
        [jnp.sum(yf, axis=0, keepdims=True),
         jnp.sum(yf * yf, axis=0, keepdims=True)], axis=0)


def _bn_relu_pool_kernel(y_ref, ss_ref, o_ref, *, H, W2):
    """Fused BatchNorm(affine) + ReLU + AvgPool(1, 2, 2) for one (n, d) plane.

    y_ref:  (1, 1, 2, H*W2, Cp) bf16 conv output (w-even / w-odd halves).
    ss_ref: (2, Cp) f32 folded BN [scale; shift].
    o_ref:  (1, 1, H2, W2, Cp) f32 pooled output.
    """
    H2 = H // 2
    Cp = y_ref.shape[-1]
    ss = ss_ref[...]
    scale, shift = ss[0:1, :], ss[1:2, :]                # (1, Cp) each, read once

    # BN + ReLU are elementwise, so applying them per w-parity half and adding
    # the halves IS the W-direction pool (halves hold w-even / w-odd pixels).
    zE = jnp.maximum(y_ref[0, 0, 0].astype(jnp.float32) * scale + shift, 0.0)
    zO = jnp.maximum(y_ref[0, 0, 1].astype(jnp.float32) * scale + shift, 0.0)
    sW = zE + zO                                         # (H*W2, Cp) f32

    # H-direction pool: tile-aligned reshape + one VPU add (no matmul/gather).
    s = sW.reshape(H2, 2, W2, Cp)
    o_ref[0, 0] = (s[:, 0] + s[:, 1]) * 0.25


# ------------------------------ host wrapper -------------------------------- #

def down_block_3d(x_ncdhw, w, b, gamma, beta, *, eps=1e-5):
    """x: (N, Cin, D, H, W) f32. w: (Cout, Cin, 3, 3, 3). b/gamma/beta: (Cout,)."""
    N, Cin, D, H, W = x_ncdhw.shape
    Cout = w.shape[0]
    assert w.shape == (Cout, Cin, 3, 3, 3)
    # TODO(synk): general H/W need masking; layout prefers H, W multiples of 16.
    assert H % 2 == 0 and W % 2 == 0
    Hp, Wp = H + 2, W + 2
    H2, W2 = H // 2, W // 2
    Wp2 = Wp // 2                      # = W2 + 1
    HW2 = H * W2
    M = N * D * H * W
    Cp = ((Cout + 127) // 128) * 128   # lane-dense channel padding

    # ---- glue: layout conversion (cheap XLA ops; no im2col in HBM) ----
    x = jnp.transpose(x_ncdhw, (0, 2, 3, 4, 1)).astype(jnp.float32)     # NDHWC
    xp = jnp.pad(x, ((0, 0), (1, 1), (1, 1), (1, 1), (0, 0)))           # (N,D+2,Hp,Wp,Cin)
    # Split padded columns by parity and ship as bf16 once (halves A-side HBM).
    xps = xp.reshape(N, D + 2, Hp, Wp2, 2, Cin)
    xps = jnp.transpose(xps, (0, 1, 4, 2, 3, 5)).astype(jnp.bfloat16)   # (N,D+2,2,Hp,Wp2,Cin)

    # Weights (Cout, Cin, 3, 3, 3) -> rows ordered (kd, kh, kw, ci) -> (27*Cin, Cp) bf16.
    w_k = jnp.transpose(w, (2, 3, 4, 1, 0)).reshape(27 * Cin, Cout)
    w_k = jnp.pad(w_k, ((0, 0), (0, Cp - Cout))).astype(jnp.bfloat16)
    b_p = jnp.pad(b.astype(jnp.float32), (0, Cp - Cout)).reshape(1, Cp)

    cparams = pltpu.CompilerParams(
        dimension_semantics=("parallel", "parallel"),
        vmem_limit_bytes=48 * 1024 * 1024,   # <= 75% of v7x's 64 MiB; fine on v5e/v6e
    )

    # ---- kernel 1: one im2col MXU matmul per (n, d) plane + fused BN stats ----
    conv_out, stats = pl.pallas_call(
        functools.partial(_conv_stats_kernel, H=H, W2=W2),
        out_shape=(
            jax.ShapeDtypeStruct((N, D, 2, HW2, Cp), jnp.bfloat16),
            jax.ShapeDtypeStruct((N, D, 2, Cp), jnp.float32),
        ),
        grid_spec=pltpu.PrefetchScalarGridSpec(
            num_scalar_prefetch=0,
            grid=(N, D),
            in_specs=[
                pl.BlockSpec((1, 1, 2, Hp, Wp2, Cin), lambda n, d: (n, d, 0, 0, 0, 0)),
                pl.BlockSpec((1, 1, 2, Hp, Wp2, Cin), lambda n, d: (n, d + 1, 0, 0, 0, 0)),
                pl.BlockSpec((1, 1, 2, Hp, Wp2, Cin), lambda n, d: (n, d + 2, 0, 0, 0, 0)),
                pl.BlockSpec((27 * Cin, Cp), lambda n, d: (0, 0)),
                pl.BlockSpec((1, Cp), lambda n, d: (0, 0)),
            ],
            out_specs=(
                pl.BlockSpec((1, 1, 2, HW2, Cp), lambda n, d: (n, d, 0, 0, 0)),
                pl.BlockSpec((1, 1, 2, Cp), lambda n, d: (n, d, 0, 0)),
            ),
        ),
        compiler_params=cparams,
    )(xps, xps, xps, w_k, b_p)

    # ---- tiny glue: fold batch stats into per-channel scale/shift (f32) ----
    ch_sum = jnp.sum(stats[:, :, 0, :], axis=(0, 1))
    ch_sq = jnp.sum(stats[:, :, 1, :], axis=(0, 1))
    mean = ch_sum / M
    var = ch_sq / M - mean * mean            # biased variance (training-mode BN)
    inv = jax.lax.rsqrt(var + eps)
    gamma_p = jnp.pad(gamma.astype(jnp.float32), (0, Cp - Cout))
    beta_p = jnp.pad(beta.astype(jnp.float32), (0, Cp - Cout))
    scale = gamma_p * inv                    # padded channels: gamma=0 -> scale=0
    shift = beta_p - mean * scale
    ss = jnp.stack([scale, shift], axis=0)   # (2, Cp)

    # ---- kernel 2: fused BN + ReLU + 2x2 average pool (VPU adds only) ----
    pooled = pl.pallas_call(
        functools.partial(_bn_relu_pool_kernel, H=H, W2=W2),
        out_shape=jax.ShapeDtypeStruct((N, D, H2, W2, Cp), jnp.float32),
        grid_spec=pltpu.PrefetchScalarGridSpec(
            num_scalar_prefetch=0,
            grid=(N, D),
            in_specs=[
                pl.BlockSpec((1, 1, 2, HW2, Cp), lambda n, d: (n, d, 0, 0, 0)),
                pl.BlockSpec((2, Cp), lambda n, d: (0, 0)),
            ],
            out_specs=pl.BlockSpec((1, 1, H2, W2, Cp), lambda n, d: (n, d, 0, 0, 0)),
        ),
        compiler_params=cparams,
    )(conv_out, ss)

    out = pooled[..., :Cout]                        # drop padded channels
    return jnp.transpose(out, (0, 4, 1, 2, 3))      # back to NCDHW


# ------------------------------ pure-JAX reference --------------------------- #

def reference(x, w, b, gamma, beta, eps=1e-5):
    # Same bf16 rounding points as the kernel (MXU operands + conv_out storage);
    # all other math in f32.
    xq = x.astype(jnp.bfloat16).astype(jnp.float32)
    wq = w.astype(jnp.bfloat16).astype(jnp.float32)
    y = jax.lax.conv_general_dilated(
        xq, wq, window_strides=(1, 1, 1), padding=[(1, 1)] * 3,
        dimension_numbers=("NCDHW", "OIDHW", "NCDHW"),
        precision=jax.lax.Precision.HIGHEST,
    ) + b[None, :, None, None, None]
    y = y.astype(jnp.bfloat16).astype(jnp.float32)       # conv_out storage rounding
    mean = y.mean(axis=(0, 2, 3, 4), keepdims=True)
    var = y.var(axis=(0, 2, 3, 4), keepdims=True)
    y = (y - mean) * jax.lax.rsqrt(var + eps)
    y = y * gamma[None, :, None, None, None] + beta[None, :, None, None, None]
    y = jnp.maximum(y, 0.0)
    N, C, D, H, W = y.shape
    return y.reshape(N, C, D, H // 2, 2, W // 2, 2).mean(axis=(4, 6))


# ----------------------------------- main ------------------------------------ #

if __name__ == "__main__":
    N, Cin, Cout, D, H, W = 2, 4, 8, 4, 16, 16
    key = jax.random.PRNGKey(0)
    kx, kw_, kb = jax.random.split(key, 3)

    x = jax.random.normal(kx, (N, Cin, D, H, W), dtype=jnp.float32)

    # Deterministic parameter init (PyTorch Conv3d default: U(-1/sqrt(fan_in), +)).
    fan_in = Cin * 27
    bound = 1.0 / np.sqrt(fan_in)
    w = jax.random.uniform(kw_, (Cout, Cin, 3, 3, 3), jnp.float32, -bound, bound)
    b = jax.random.uniform(kb, (Cout,), jnp.float32, -bound, bound)
    gamma = jnp.linspace(0.5, 1.5, Cout, dtype=jnp.float32)
    beta = jnp.linspace(-0.2, 0.2, Cout, dtype=jnp.float32)

    run = jax.jit(functools.partial(down_block_3d, eps=1e-5))
    out = jax.block_until_ready(run(x, w, b, gamma, beta))

    ref = jax.block_until_ready(reference(x, w, b, gamma, beta))
    assert out.shape == (N, Cout, D, H // 2, W // 2), out.shape
    # Typical max-abs error ~1e-3 (bf16 storage rounding of the conv activations).
    err = float(jnp.max(jnp.abs(out - ref)))
    assert err < 2e-2, f"max abs error {err}"
    print("KERNEL_OK")
</pallas_src>

<mosaic_0001>
module attributes {stable_mosaic.version = 11 : i64} {
  func.func @_conv_stats_kernel(%arg0: i32, %arg1: i32, %arg2: memref<1x1x2x18x9x4xbf16, #tpu.memory_space<vmem>>, %arg3: memref<1x1x2x18x9x4xbf16, #tpu.memory_space<vmem>>, %arg4: memref<1x1x2x18x9x4xbf16, #tpu.memory_space<vmem>>, %arg5: memref<108x128xbf16, #tpu.memory_space<vmem>>, %arg6: memref<1x128xf32, #tpu.memory_space<vmem>>, %arg7: memref<1x1x2x128x128xbf16, #tpu.memory_space<vmem>>, %arg8: memref<1x1x2x128xf32, #tpu.memory_space<vmem>>) attributes {dimension_semantics = [#tpu.dimension_semantics<parallel>, #tpu.dimension_semantics<parallel>], iteration_bounds = array<i64: 2, 4>, scalar_prefetch = 0 : i64, scratch_operands = 0 : i64, tpu.core_type = #tpu.core_type<tc>, window_params = [{transform_indices = @transform_0, window_bounds = array<i64: 1, 1, 2, 18, 9, 4>}, {transform_indices = @transform_1, window_bounds = array<i64: 1, 1, 2, 18, 9, 4>}, {transform_indices = @transform_2, window_bounds = array<i64: 1, 1, 2, 18, 9, 4>}, {pipeline_mode = #tpu.pipeline_mode<synchronous>, transform_indices = @transform_3, window_bounds = array<i64: 108, 128>}, {pipeline_mode = #tpu.pipeline_mode<synchronous>, transform_indices = @transform_4, window_bounds = array<i64: 1, 128>}, {transform_indices = @transform_5, window_bounds = array<i64: 1, 1, 2, 128, 128>}, {transform_indices = @transform_6, window_bounds = array<i64: 1, 1, 2, 128>}]} {
    %c0 = arith.constant 0 : index
    %c0_0 = arith.constant 0 : index
    %c0_1 = arith.constant 0 : index
    %c0_2 = arith.constant 0 : index
    %c0_3 = arith.constant 0 : index
    %c0_4 = arith.constant 0 : index
    %0 = vector.load %arg2[%c0, %c0_0, %c0_1, %c0_2, %c0_3, %c0_4] : memref<1x1x2x18x9x4xbf16, #tpu.memory_space<vmem>>, vector<1x1x1x18x9x4xbf16>
    %1 = vector.shape_cast %0 : vector<1x1x1x18x9x4xbf16> to vector<18x9x4xbf16>
    %c0_5 = arith.constant 0 : index
    %c0_6 = arith.constant 0 : index
    %c1 = arith.constant 1 : index
    %c0_7 = arith.constant 0 : index
    %c0_8 = arith.constant 0 : index
    %c0_9 = arith.constant 0 : index
    %2 = vector.load %arg2[%c0_5, %c0_6, %c1, %c0_7, %c0_8, %c0_9] : memref<1x1x2x18x9x4xbf16, #tpu.memory_space<vmem>>, vector<1x1x1x18x9x4xbf16>
    %3 = vector.shape_cast %2 : vector<1x1x1x18x9x4xbf16> to vector<18x9x4xbf16>
    %c0_10 = arith.constant 0 : index
    %c0_11 = arith.constant 0 : index
    %c0_12 = arith.constant 0 : index
    %c0_13 = arith.constant 0 : index
    %c0_14 = arith.constant 0 : index
    %c0_15 = arith.constant 0 : index
    %4 = vector.load %arg3[%c0_10, %c0_11, %c0_12, %c0_13, %c0_14, %c0_15] : memref<1x1x2x18x9x4xbf16, #tpu.memory_space<vmem>>, vector<1x1x1x18x9x4xbf16>
    %5 = vector.shape_cast %4 : vector<1x1x1x18x9x4xbf16> to vector<18x9x4xbf16>
    %c0_16 = arith.constant 0 : index
    %c0_17 = arith.constant 0 : index
    %c1_18 = arith.constant 1 : index
    %c0_19 = arith.constant 0 : index
    %c0_20 = arith.constant 0 : index
    %c0_21 = arith.constant 0 : index
    %6 = vector.load %arg3[%c0_16, %c0_17, %c1_18, %c0_19, %c0_20, %c0_21] : memref<1x1x2x18x9x4xbf16, #tpu.memory_space<vmem>>, vector<1x1x1x18x9x4xbf16>
    %7 = vector.shape_cast %6 : vector<1x1x1x18x9x4xbf16> to vector<18x9x4xbf16>
    %c0_22 = arith.constant 0 : index
    %c0_23 = arith.constant 0 : index
    %c0_24 = arith.constant 0 : index
    %c0_25 = arith.constant 0 : index
    %c0_26 = arith.constant 0 : index
    %c0_27 = arith.constant 0 : index
    %8 = vector.load %arg4[%c0_22, %c0_23, %c0_24, %c0_25, %c0_26, %c0_27] : memref<1x1x2x18x9x4xbf16, #tpu.memory_space<vmem>>, vector<1x1x1x18x9x4xbf16>
    %9 = vector.shape_cast %8 : vector<1x1x1x18x9x4xbf16> to vector<18x9x4xbf16>
    %c0_28 = arith.constant 0 : index
    %c0_29 = arith.constant 0 : index
    %c1_30 = arith.constant 1 : index
    %c0_31 = arith.constant 0 : index
    %c0_32 = arith.constant 0 : index
    %c0_33 = arith.constant 0 : index
    %10 = vector.load %arg4[%c0_28, %c0_29, %c1_30, %c0_31, %c0_32, %c0_33] : memref<1x1x2x18x9x4xbf16, #tpu.memory_space<vmem>>, vector<1x1x1x18x9x4xbf16>
    %11 = vector.shape_cast %10 : vector<1x1x1x18x9x4xbf16> to vector<18x9x4xbf16>
    %12 = vector.extract_strided_slice %1 {offsets = [0, 0, 0], sizes = [16, 8, 4], strides = [1, 1, 1]} : vector<18x9x4xbf16> to vector<16x8x4xbf16>
    %13 = vector.extract_strided_slice %3 {offsets = [0, 0, 0], sizes = [16, 8, 4], strides = [1, 1, 1]} : vector<18x9x4xbf16> to vector<16x8x4xbf16>
    %14 = vector.extract_strided_slice %1 {offsets = [0, 1, 0], sizes = [16, 8, 4], strides = [1, 1, 1]} : vector<18x9x4xbf16> to vector<16x8x4xbf16>
    %15 = vector.extract_strided_slice %1 {offsets = [1, 0, 0], sizes = [16, 8, 4], strides = [1, 1, 1]} : vector<18x9x4xbf16> to vector<16x8x4xbf16>
    %16 = vector.extract_strided_slice %3 {offsets = [1, 0, 0], sizes = [16, 8, 4], strides = [1, 1, 1]} : vector<18x9x4xbf16> to vector<16x8x4xbf16>
    %17 = vector.extract_strided_slice %1 {offsets = [1, 1, 0], sizes = [16, 8, 4], strides = [1, 1, 1]} : vector<18x9x4xbf16> to vector<16x8x4xbf16>
    %18 = vector.extract_strided_slice %1 {offsets = [2, 0, 0], sizes = [16, 8, 4], strides = [1, 1, 1]} : vector<18x9x4xbf16> to vector<16x8x4xbf16>
    %19 = vector.extract_strided_slice %3 {offsets = [2, 0, 0], sizes = [16, 8, 4], strides = [1, 1, 1]} : vector<18x9x4xbf16> to vector<16x8x4xbf16>
    %20 = vector.extract_strided_slice %1 {offsets = [2, 1, 0], sizes = [16, 8, 4], strides = [1, 1, 1]} : vector<18x9x4xbf16> to vector<16x8x4xbf16>
    %21 = vector.extract_strided_slice %5 {offsets = [0, 0, 0], sizes = [16, 8, 4], strides = [1, 1, 1]} : vector<18x9x4xbf16> to vector<16x8x4xbf16>
    %22 = vector.extract_strided_slice %7 {offsets = [0, 0, 0], sizes = [16, 8, 4], strides = [1, 1, 1]} : vector<18x9x4xbf16> to vector<16x8x4xbf16>
    %23 = vector.extract_strided_slice %5 {offsets = [0, 1, 0], sizes = [16, 8, 4], strides = [1, 1, 1]} : vector<18x9x4xbf16> to vector<16x8x4xbf16>
    %24 = vector.extract_strided_slice %5 {offsets = [1, 0, 0], sizes = [16, 8, 4], strides = [1, 1, 1]} : vector<18x9x4xbf16> to vector<16x8x4xbf16>
    %25 = vector.extract_strided_slice %7 {offsets = [1, 0, 0], sizes = [16, 8, 4], strides = [1, 1, 1]} : vector<18x9x4xbf16> to vector<16x8x4xbf16>
    %26 = vector.extract_strided_slice %5 {offsets = [1, 1, 0], sizes = [16, 8, 4], strides = [1, 1, 1]} : vector<18x9x4xbf16> to vector<16x8x4xbf16>
    %27 = vector.extract_strided_slice %5 {offsets = [2, 0, 0], sizes = [16, 8, 4], strides = [1, 1, 1]} : vector<18x9x4xbf16> to vector<16x8x4xbf16>
    %28 = vector.extract_strided_slice %7 {offsets = [2, 0, 0], sizes = [16, 8, 4], strides = [1, 1, 1]} : vector<18x9x4xbf16> to vector<16x8x4xbf16>
    %29 = vector.extract_strided_slice %5 {offsets = [2, 1, 0], sizes = [16, 8, 4], strides = [1, 1, 1]} : vector<18x9x4xbf16> to vector<16x8x4xbf16>
    %30 = vector.extract_strided_slice %9 {offsets = [0, 0, 0], sizes = [16, 8, 4], strides = [1, 1, 1]} : vector<18x9x4xbf16> to vector<16x8x4xbf16>
    %31 = vector.extract_strided_slice %11 {offsets = [0, 0, 0], sizes = [16, 8, 4], strides = [1, 1, 1]} : vector<18x9x4xbf16> to vector<16x8x4xbf16>
    %32 = vector.extract_strided_slice %9 {offsets = [0, 1, 0], sizes = [16, 8, 4], strides = [1, 1, 1]} : vector<18x9x4xbf16> to vector<16x8x4xbf16>
    %33 = vector.extract_strided_slice %9 {offsets = [1, 0, 0], sizes = [16, 8, 4], strides = [1, 1, 1]} : vector<18x9x4xbf16> to vector<16x8x4xbf16>
    %34 = vector.extract_strided_slice %11 {offsets = [1, 0, 0], sizes = [16, 8, 4], strides = [1, 1, 1]} : vector<18x9x4xbf16> to vector<16x8x4xbf16>
    %35 = vector.extract_strided_slice %9 {offsets = [1, 1, 0], sizes = [16, 8, 4], strides = [1, 1, 1]} : vector<18x9x4xbf16> to vector<16x8x4xbf16>
    %36 = vector.extract_strided_slice %9 {offsets = [2, 0, 0], sizes = [16, 8, 4], strides = [1, 1, 1]} : vector<18x9x4xbf16> to vector<16x8x4xbf16>
    %37 = vector.extract_strided_slice %11 {offsets = [2, 0, 0], sizes = [16, 8, 4], strides = [1, 1, 1]} : vector<18x9x4xbf16> to vector<16x8x4xbf16>
    %38 = vector.extract_strided_slice %9 {offsets = [2, 1, 0], sizes = [16, 8, 4], strides = [1, 1, 1]} : vector<18x9x4xbf16> to vector<16x8x4xbf16>
    %39 = tpu.concatenate %12, %13, %14, %15, %16, %17, %18, %19, %20, %21, %22, %23, %24, %25, %26, %27 in 2 : vector<16x8x4xbf16>, vector<16x8x4xbf16>, vector<16x8x4xbf16>, vector<16x8x4xbf16>, vector<16x8x4xbf16>, vector<16x8x4xbf16>, vector<16x8x4xbf16>, vector<16x8x4xbf16>, vector<16x8x4xbf16>, vector<16x8x4xbf16>, vector<16x8x4xbf16>, vector<16x8x4xbf16>, vector<16x8x4xbf16>, vector<16x8x4xbf16>, vector<16x8x4xbf16>, vector<16x8x4xbf16> -> vector<16x8x64xbf16>
    %40 = tpu.concatenate %28, %29, %30, %31, %32, %33, %34, %35, %36, %37, %38 in 2 : vector<16x8x4xbf16>, vector<16x8x4xbf16>, vector<16x8x4xbf16>, vector<16x8x4xbf16>, vector<16x8x4xbf16>, vector<16x8x4xbf16>, vector<16x8x4xbf16>, vector<16x8x4xbf16>, vector<16x8x4xbf16>, vector<16x8x4xbf16>, vector<16x8x4xbf16> -> vector<16x8x44xbf16>
    %41 = tpu.concatenate %39, %40 in 2 : vector<16x8x64xbf16>, vector<16x8x44xbf16> -> vector<16x8x108xbf16>
    %42 = vector.shape_cast %41 : vector<16x8x108xbf16> to vector<128x108xbf16>
    %43 = vector.extract_strided_slice %3 {offsets = [0, 0, 0], sizes = [16, 8, 4], strides = [1, 1, 1]} : vector<18x9x4xbf16> to vector<16x8x4xbf16>
    %44 = vector.extract_strided_slice %1 {offsets = [0, 1, 0], sizes = [16, 8, 4], strides = [1, 1, 1]} : vector<18x9x4xbf16> to vector<16x8x4xbf16>
    %45 = vector.extract_strided_slice %3 {offsets = [0, 1, 0], sizes = [16, 8, 4], strides = [1, 1, 1]} : vector<18x9x4xbf16> to vector<16x8x4xbf16>
    %46 = vector.extract_strided_slice %3 {offsets = [1, 0, 0], sizes = [16, 8, 4], strides = [1, 1, 1]} : vector<18x9x4xbf16> to vector<16x8x4xbf16>
    %47 = vector.extract_strided_slice %1 {offsets = [1, 1, 0], sizes = [16, 8, 4], strides = [1, 1, 1]} : vector<18x9x4xbf16> to vector<16x8x4xbf16>
    %48 = vector.extract_strided_slice %3 {offsets = [1, 1, 0], sizes = [16, 8, 4], strides = [1, 1, 1]} : vector<18x9x4xbf16> to vector<16x8x4xbf16>
    %49 = vector.extract_strided_slice %3 {offsets = [2, 0, 0], sizes = [16, 8, 4], strides = [1, 1, 1]} : vector<18x9x4xbf16> to vector<16x8x4xbf16>
    %50 = vector.extract_strided_slice %1 {offsets = [2, 1, 0], sizes = [16, 8, 4], strides = [1, 1, 1]} : vector<18x9x4xbf16> to vector<16x8x4xbf16>
    %51 = vector.extract_strided_slice %3 {offsets = [2, 1, 0], sizes = [16, 8, 4], strides = [1, 1, 1]} : vector<18x9x4xbf16> to vector<16x8x4xbf16>
    %52 = vector.extract_strided_slice %7 {offsets = [0, 0, 0], sizes = [16, 8, 4], strides = [1, 1, 1]} : vector<18x9x4xbf16> to vector<16x8x4xbf16>
    %53 = vector.extract_strided_slice %5 {offsets = [0, 1, 0], sizes = [16, 8, 4], strides = [1, 1, 1]} : vector<18x9x4xbf16> to vector<16x8x4xbf16>
    %54 = vector.extract_strided_slice %7 {offsets = [0, 1, 0], sizes = [16, 8, 4], strides = [1, 1, 1]} : vector<18x9x4xbf16> to vector<16x8x4xbf16>
    %55 = vector.extract_strided_slice %7 {offsets = [1, 0, 0], sizes = [16, 8, 4], strides = [1, 1, 1]} : vector<18x9x4xbf16> to vector<16x8x4xbf16>
    %56 = vector.extract_strided_slice %5 {offsets = [1, 1, 0], sizes = [16, 8, 4], strides = [1, 1, 1]} : vector<18x9x4xbf16> to vector<16x8x4xbf16>
    %57 = vector.extract_strided_slice %7 {offsets = [1, 1, 0], sizes = [16, 8, 4], strides = [1, 1, 1]} : vector<18x9x4xbf16> to vector<16x8x4xbf16>
    %58 = vector.extract_strided_slice %7 {offsets = [2, 0, 0], sizes = [16, 8, 4], strides = [1, 1, 1]} : vector<18x9x4xbf16> to vector<16x8x4xbf16>
    %59 = vector.extract_strided_slice %5 {offsets = [2, 1, 0], sizes = [16, 8, 4], strides = [1, 1, 1]} : vector<18x9x4xbf16> to vector<16x8x4xbf16>
    %60 = vector.extract_strided_slice %7 {offsets = [2, 1, 0], sizes = [16, 8, 4], strides = [1, 1, 1]} : vector<18x9x4xbf16> to vector<16x8x4xbf16>
    %61 = vector.extract_strided_slice %11 {offsets = [0, 0, 0], sizes = [16, 8, 4], strides = [1, 1, 1]} : vector<18x9x4xbf16> to vector<16x8x4xbf16>
    %62 = vector.extract_strided_slice %9 {offsets = [0, 1, 0], sizes = [16, 8, 4], strides = [1, 1, 1]} : vector<18x9x4xbf16> to vector<16x8x4xbf16>
    %63 = vector.extract_strided_slice %11 {offsets = [0, 1, 0], sizes = [16, 8, 4], strides = [1, 1, 1]} : vector<18x9x4xbf16> to vector<16x8x4xbf16>
    %64 = vector.extract_strided_slice %11 {offsets = [1, 0, 0], sizes = [16, 8, 4], strides = [1, 1, 1]} : vector<18x9x4xbf16> to vector<16x8x4xbf16>
    %65 = vector.extract_strided_slice %9 {offsets = [1, 1, 0], sizes = [16, 8, 4], strides = [1, 1, 1]} : vector<18x9x4xbf16> to vector<16x8x4xbf16>
    %66 = vector.extract_strided_slice %11 {offsets = [1, 1, 0], sizes = [16, 8, 4], strides = [1, 1, 1]} : vector<18x9x4xbf16> to vector<16x8x4xbf16>
    %67 = vector.extract_strided_slice %11 {offsets = [2, 0, 0], sizes = [16, 8, 4], strides = [1, 1, 1]} : vector<18x9x4xbf16> to vector<16x8x4xbf16>
    %68 = vector.extract_strided_slice %9 {offsets = [2, 1, 0], sizes = [16, 8, 4], strides = [1, 1, 1]} : vector<18x9x4xbf16> to vector<16x8x4xbf16>
    %69 = vector.extract_strided_slice %11 {offsets = [2, 1, 0], sizes = [16, 8, 4], strides = [1, 1, 1]} : vector<18x9x4xbf16> to vector<16x8x4xbf16>
    %70 = tpu.concatenate %43, %44, %45, %46, %47, %48, %49, %50, %51, %52, %53, %54, %55, %56, %57, %58 in 2 : vector<16x8x4xbf16>, vector<16x8x4xbf16>, vector<16x8x4xbf16>, vector<16x8x4xbf16>, vector<16x8x4xbf16>, vector<16x8x4xbf16>, vector<16x8x4xbf16>, vector<16x8x4xbf16>, vector<16x8x4xbf16>, vector<16x8x4xbf16>, vector<16x8x4xbf16>, vector<16x8x4xbf16>, vector<16x8x4xbf16>, vector<16x8x4xbf16>, vector<16x8x4xbf16>, vector<16x8x4xbf16> -> vector<16x8x64xbf16>
    %71 = tpu.concatenate %59, %60, %61, %62, %63, %64, %65, %66, %67, %68, %69 in 2 : vector<16x8x4xbf16>, vector<16x8x4xbf16>, vector<16x8x4xbf16>, vector<16x8x4xbf16>, vector<16x8x4xbf16>, vector<16x8x4xbf16>, vector<16x8x4xbf16>, vector<16x8x4xbf16>, vector<16x8x4xbf16>, vector<16x8x4xbf16>, vector<16x8x4xbf16> -> vector<16x8x44xbf16>
    %72 = tpu.concatenate %70, %71 in 2 : vector<16x8x64xbf16>, vector<16x8x44xbf16> -> vector<16x8x108xbf16>
    %73 = vector.shape_cast %72 : vector<16x8x108xbf16> to vector<128x108xbf16>
    %74 = tpu.concatenate %42, %73 in 0 : vector<128x108xbf16>, vector<128x108xbf16> -> vector<256x108xbf16>
    %c0_34 = arith.constant 0 : index
    %c0_35 = arith.constant 0 : index
    %75 = vector.load %arg5[%c0_34, %c0_35] : memref<108x128xbf16, #tpu.memory_space<vmem>>, vector<108x128xbf16>
    %cst = arith.constant dense<0.000000e+00> : vector<256x128xf32>
    %76 = tpu.matmul %74, %75, %cst {dimension_numbers = #tpu.dot_dimension_numbers<[1], [0], [0], [1], [0, 0, 1, 1], [], []>} : vector<256x108xbf16>, vector<108x128xbf16>, vector<256x128xf32> -> vector<256x128xf32>
    %c0_36 = arith.constant 0 : index
    %c0_37 = arith.constant 0 : index
    %77 = vector.load %arg6[%c0_36, %c0_37] : memref<1x128xf32, #tpu.memory_space<vmem>>, vector<1x128xf32>
    %78 = vector.broadcast %77 : vector<1x128xf32> to vector<256x128xf32>
    %79 = arith.addf %76, %78 : vector<256x128xf32>
    %80 = arith.truncf %79 : vector<256x128xf32> to vector<256x128xbf16>
    %81 = vector.shape_cast %80 : vector<256x128xbf16> to vector<2x128x128xbf16>
    %c0_38 = arith.constant 0 : index
    %c0_39 = arith.constant 0 : index
    %c0_40 = arith.constant 0 : index
    %c0_41 = arith.constant 0 : index
    %c0_42 = arith.constant 0 : index
    %82 = vector.load %arg7[%c0_38, %c0_39, %c0_40, %c0_41, %c0_42] : memref<1x1x2x128x128xbf16, #tpu.memory_space<vmem>>, vector<1x1x2x128x128xbf16>
    %83 = vector.shape_cast %82 : vector<1x1x2x128x128xbf16> to vector<2x128x128xbf16>
    %84 = vector.shape_cast %81 : vector<2x128x128xbf16> to vector<1x1x2x128x128xbf16>
    tpu.vector_store %arg7[%c0_38, %c0_39, %c0_40, %c0_41, %c0_42], %84 {strides = array<i32>} : memref<1x1x2x128x128xbf16, #tpu.memory_space<vmem>>, vector<1x1x2x128x128xbf16>,
    %85 = arith.extf %80 : vector<256x128xbf16> to vector<256x128xf32>
    %cst_43 = arith.constant dense<0.000000e+00> : vector<128xf32>
    %86 = vector.multi_reduction <add>, %85, %cst_43 [0] : vector<256x128xf32> to vector<128xf32>
    %87 = vector.shape_cast %86 : vector<128xf32> to vector<1x128xf32>
    %88 = arith.mulf %85, %85 : vector<256x128xf32>
    %cst_44 = arith.constant dense<0.000000e+00> : vector<128xf32>
    %89 = vector.multi_reduction <add>, %88, %cst_44 [0] : vector<256x128xf32> to vector<128xf32>
    %90 = vector.shape_cast %89 : vector<128xf32> to vector<1x128xf32>
    %91 = tpu.concatenate %87, %90 in 0 : vector<1x128xf32>, vector<1x128xf32> -> vector<2x128xf32>
    %c0_45 = arith.constant 0 : index
    %c0_46 = arith.constant 0 : index
    %c0_47 = arith.constant 0 : index
    %c0_48 = arith.constant 0 : index
    %92 = vector.load %arg8[%c0_45, %c0_46, %c0_47, %c0_48] : memref<1x1x2x128xf32, #tpu.memory_space<vmem>>, vector<1x1x2x128xf32>
    %93 = vector.shape_cast %92 : vector<1x1x2x128xf32> to vector<2x128xf32>
    %94 = vector.shape_cast %91 : vector<2x128xf32> to vector<1x1x2x128xf32>
    tpu.vector_store %arg8[%c0_45, %c0_46, %c0_47, %c0_48], %94 {strides = array<i32>} : memref<1x1x2x128xf32, #tpu.memory_space<vmem>>, vector<1x1x2x128xf32>,
    return
  }
  func.func @transform_0(%arg0: i32, %arg1: i32) -> (i32, i32, i32, i32, i32, i32) {
    %c0_i32 = arith.constant 0 : i32
    %c0_i32_0 = arith.constant 0 : i32
    %c0_i32_1 = arith.constant 0 : i32
    %c0_i32_2 = arith.constant 0 : i32
    %c0_i32_3 = arith.constant 0 : i32
    return %arg0, %arg1, %c0_i32, %c0_i32_0, %c0_i32_1, %c0_i32_2 : i32, i32, i32, i32, i32, i32
  }
  func.func @transform_1(%arg0: i32, %arg1: i32) -> (i32, i32, i32, i32, i32, i32) {
    %c1_i32 = arith.constant 1 : i32
    %0 = arith.addi %arg1, %c1_i32 : i32
    %c0_i32 = arith.constant 0 : i32
    %c0_i32_0 = arith.constant 0 : i32
    %c0_i32_1 = arith.constant 0 : i32
    %c0_i32_2 = arith.constant 0 : i32
    %c0_i32_3 = arith.constant 0 : i32
    return %arg0, %0, %c0_i32, %c0_i32_0, %c0_i32_1, %c0_i32_2 : i32, i32, i32, i32, i32, i32
  }
  func.func @transform_2(%arg0: i32, %arg1: i32) -> (i32, i32, i32, i32, i32, i32) {
    %c2_i32 = arith.constant 2 : i32
    %0 = arith.addi %arg1, %c2_i32 : i32
    %c0_i32 = arith.constant 0 : i32
    %c0_i32_0 = arith.constant 0 : i32
    %c0_i32_1 = arith.constant 0 : i32
    %c0_i32_2 = arith.constant 0 : i32
    %c0_i32_3 = arith.constant 0 : i32
    return %arg0, %0, %c0_i32, %c0_i32_0, %c0_i32_1, %c0_i32_2 : i32, i32, i32, i32, i32, i32
  }
  func.func @transform_3(%arg0: i32, %arg1: i32) -> (i32, i32) {
    %c0_i32 = arith.constant 0 : i32
    %c0_i32_0 = arith.constant 0 : i32
    %c0_i32_1 = arith.constant 0 : i32
    return %c0_i32, %c0_i32_0 : i32, i32
  }
  func.func @transform_4(%arg0: i32, %arg1: i32) -> (i32, i32) {
    %c0_i32 = arith.constant 0 : i32
    %c0_i32_0 = arith.constant 0 : i32
    %c0_i32_1 = arith.constant 0 : i32
    return %c0_i32, %c0_i32_0 : i32, i32
  }
  func.func @transform_5(%arg0: i32, %arg1: i32) -> (i32, i32, i32, i32, i32) {
    %c0_i32 = arith.constant 0 : i32
    %c0_i32_0 = arith.constant 0 : i32
    %c0_i32_1 = arith.constant 0 : i32
    %c0_i32_2 = arith.constant 0 : i32
    return %arg0, %arg1, %c0_i32, %c0_i32_0, %c0_i32_1 : i32, i32, i32, i32, i32
  }
  func.func @transform_6(%arg0: i32, %arg1: i32) -> (i32, i32, i32, i32) {
    %c0_i32 = arith.constant 0 : i32
    %c0_i32_0 = arith.constant 0 : i32
    %c0_i32_1 = arith.constant 0 : i32
    return %arg0, %arg1, %c0_i32, %c0_i32_0 : i32, i32, i32, i32
  }
}

module attributes {stable_mosaic.version = 11 : i64} {
  func.func @_bn_relu_pool_kernel(%arg0: i32, %arg1: i32, %arg2: memref<1x1x2x128x128xbf16, #tpu.memory_space<vmem>>, %arg3: memref<2x128xf32, #tpu.memory_space<vmem>>, %arg4: memref<1x1x8x8x128xf32, #tpu.memory_space<vmem>>) attributes {dimension_semantics = [#tpu.dimension_semantics<parallel>, #tpu.dimension_semantics<parallel>], iteration_bounds = array<i64: 2, 4>, scalar_prefetch = 0 : i64, scratch_operands = 0 : i64, tpu.core_type = #tpu.core_type<tc>, window_params = [{transform_indices = @transform_0, window_bounds = array<i64: 1, 1, 2, 128, 128>}, {pipeline_mode = #tpu.pipeline_mode<synchronous>, transform_indices = @transform_1, window_bounds = array<i64: 2, 128>}, {transform_indices = @transform_2, window_bounds = array<i64: 1, 1, 8, 8, 128>}]} {
    %c0 = arith.constant 0 : index
    %c0_0 = arith.constant 0 : index
    %0 = vector.load %arg3[%c0, %c0_0] : memref<2x128xf32, #tpu.memory_space<vmem>>, vector<2x128xf32>
    %1 = vector.extract_strided_slice %0 {offsets = [0, 0], sizes = [1, 128], strides = [1, 1]} : vector<2x128xf32> to vector<1x128xf32>
    %2 = vector.extract_strided_slice %0 {offsets = [1, 0], sizes = [1, 128], strides = [1, 1]} : vector<2x128xf32> to vector<1x128xf32>
    %c0_1 = arith.constant 0 : index
    %c0_2 = arith.constant 0 : index
    %c0_3 = arith.constant 0 : index
    %c0_4 = arith.constant 0 : index
    %c0_5 = arith.constant 0 : index
    %3 = vector.load %arg2[%c0_1, %c0_2, %c0_3, %c0_4, %c0_5] : memref<1x1x2x128x128xbf16, #tpu.memory_space<vmem>>, vector<1x1x1x128x128xbf16>
    %4 = vector.shape_cast %3 : vector<1x1x1x128x128xbf16> to vector<128x128xbf16>
    %5 = arith.extf %4 : vector<128x128xbf16> to vector<128x128xf32>
    %6 = vector.broadcast %1 : vector<1x128xf32> to vector<128x128xf32>
    %7 = arith.mulf %5, %6 : vector<128x128xf32>
    %8 = vector.broadcast %2 : vector<1x128xf32> to vector<128x128xf32>
    %9 = arith.addf %7, %8 : vector<128x128xf32>
    %cst = arith.constant 0.000000e+00 : f32
    %10 = vector.broadcast %cst : f32 to vector<128x128xf32>
    %11 = arith.maximumf %9, %10 : vector<128x128xf32>
    %c0_6 = arith.constant 0 : index
    %c0_7 = arith.constant 0 : index
    %c1 = arith.constant 1 : index
    %c0_8 = arith.constant 0 : index
    %c0_9 = arith.constant 0 : index
    %12 = vector.load %arg2[%c0_6, %c0_7, %c1, %c0_8, %c0_9] : memref<1x1x2x128x128xbf16, #tpu.memory_space<vmem>>, vector<1x1x1x128x128xbf16>
    %13 = vector.shape_cast %12 : vector<1x1x1x128x128xbf16> to vector<128x128xbf16>
    %14 = arith.extf %13 : vector<128x128xbf16> to vector<128x128xf32>
    %15 = vector.broadcast %1 : vector<1x128xf32> to vector<128x128xf32>
    %16 = arith.mulf %14, %15 : vector<128x128xf32>
    %17 = vector.broadcast %2 : vector<1x128xf32> to vector<128x128xf32>
    %18 = arith.addf %16, %17 : vector<128x128xf32>
    %cst_10 = arith.constant 0.000000e+00 : f32
    %19 = vector.broadcast %cst_10 : f32 to vector<128x128xf32>
    %20 = arith.maximumf %18, %19 : vector<128x128xf32>
    %21 = arith.addf %11, %20 : vector<128x128xf32>
    %22 = vector.shape_cast %21 : vector<128x128xf32> to vector<8x2x8x128xf32>
    %23 = vector.extract_strided_slice %22 {offsets = [0, 0, 0, 0], sizes = [8, 1, 8, 128], strides = [1, 1, 1, 1]} : vector<8x2x8x128xf32> to vector<8x1x8x128xf32>
    %24 = vector.shape_cast %23 : vector<8x1x8x128xf32> to vector<8x8x128xf32>
    %25 = vector.extract_strided_slice %22 {offsets = [0, 1, 0, 0], sizes = [8, 1, 8, 128], strides = [1, 1, 1, 1]} : vector<8x2x8x128xf32> to vector<8x1x8x128xf32>
    %26 = vector.shape_cast %25 : vector<8x1x8x128xf32> to vector<8x8x128xf32>
    %27 = arith.addf %24, %26 : vector<8x8x128xf32>
    %cst_11 = arith.constant 2.500000e-01 : f32
    %28 = vector.broadcast %cst_11 : f32 to vector<8x8x128xf32>
    %29 = arith.mulf %27, %28 : vector<8x8x128xf32>
    %c0_12 = arith.constant 0 : index
    %c0_13 = arith.constant 0 : index
    %c0_14 = arith.constant 0 : index
    %c0_15 = arith.constant 0 : index
    %c0_16 = arith.constant 0 : index
    %30 = vector.load %arg4[%c0_12, %c0_13, %c0_14, %c0_15, %c0_16] : memref<1x1x8x8x128xf32, #tpu.memory_space<vmem>>, vector<1x1x8x8x128xf32>
    %31 = vector.shape_cast %30 : vector<1x1x8x8x128xf32> to vector<8x8x128xf32>
    %32 = vector.shape_cast %29 : vector<8x8x128xf32> to vector<1x1x8x8x128xf32>
    tpu.vector_store %arg4[%c0_12, %c0_13, %c0_14, %c0_15, %c0_16], %32 {strides = array<i32>} : memref<1x1x8x8x128xf32, #tpu.memory_space<vmem>>, vector<1x1x8x8x128xf32>,
    return
  }
  func.func @transform_0(%arg0: i32, %arg1: i32) -> (i32, i32, i32, i32, i32) {
    %c0_i32 = arith.constant 0 : i32
    %c0_i32_0 = arith.constant 0 : i32
    %c0_i32_1 = arith.constant 0 : i32
    %c0_i32_2 = arith.constant 0 : i32
    return %arg0, %arg1, %c0_i32, %c0_i32_0, %c0_i32_1 : i32, i32, i32, i32, i32
  }
  func.func @transform_1(%arg0: i32, %arg1: i32) -> (i32, i32) {
    %c0_i32 = arith.constant 0 : i32
    %c0_i32_0 = arith.constant 0 : i32
    %c0_i32_1 = arith.constant 0 : i32
    return %c0_i32, %c0_i32_0 : i32, i32
  }
  func.func @transform_2(%arg0: i32, %arg1: i32) -> (i32, i32, i32, i32, i32) {
    %c0_i32 = arith.constant 0 : i32
    %c0_i32_0 = arith.constant 0 : i32
    %c0_i32_1 = arith.constant 0 : i32
    %c0_i32_2 = arith.constant 0 : i32
    return %arg0, %arg1, %c0_i32, %c0_i32_0, %c0_i32_1 : i32, i32, i32, i32, i32
  }
}

</mosaic_0001>

<llo_original>
// kernel: down_block_3d.3
$region0: #{down_block_3d.3}
  #allocation0 [shape = 'u32[]', space=smem, size = 0x4, offset = 0x4, fixed_abs, tag = 'smem constant byte address 0x4 - core index']
  #allocation1 [shape = 'u32[144,128]{1,0:T(1,128)}', space=vmem, size = 0x12000, scoped, tag = 'internal scratch']
  %s0 = inlined_call_operand.vmem [shape: bf16[2,4,2,128,128], index: 0, kind: input, shape index: {}]
  %s1 = inlined_call_operand.vmem [shape: f32[2,128], index: 1, kind: input, shape index: {}]
  %s2 = inlined_call_operand.vmem [shape: f32[2,4,8,8,128], index: 2, kind: output, shape index: {}]
  %s3 = sld [smem:[#allocation0]]
  $region41: #{down_block_3d.3} parent=0
    _
  %s5 = ssub.s32 1, %s3
  %s6 = scalar_select 0, %s5, %s3
  loop: start=0, step=1, limit=10
  $region2: #{down_block_3d.3} parent=0 // loop_pre_header
    _
  $region3: #{down_block_3d.3} parent=0 // loop_header
    %s8 = sphi 0, %s12
    %p9 = scmp.ge.s32.totalorder %s8, 10
    %s15 = sphi 0, %s27
    %s16 = sphi 0, %s23
    %s17 = sphi 0, %s15
    %s18 = sphi 0, %s16
    %s19 = sphi 0, %s17
    %s20 = sphi 0, %s18
    %s32 = sphi 0, %s34
    %s35 = sphi 0, %s32
    %s36 = sphi 0, %s35
    %s52 = sphi 0, %s36
    %s56 = sphi 0, %s56
    %s58 = sphi 0, %s56
    %s59 = sphi 0, %s58
    %s73 = sphi 0, %s59
    %s81 = sphi 0, %s83
    %s84 = sphi 0, %s81
    %s85 = sphi 0, %s84
    %s101 = sphi 0, %s85
  $region4: #{down_block_3d.3} parent=0 // loop_header_branch
    %11 = sbr.rel (%p9) target = $region8
  $region5: #{down_block_3d.3} parent=0 // loop_body
    %s13 = ssub.s32 %s8, 1
    %s14 = ssub.s32 %s8, 2
    %s21 = sadd.s32 1, %s16
    %p22 = scmp.ge.s32.totalorder %s21, 4
    %s23 = scalar_select %p22, 0, %s21
    %s24 = sadd.s32 1, %s15
    %s25 = scalar_select %p22, %s24, %s15
    %p26 = scmp.ge.s32.totalorder %s25, 2
    %s27 = scalar_select %p26, 0, %s25
    %s28 = ssub.s32 %s15, %s27
    %s29 = ssub.s32 %s16, %s23
    %s30 = sor.u32 %s28, %s29
    %p31 = scmp.eq.s32.totalorder %s30, 0
    %s33 = sadd.s32 %s32, 1
    %s34 = scalar_select %p31, %s32, %s33
    %p37 = pneg %p31
    %p38 = scmp.eq.s32.totalorder %s8, 7
    %p39 = por %p37, %p38
    %p40 = scmp.ne.s32.totalorder %s32, %s35
    %p41 = scmp.eq.s32.totalorder %s8, 0
    %p42 = por %p40, %p41
    %p43 = scmp.ne.s32.totalorder %s32, %s35
    %p44 = scmp.eq.s32.totalorder %s13, 7
    %p45 = por %p43, %p44
    %p46 = scmp.ne.s32.totalorder %s35, %s36
    %p47 = scmp.eq.s32.totalorder %s13, 0
    %p48 = por %p46, %p47
    %p49 = scmp.ne.s32.totalorder %s35, %s36
    %p50 = scmp.eq.s32.totalorder %s14, 7
    %p51 = por %p49, %p50
    %p53 = scmp.ne.s32.totalorder %s36, %s52
    %p54 = scmp.eq.s32.totalorder %s14, 0
    %p55 = por %p53, %p54
    %s57 = sadd.s32 %s56, 1
    %p60 = scmp.eq.s32.totalorder %s8, 7
    %p61 = scmp.ne.s32.totalorder %s56, %s58
    %p62 = scmp.eq.s32.totalorder %s8, 0
    %p63 = por %p61, %p62
    %p64 = scmp.ne.s32.totalorder %s56, %s58
    %p65 = scmp.eq.s32.totalorder %s13, 7
    %p66 = por %p64, %p65
    %p67 = scmp.ne.s32.totalorder %s58, %s59
    %p68 = scmp.eq.s32.totalorder %s13, 0
    %p69 = por %p67, %p68
    %p70 = scmp.ne.s32.totalorder %s58, %s59
    %p71 = scmp.eq.s32.totalorder %s14, 7
    %p72 = por %p70, %p71
    %p74 = scmp.ne.s32.totalorder %s59, %s73
    %p75 = scmp.eq.s32.totalorder %s14, 0
    %p76 = por %p74, %p75
    %s77 = ssub.s32 %s15, %s27
    %s78 = ssub.s32 %s16, %s23
    %s79 = sor.u32 %s77, %s78
    %p80 = scmp.eq.s32.totalorder %s79, 0
    %s82 = sadd.s32 %s81, 1
    %s83 = scalar_select %p80, %s81, %s82
    %p86 = pneg %p80
    %p87 = scmp.eq.s32.totalorder %s8, 7
    %p88 = por %p86, %p87
    %p89 = scmp.ne.s32.totalorder %s81, %s84
    %p90 = scmp.eq.s32.totalorder %s8, 0
    %p91 = por %p89, %p90
    %p92 = scmp.ne.s32.totalorder %s81, %s84
    %p93 = scmp.eq.s32.totalorder %s13, 7
    %p94 = por %p92, %p93
    %p95 = scmp.ne.s32.totalorder %s84, %s85
    %p96 = scmp.eq.s32.totalorder %s13, 0
    %p97 = por %p95, %p96
    %p98 = scmp.ne.s32.totalorder %s84, %s85
    %p99 = scmp.eq.s32.totalorder %s14, 7
    %p100 = por %p98, %p99
    %p102 = scmp.ne.s32.totalorder %s85, %s101
    %p103 = scmp.eq.s32.totalorder %s14, 0
    %p104 = por %p102, %p103
    %p105 = scmp.le.s32.totalorder 1, %s8
    %p106 = scmp.lt.s32.totalorder %s8, 9
    %p107 = pnand %p105, %p106
    %p108 = pneg %p107
    // Predicated region
    $region9: #{down_block_3d.3} parent=5 // pred_check
      _
    $region10: #{down_block_3d.3} parent=5 // pred_check_branch
      %110 = sbr.rel (%p107) target = $region12
    $region11: #{down_block_3d.3} parent=5 // pred_region
      %s111 = ssub.s32 %s8, 1
      // Predicated region
      $region13: #{down_block_3d.3} parent=11 // pred_check
        %p112 = pneg %p69
      $region14: #{down_block_3d.3} parent=11 // pred_check_branch
        %114 = sbr.rel (%p112) target = $region16
      $region15: #{down_block_3d.3} parent=11 // pred_region
        _
      $region16: #{down_block_3d.3} parent=11 // pred_fallthru
        _
    $region12: #{down_block_3d.3} parent=5 // pred_fallthru
      _
    %p115 = scmp.lt.s32.totalorder %s8, 8
    // Predicated region
    $region17: #{down_block_3d.3} parent=5 // pred_check
      %p116 = pneg %p115
    $region18: #{down_block_3d.3} parent=5 // pred_check_branch
      %118 = sbr.rel (%p116) target = $region20
    $region19: #{down_block_3d.3} parent=5 // pred_region
      // Predicated region
      $region21: #{down_block_3d.3} parent=19 // pred_check
        %p119 = pneg %p42
      $region22: #{down_block_3d.3} parent=19 // pred_check_branch
        %121 = sbr.rel (%p119) target = $region24
      $region23: #{down_block_3d.3} parent=19 // pred_region
        %p122 = scmp.lt.s32.totalorder %s15, 1
        %s123 = scalar_select %p122, %s15, 1
        %p124 = scmp.lt.s32.totalorder %s16, 3
        %s125 = scalar_select %p124, %s16, 3
        %s126 = smul.addr %s125, 32
        %s127 = smul.addr %s123, 128
        %s128 = sadd.s32 %s126, %s127
        %s129 = smul.addr %s128, 4
        %s130 = scalar_lea.vmem %s0, %s129
      $region24: #{down_block_3d.3} parent=19 // pred_fallthru
        _
    $region20: #{down_block_3d.3} parent=5 // pred_fallthru
      _
    %p131 = scmp.le.s32.totalorder 1, %s8
    %p132 = scmp.lt.s32.totalorder %s8, 9
    %p133 = pnand %p131, %p132
    %p134 = pneg %p133
    // Predicated region
    $region25: #{down_block_3d.3} parent=5 // pred_check
      _
    $region26: #{down_block_3d.3} parent=5 // pred_check_branch
      %136 = sbr.rel (%p133) target = $region28
    $region27: #{down_block_3d.3} parent=5 // pred_region
      %s137 = ssub.s32 %s8, 1
      %p138 = scmp.lt.s32.totalorder %s17, 1
      %s139 = scalar_select %p138, %s17, 1
      %p140 = scmp.lt.s32.totalorder %s18, 3
      %s141 = scalar_select %p140, %s18, 3
      %s142 = smul.addr %s141, 32
      %s143 = smul.addr %s139, 128
      %s144 = sadd.s32 %s142, %s143
      %s145 = smul.addr %s144, 4
      %s146 = scalar_lea.vmem %s0, %s145
      %p147 = pneg %p48
      %p148 = pneg %p45
      %p149 = pneg %p69
      %p150 = pneg %p66
      %p151 = pneg %p97
      %p152 = pneg %p94
      %p153 = scmp.lt.s32.totalorder %s17, 1
      %s154 = scalar_select %p153, %s17, 1
      %p155 = scmp.lt.s32.totalorder %s18, 3
      %s156 = scalar_select %p155, %s18, 3
      %s157 = smul.addr %s156, 8
      %s158 = smul.addr %s154, 32
      %s159 = sadd.s32 %s157, %s158
      %s160 = smul.addr %s159, 8
      %s161 = scalar_lea.vmem %s2, %s160
      %p162 = scmp.lt.s32.totalorder %s17, 1
      %s163 = scalar_select %p162, %s17, 1
      %p164 = scmp.lt.s32.totalorder %s18, 3
      %s165 = scalar_select %p164, %s18, 3
      %s166 = smul.addr %s165, 32
      %s167 = smul.addr %s163, 128
      %s168 = sadd.s32 %s166, %s167
      %s169 = smul.addr %s168, 4
      %s170 = scalar_lea.vmem %s0, %s169
      %p171 = scmp.lt.s32.totalorder %s17, 1
      %s172 = scalar_select %p171, %s17, 1
      %p173 = scmp.lt.s32.totalorder %s18, 3
      %s174 = scalar_select %p173, %s18, 3
      %s175 = smul.addr %s174, 8
      %s176 = smul.addr %s172, 32
      %s177 = sadd.s32 %s175, %s176
      %s178 = smul.addr %s177, 8
      %s179 = scalar_lea.vmem %s2, %s178
      %v180 = vld [vmem:[%s1] sm:$0x3]
      %v181 = vld [vmem:[%s170] sm:$0xf]
      %v182 = vld [vmem:[%s170 + $0x4] sm:$0xf]
      %v183 = vld [vmem:[%s170 + $0x8] sm:$0xf]
      %v184 = vld [vmem:[%s170 + $0xc] sm:$0xf]
      %v185 = vld [vmem:[%s170 + $0x10] sm:$0xf]
      %v186 = vld [vmem:[%s170 + $0x14] sm:$0xf]
      %v187 = vld [vmem:[%s170 + $0x18] sm:$0xf]
      %v188 = vld [vmem:[%s170 + $0x1c] sm:$0xf]
      %v189 = vld [vmem:[%s170 + $0x20] sm:$0xf]
      %v190 = vld [vmem:[%s170 + $0x24] sm:$0xf]
      %v191 = vld [vmem:[%s170 + $0x28] sm:$0xf]
      %v192 = vld [vmem:[%s170 + $0x2c] sm:$0xf]
      %v193 = vld [vmem:[%s170 + $0x30] sm:$0xf]
      %v194 = vld [vmem:[%s170 + $0x34] sm:$0xf]
      %v195 = vld [vmem:[%s170 + $0x38] sm:$0xf]
      %v196 = vld [vmem:[%s170 + $0x3c] sm:$0xf]
      %v197 = vunpack.c.l.bf16 %v181
      %v198 = vunpack.c.l.bf16 %v182
      %v199 = vunpack.c.l.bf16 %v183
      %v200 = vunpack.c.l.bf16 %v184
      %v201 = vunpack.c.l.bf16 %v185
      %v202 = vunpack.c.l.bf16 %v186
      %v203 = vunpack.c.l.bf16 %v187
      %v204 = vunpack.c.l.bf16 %v188
      %v205 = vunpack.c.l.bf16 %v189
      %v206 = vunpack.c.l.bf16 %v190
      %v207 = vunpack.c.l.bf16 %v191
      %v208 = vunpack.c.l.bf16 %v192
      %v209 = vunpack.c.l.bf16 %v193
      %v210 = vunpack.c.l.bf16 %v194
      %v211 = vunpack.c.l.bf16 %v195
      %v212 = vunpack.c.l.bf16 %v196
      %v213 = vlaneseq
      %v214 = vshrl.u32 %v213, 7
      %v215 = vsub.s32 0, %v214
      %v216 = vrot.slane %v180, %v215
      %v217 = vmul.f32 %v197, %v216
      %v218 = vmul.f32 %v198, %v216
      %v219 = vmul.f32 %v199, %v216
      %v220 = vmul.f32 %v200, %v216
      %v221 = vmul.f32 %v201, %v216
      %v222 = vmul.f32 %v202, %v216
      %v223 = vmul.f32 %v203, %v216
      %v224 = vmul.f32 %v204, %v216
      %v225 = vmul.f32 %v205, %v216
      %v226 = vmul.f32 %v206, %v216
      %v227 = vmul.f32 %v207, %v216
      %v228 = vmul.f32 %v208, %v216
      %v229 = vmul.f32 %v209, %v216
      %v230 = vmul.f32 %v210, %v216
      %v231 = vmul.f32 %v211, %v216
      %v232 = vmul.f32 %v212, %v216
      %v233 = vlaneseq
      %v234 = vshrl.u32 %v233, 7
      %v235 = vsub.s32 1, %v234
      %v236 = vrot.slane %v180, %v235
      %v237 = vadd.f32 %v217, %v236
      %v238 = vadd.f32 %v218, %v236
      %v239 = vadd.f32 %v219, %v236
      %v240 = vadd.f32 %v220, %v236
      %v241 = vadd.f32 %v221, %v236
      %v242 = vadd.f32 %v222, %v236
      %v243 = vadd.f32 %v223, %v236
      %v244 = vadd.f32 %v224, %v236
      %v245 = vadd.f32 %v225, %v236
      %v246 = vadd.f32 %v226, %v236
      %v247 = vadd.f32 %v227, %v236
      %v248 = vadd.f32 %v228, %v236
      %v249 = vadd.f32 %v229, %v236
      %v250 = vadd.f32 %v230, %v236
      %v251 = vadd.f32 %v231, %v236
      %v252 = vadd.f32 %v232, %v236
      %v253 = vmax.f32 %v237, 0.0
      %v254 = vmax.f32 %v238, 0.0
      %v255 = vmax.f32 %v239, 0.0
      %v256 = vmax.f32 %v240, 0.0
      %v257 = vmax.f32 %v241, 0.0
      %v258 = vmax.f32 %v242, 0.0
      %v259 = vmax.f32 %v243, 0.0
      %v260 = vmax.f32 %v244, 0.0
      %v261 = vmax.f32 %v245, 0.0
      %v262 = vmax.f32 %v246, 0.0
      %v263 = vmax.f32 %v247, 0.0
      %v264 = vmax.f32 %v248, 0.0
      %v265 = vmax.f32 %v249, 0.0
      %v266 = vmax.f32 %v250, 0.0
      %v267 = vmax.f32 %v251, 0.0
      %v268 = vmax.f32 %v252, 0.0
      %s269 = scalar_lea.vmem %s170, 64
      %v270 = vld [vmem:[%s269] sm:$0xf]
      %v271 = vld [vmem:[%s269 + $0x4] sm:$0xf]
      %v272 = vld [vmem:[%s269 + $0x8] sm:$0xf]
      %v273 = vld [vmem:[%s269 + $0xc] sm:$0xf]
      %v274 = vld [vmem:[%s269 + $0x10] sm:$0xf]
      %v275 = vld [vmem:[%s269 + $0x14] sm:$0xf]
      %v276 = vld [vmem:[%s269 + $0x18] sm:$0xf]
      %v277 = vld [vmem:[%s269 + $0x1c] sm:$0xf]
      %v278 = vld [vmem:[%s269 + $0x20] sm:$0xf]
      %v279 = vld [vmem:[%s269 + $0x24] sm:$0xf]
      %v280 = vld [vmem:[%s269 + $0x28] sm:$0xf]
      %v281 = vld [vmem:[%s269 + $0x2c] sm:$0xf]
      %v282 = vld [vmem:[%s269 + $0x30] sm:$0xf]
      %v283 = vld [vmem:[%s269 + $0x34] sm:$0xf]
      %v284 = vld [vmem:[%s269 + $0x38] sm:$0xf]
      %v285 = vld [vmem:[%s269 + $0x3c] sm:$0xf]
      %v286 = vunpack.c.l.bf16 %v270
      %v287 = vunpack.c.l.bf16 %v271
      %v288 = vunpack.c.l.bf16 %v272
      %v289 = vunpack.c.l.bf16 %v273
      %v290 = vunpack.c.l.bf16 %v274
      %v291 = vunpack.c.l.bf16 %v275
      %v292 = vunpack.c.l.bf16 %v276
      %v293 = vunpack.c.l.bf16 %v277
      %v294 = vunpack.c.l.bf16 %v278
      %v295 = vunpack.c.l.bf16 %v279
      %v296 = vunpack.c.l.bf16 %v280
      %v297 = vunpack.c.l.bf16 %v281
      %v298 = vunpack.c.l.bf16 %v282
      %v299 = vunpack.c.l.bf16 %v283
      %v300 = vunpack.c.l.bf16 %v284
      %v301 = vunpack.c.l.bf16 %v285
      %v302 = vmul.f32 %v286, %v216
      %v303 = vmul.f32 %v287, %v216
      %v304 = vmul.f32 %v288, %v216
      %v305 = vmul.f32 %v289, %v216
      %v306 = vmul.f32 %v290, %v216
      %v307 = vmul.f32 %v291, %v216
      %v308 = vmul.f32 %v292, %v216
      %v309 = vmul.f32 %v293, %v216
      %v310 = vmul.f32 %v294, %v216
      %v311 = vmul.f32 %v295, %v216
      %v312 = vmul.f32 %v296, %v216
      %v313 = vmul.f32 %v297, %v216
      %v314 = vmul.f32 %v298, %v216
      %v315 = vmul.f32 %v299, %v216
      %v316 = vmul.f32 %v300, %v216
      %v317 = vmul.f32 %v301, %v216
      %v318 = vadd.f32 %v302, %v236
      %v319 = vadd.f32 %v303, %v236
      %v320 = vadd.f32 %v304, %v236
      %v321 = vadd.f32 %v305, %v236
      %v322 = vadd.f32 %v306, %v236
      %v323 = vadd.f32 %v307, %v236
      %v324 = vadd.f32 %v308, %v236
      %v325 = vadd.f32 %v309, %v236
      %v326 = vadd.f32 %v310, %v236
      %v327 = vadd.f32 %v311, %v236
      %v328 = vadd.f32 %v312, %v236
      %v329 = vadd.f32 %v313, %v236
      %v330 = vadd.f32 %v314, %v236
      %v331 = vadd.f32 %v315, %v236
      %v332 = vadd.f32 %v316, %v236
      %v333 = vadd.f32 %v317, %v236
      %v334 = vmax.f32 %v318, 0.0
      %v335 = vmax.f32 %v319, 0.0
      %v336 = vmax.f32 %v320, 0.0
      %v337 = vmax.f32 %v321, 0.0
      %v338 = vmax.f32 %v322, 0.0
      %v339 = vmax.f32 %v323, 0.0
      %v340 = vmax.f32 %v324, 0.0
      %v341 = vmax.f32 %v325, 0.0
      %v342 = vmax.f32 %v326, 0.0
      %v343 = vmax.f32 %v327, 0.0
      %v344 = vmax.f32 %v328, 0.0
      %v345 = vmax.f32 %v329, 0.0
      %v346 = vmax.f32 %v330, 0.0
      %v347 = vmax.f32 %v331, 0.0
      %v348 = vmax.f32 %v332, 0.0
      %v349 = vmax.f32 %v333, 0.0
      %v350 = vadd.f32 %v253, %v334
      %v351 = vadd.f32 %v254, %v335
      %v352 = vadd.f32 %v255, %v336
      %v353 = vadd.f32 %v256, %v337
      %v354 = vadd.f32 %v257, %v338
      %v355 = vadd.f32 %v258, %v339
      %v356 = vadd.f32 %v259, %v340
      %v357 = vadd.f32 %v260, %v341
      %v358 = vadd.f32 %v261, %v342
      %v359 = vadd.f32 %v262, %v343
      %v360 = vadd.f32 %v263, %v344
      %v361 = vadd.f32 %v264, %v345
      %v362 = vadd.f32 %v265, %v346
      %v363 = vadd.f32 %v266, %v347
      %v364 = vadd.f32 %v267, %v348
      %v365 = vadd.f32 %v268, %v349
      %v366 = vadd.f32 %v350, %v351
      %v367 = vadd.f32 %v352, %v353
      %v368 = vadd.f32 %v354, %v355
      %v369 = vadd.f32 %v356, %v357
      %v370 = vadd.f32 %v358, %v359
      %v371 = vadd.f32 %v360, %v361
      %v372 = vadd.f32 %v362, %v363
      %v373 = vadd.f32 %v364, %v365
      %v374 = vmul.f32 %v366, 0.25
      %v375 = vmul.f32 %v367, 0.25
      %v376 = vmul.f32 %v368, 0.25
      %v377 = vmul.f32 %v369, 0.25
      %v378 = vmul.f32 %v370, 0.25
      %v379 = vmul.f32 %v371, 0.25
      %v380 = vmul.f32 %v372, 0.25
      %v381 = vmul.f32 %v373, 0.25
      %382 = vst [vmem:[%s179] sm:$0xff] %v374
      %383 = vst [vmem:[%s179 + $0x8] sm:$0xff] %v375
      %384 = vst [vmem:[%s179 + $0x10] sm:$0xff] %v376
      %385 = vst [vmem:[%s179 + $0x18] sm:$0xff] %v377
      %386 = vst [vmem:[%s179 + $0x20] sm:$0xff] %v378
      %387 = vst [vmem:[%s179 + $0x28] sm:$0xff] %v379
      %388 = vst [vmem:[%s179 + $0x30] sm:$0xff] %v380
      %389 = vst [vmem:[%s179 + $0x38] sm:$0xff] %v381
      %p390 = scmp.lt.s32.totalorder %s17, 1
      %s391 = scalar_select %p390, %s17, 1
      %p392 = scmp.lt.s32.totalorder %s18, 3
      %s393 = scalar_select %p392, %s18, 3
      %s394 = smul.addr %s393, 8
      %s395 = smul.addr %s391, 32
      %s396 = sadd.s32 %s394, %s395
      %s397 = smul.addr %s396, 8
      %s398 = scalar_lea.vmem %s2, %s397
      // Predicated region
      $region29: #{down_block_3d.3} parent=27 // pred_check
        %p399 = pneg %p94
      $region30: #{down_block_3d.3} parent=27 // pred_check_branch
        %401 = sbr.rel (%p399) target = $region32
      $region31: #{down_block_3d.3} parent=27 // pred_region
        _
      $region32: #{down_block_3d.3} parent=27 // pred_fallthru
        _
    $region28: #{down_block_3d.3} parent=5 // pred_fallthru
      _
    %p402 = scmp.le.s32.totalorder 2, %s8
    // Predicated region
    $region33: #{down_block_3d.3} parent=5 // pred_check
      %p403 = pneg %p402
    $region34: #{down_block_3d.3} parent=5 // pred_check_branch
      %405 = sbr.rel (%p403) target = $region36
    $region35: #{down_block_3d.3} parent=5 // pred_region
      %s406 = ssub.s32 %s8, 2
      // Predicated region
      $region37: #{down_block_3d.3} parent=35 // pred_check
        %p407 = pneg %p100
      $region38: #{down_block_3d.3} parent=35 // pred_check_branch
        %409 = sbr.rel (%p407) target = $region40
      $region39: #{down_block_3d.3} parent=35 // pred_region
        %p410 = scmp.lt.s32.totalorder %s19, 1
        %s411 = scalar_select %p410, %s19, 1
        %p412 = scmp.lt.s32.totalorder %s20, 3
        %s413 = scalar_select %p412, %s20, 3
        %s414 = smul.addr %s413, 8
        %s415 = smul.addr %s411, 32
        %s416 = sadd.s32 %s414, %s415
        %s417 = smul.addr %s416, 8
        %s418 = scalar_lea.vmem %s2, %s417
      $region40: #{down_block_3d.3} parent=35 // pred_fallthru
        _
    $region36: #{down_block_3d.3} parent=5 // pred_fallthru
      _
  $region6: #{down_block_3d.3} parent=0 // loop_footer
    %s12 = sadd.s32 1, %s8
  $region7: #{down_block_3d.3} parent=0 // loop_footer_branch
    %7 = sbr.rel target = $region3
  $region8: #{down_block_3d.3} parent=0 // loop_exit
    _

// kernel: down_block_3d.2
$region0: #{down_block_3d.2}
  #allocation0 [shape = 'u32[]', space=smem, size = 0x4, offset = 0x4, fixed_abs, tag = 'smem constant byte address 0x4 - core index']
  #allocation1 [shape = 'u32[144,128]{1,0:T(1,128)}', space=vmem, size = 0x12000, scoped, tag = 'internal scratch']
  %s0 = inlined_call_operand.vmem [shape: bf16[2,6,2,18,9,4], index: 0, kind: input, shape index: {}, may-alias: {0,1,2}]
  %s1 = inlined_call_operand.vmem [shape: bf16[2,6,2,18,9,4], index: 1, kind: input, shape index: {}, may-alias: {0,1,2}]
  %s2 = inlined_call_operand.vmem [shape: bf16[2,6,2,18,9,4], index: 2, kind: input, shape index: {}, may-alias: {0,1,2}]
  %s3 = inlined_call_operand.vmem [shape: bf16[108,128], index: 3, kind: input, shape index: {}]
  %s4 = inlined_call_operand.vmem [shape: f32[1,128], index: 4, kind: input, shape index: {}]
  %s5 = inlined_call_operand.vmem [shape: bf16[2,4,2,128,128], index: 5, kind: output, shape index: {0}]
  %s6 = inlined_call_operand.vmem [shape: f32[2,4,2,128], index: 6, kind: output, shape index: {1}]
  %7 = xla_tuple %s5, %s6
  %s8 = sld [smem:[#allocation0]]
  $region61: #{down_block_3d.2} parent=0
    _
  %s10 = ssub.s32 1, %s8
  %s11 = scalar_select 0, %s10, %s8
  loop: start=0, step=1, limit=10
  $region2: #{down_block_3d.2} parent=0 // loop_pre_header
    _
  $region3: #{down_block_3d.2} parent=0 // loop_header
    %s13 = sphi 0, %s17
    %p14 = scmp.ge.s32.totalorder %s13, 10
    %s20 = sphi 0, %s32
    %s21 = sphi 0, %s28
    %s22 = sphi 0, %s20
    %s23 = sphi 0, %s21
    %s24 = sphi 0, %s22
    %s25 = sphi 0, %s23
    %s37 = sphi 0, %s39
    %s40 = sphi 0, %s37
    %s41 = sphi 0, %s40
    %s57 = sphi 0, %s41
    %s67 = sphi 0, %s69
    %s70 = sphi 0, %s67
    %s71 = sphi 0, %s70
    %s87 = sphi 0, %s71
    %s97 = sphi 0, %s99
    %s100 = sphi 0, %s97
    %s101 = sphi 0, %s100
    %s117 = sphi 0, %s101
    %s121 = sphi 0, %s121
    %s123 = sphi 0, %s121
    %s124 = sphi 0, %s123
    %s138 = sphi 0, %s124
    %s142 = sphi 0, %s142
    %s144 = sphi 0, %s142
    %s145 = sphi 0, %s144
    %s159 = sphi 0, %s145
    %s167 = sphi 0, %s169
    %s170 = sphi 0, %s167
    %s171 = sphi 0, %s170
    %s187 = sphi 0, %s171
    %s195 = sphi 0, %s197
    %s198 = sphi 0, %s195
    %s199 = sphi 0, %s198
    %s215 = sphi 0, %s199
  $region4: #{down_block_3d.2} parent=0 // loop_header_branch
    %16 = sbr.rel (%p14) target = $region8
  $region5: #{down_block_3d.2} parent=0 // loop_body
    %s18 = ssub.s32 %s13, 1
    %s19 = ssub.s32 %s13, 2
    %s26 = sadd.s32 1, %s21
    %p27 = scmp.ge.s32.totalorder %s26, 4
    %s28 = scalar_select %p27, 0, %s26
    %s29 = sadd.s32 1, %s20
    %s30 = scalar_select %p27, %s29, %s20
    %p31 = scmp.ge.s32.totalorder %s30, 2
    %s32 = scalar_select %p31, 0, %s30
    %s33 = ssub.s32 %s20, %s32
    %s34 = ssub.s32 %s21, %s28
    %s35 = sor.u32 %s33, %s34
    %p36 = scmp.eq.s32.totalorder %s35, 0
    %s38 = sadd.s32 %s37, 1
    %s39 = scalar_select %p36, %s37, %s38
    %p42 = pneg %p36
    %p43 = scmp.eq.s32.totalorder %s13, 7
    %p44 = por %p42, %p43
    %p45 = scmp.ne.s32.totalorder %s37, %s40
    %p46 = scmp.eq.s32.totalorder %s13, 0
    %p47 = por %p45, %p46
    %p48 = scmp.ne.s32.totalorder %s37, %s40
    %p49 = scmp.eq.s32.totalorder %s18, 7
    %p50 = por %p48, %p49
    %p51 = scmp.ne.s32.totalorder %s40, %s41
    %p52 = scmp.eq.s32.totalorder %s18, 0
    %p53 = por %p51, %p52
    %p54 = scmp.ne.s32.totalorder %s40, %s41
    %p55 = scmp.eq.s32.totalorder %s19, 7
    %p56 = por %p54, %p55
    %p58 = scmp.ne.s32.totalorder %s41, %s57
    %p59 = scmp.eq.s32.totalorder %s19, 0
    %p60 = por %p58, %p59
    %s61 = sadd.s32 %s21, 1
    %s62 = sadd.s32 %s28, 1
    %s63 = ssub.s32 %s20, %s32
    %s64 = ssub.s32 %s61, %s62
    %s65 = sor.u32 %s63, %s64
    %p66 = scmp.eq.s32.totalorder %s65, 0
    %s68 = sadd.s32 %s67, 1
    %s69 = scalar_select %p66, %s67, %s68
    %p72 = pneg %p66
    %p73 = scmp.eq.s32.totalorder %s13, 7
    %p74 = por %p72, %p73
    %p75 = scmp.ne.s32.totalorder %s67, %s70
    %p76 = scmp.eq.s32.totalorder %s13, 0
    %p77 = por %p75, %p76
    %p78 = scmp.ne.s32.totalorder %s67, %s70
    %p79 = scmp.eq.s32.totalorder %s18, 7
    %p80 = por %p78, %p79
    %p81 = scmp.ne.s32.totalorder %s70, %s71
    %p82 = scmp.eq.s32.totalorder %s18, 0
    %p83 = por %p81, %p82
    %p84 = scmp.ne.s32.totalorder %s70, %s71
    %p85 = scmp.eq.s32.totalorder %s19, 7
    %p86 = por %p84, %p85
    %p88 = scmp.ne.s32.totalorder %s71, %s87
    %p89 = scmp.eq.s32.totalorder %s19, 0
    %p90 = por %p88, %p89
    %s91 = sadd.s32 %s21, 2
    %s92 = sadd.s32 %s28, 2
    %s93 = ssub.s32 %s20, %s32
    %s94 = ssub.s32 %s91, %s92
    %s95 = sor.u32 %s93, %s94
    %p96 = scmp.eq.s32.totalorder %s95, 0
    %s98 = sadd.s32 %s97, 1
    %s99 = scalar_select %p96, %s97, %s98
    %p102 = pneg %p96
    %p103 = scmp.eq.s32.totalorder %s13, 7
    %p104 = por %p102, %p103
    %p105 = scmp.ne.s32.totalorder %s97, %s100
    %p106 = scmp.eq.s32.totalorder %s13, 0
    %p107 = por %p105, %p106
    %p108 = scmp.ne.s32.totalorder %s97, %s100
    %p109 = scmp.eq.s32.totalorder %s18, 7
    %p110 = por %p108, %p109
    %p111 = scmp.ne.s32.totalorder %s100, %s101
    %p112 = scmp.eq.s32.totalorder %s18, 0
    %p113 = por %p111, %p112
    %p114 = scmp.ne.s32.totalorder %s100, %s101
    %p115 = scmp.eq.s32.totalorder %s19, 7
    %p116 = por %p114, %p115
    %p118 = scmp.ne.s32.totalorder %s101, %s117
    %p119 = scmp.eq.s32.totalorder %s19, 0
    %p120 = por %p118, %p119
    %s122 = sadd.s32 %s121, 1
    %p125 = scmp.eq.s32.totalorder %s13, 7
    %p126 = scmp.ne.s32.totalorder %s121, %s123
    %p127 = scmp.eq.s32.totalorder %s13, 0
    %p128 = por %p126, %p127
    %p129 = scmp.ne.s32.totalorder %s121, %s123
    %p130 = scmp.eq.s32.totalorder %s18, 7
    %p131 = por %p129, %p130
    %p132 = scmp.ne.s32.totalorder %s123, %s124
    %p133 = scmp.eq.s32.totalorder %s18, 0
    %p134 = por %p132, %p133
    %p135 = scmp.ne.s32.totalorder %s123, %s124
    %p136 = scmp.eq.s32.totalorder %s19, 7
    %p137 = por %p135, %p136
    %p139 = scmp.ne.s32.totalorder %s124, %s138
    %p140 = scmp.eq.s32.totalorder %s19, 0
    %p141 = por %p139, %p140
    %s143 = sadd.s32 %s142, 1
    %p146 = scmp.eq.s32.totalorder %s13, 7
    %p147 = scmp.ne.s32.totalorder %s142, %s144
    %p148 = scmp.eq.s32.totalorder %s13, 0
    %p149 = por %p147, %p148
    %p150 = scmp.ne.s32.totalorder %s142, %s144
    %p151 = scmp.eq.s32.totalorder %s18, 7
    %p152 = por %p150, %p151
    %p153 = scmp.ne.s32.totalorder %s144, %s145
    %p154 = scmp.eq.s32.totalorder %s18, 0
    %p155 = por %p153, %p154
    %p156 = scmp.ne.s32.totalorder %s144, %s145
    %p157 = scmp.eq.s32.totalorder %s19, 7
    %p158 = por %p156, %p157
    %p160 = scmp.ne.s32.totalorder %s145, %s159
    %p161 = scmp.eq.s32.totalorder %s19, 0
    %p162 = por %p160, %p161
    %s163 = ssub.s32 %s20, %s32
    %s164 = ssub.s32 %s21, %s28
    %s165 = sor.u32 %s163, %s164
    %p166 = scmp.eq.s32.totalorder %s165, 0
    %s168 = sadd.s32 %s167, 1
    %s169 = scalar_select %p166, %s167, %s168
    %p172 = pneg %p166
    %p173 = scmp.eq.s32.totalorder %s13, 7
    %p174 = por %p172, %p173
    %p175 = scmp.ne.s32.totalorder %s167, %s170
    %p176 = scmp.eq.s32.totalorder %s13, 0
    %p177 = por %p175, %p176
    %p178 = scmp.ne.s32.totalorder %s167, %s170
    %p179 = scmp.eq.s32.totalorder %s18, 7
    %p180 = por %p178, %p179
    %p181 = scmp.ne.s32.totalorder %s170, %s171
    %p182 = scmp.eq.s32.totalorder %s18, 0
    %p183 = por %p181, %p182
    %p184 = scmp.ne.s32.totalorder %s170, %s171
    %p185 = scmp.eq.s32.totalorder %s19, 7
    %p186 = por %p184, %p185
    %p188 = scmp.ne.s32.totalorder %s171, %s187
    %p189 = scmp.eq.s32.totalorder %s19, 0
    %p190 = por %p188, %p189
    %s191 = ssub.s32 %s20, %s32
    %s192 = ssub.s32 %s21, %s28
    %s193 = sor.u32 %s191, %s192
    %p194 = scmp.eq.s32.totalorder %s193, 0
    %s196 = sadd.s32 %s195, 1
    %s197 = scalar_select %p194, %s195, %s196
    %p200 = pneg %p194
    %p201 = scmp.eq.s32.totalorder %s13, 7
    %p202 = por %p200, %p201
    %p203 = scmp.ne.s32.totalorder %s195, %s198
    %p204 = scmp.eq.s32.totalorder %s13, 0
    %p205 = por %p203, %p204
    %p206 = scmp.ne.s32.totalorder %s195, %s198
    %p207 = scmp.eq.s32.totalorder %s18, 7
    %p208 = por %p206, %p207
    %p209 = scmp.ne.s32.totalorder %s198, %s199
    %p210 = scmp.eq.s32.totalorder %s18, 0
    %p211 = por %p209, %p210
    %p212 = scmp.ne.s32.totalorder %s198, %s199
    %p213 = scmp.eq.s32.totalorder %s19, 7
    %p214 = por %p212, %p213
    %p216 = scmp.ne.s32.totalorder %s199, %s215
    %p217 = scmp.eq.s32.totalorder %s19, 0
    %p218 = por %p216, %p217
    %p219 = scmp.le.s32.totalorder 1, %s13
    %p220 = scmp.lt.s32.totalorder %s13, 9
    %p221 = pnand %p219, %p220
    %p222 = pneg %p221
    // Predicated region
    $region9: #{down_block_3d.2} parent=5 // pred_check
      _
    $region10: #{down_block_3d.2} parent=5 // pred_check_branch
      %224 = sbr.rel (%p221) target = $region12
    $region11: #{down_block_3d.2} parent=5 // pred_region
      %s225 = ssub.s32 %s13, 1
      // Predicated region
      $region13: #{down_block_3d.2} parent=11 // pred_check
        %p226 = pneg %p134
      $region14: #{down_block_3d.2} parent=11 // pred_check_branch
        %228 = sbr.rel (%p226) target = $region16
      $region15: #{down_block_3d.2} parent=11 // pred_region
        _
      $region16: #{down_block_3d.2} parent=11 // pred_fallthru
        _
      // Predicated region
      $region17: #{down_block_3d.2} parent=11 // pred_check
        %p229 = pneg %p155
      $region18: #{down_block_3d.2} parent=11 // pred_check_branch
        %231 = sbr.rel (%p229) target = $region20
      $region19: #{down_block_3d.2} parent=11 // pred_region
        _
      $region20: #{down_block_3d.2} parent=11 // pred_fallthru
        _
    $region12: #{down_block_3d.2} parent=5 // pred_fallthru
      _
    %p232 = scmp.lt.s32.totalorder %s13, 8
    // Predicated region
    $region21: #{down_block_3d.2} parent=5 // pred_check
      %p233 = pneg %p232
    $region22: #{down_block_3d.2} parent=5 // pred_check_branch
      %235 = sbr.rel (%p233) target = $region24
    $region23: #{down_block_3d.2} parent=5 // pred_region
      // Predicated region
      $region25: #{down_block_3d.2} parent=23 // pred_check
        %p236 = pneg %p47
      $region26: #{down_block_3d.2} parent=23 // pred_check_branch
        %238 = sbr.rel (%p236) target = $region28
      $region27: #{down_block_3d.2} parent=23 // pred_region
        %p239 = scmp.lt.s32.totalorder %s20, 1
        %s240 = scalar_select %p239, %s20, 1
        %p241 = scmp.lt.s32.totalorder %s21, 5
        %s242 = scalar_select %p241, %s21, 5
        %s243 = smul.addr %s242, 72
        %s244 = smul.addr %s240, 432
        %s245 = sadd.s32 %s243, %s244
        %s246 = smul.addr %s245, 4
        %s247 = scalar_lea.vmem %s0, %s246
      $region28: #{down_block_3d.2} parent=23 // pred_fallthru
        _
      // Predicated region
      $region29: #{down_block_3d.2} parent=23 // pred_check
        %p248 = pneg %p77
      $region30: #{down_block_3d.2} parent=23 // pred_check_branch
        %250 = sbr.rel (%p248) target = $region32
      $region31: #{down_block_3d.2} parent=23 // pred_region
        %s251 = sadd.s32 %s21, 1
        %p252 = scmp.lt.s32.totalorder %s20, 1
        %s253 = scalar_select %p252, %s20, 1
        %p254 = scmp.lt.s32.totalorder %s251, 5
        %s255 = scalar_select %p254, %s251, 5
        %s256 = smul.addr %s255, 72
        %s257 = smul.addr %s253, 432
        %s258 = sadd.s32 %s256, %s257
        %s259 = smul.addr %s258, 4
        %s260 = scalar_lea.vmem %s1, %s259
        %s261 = sadd.s32 %s21, 1
      $region32: #{down_block_3d.2} parent=23 // pred_fallthru
        _
      // Predicated region
      $region33: #{down_block_3d.2} parent=23 // pred_check
        %p262 = pneg %p107
      $region34: #{down_block_3d.2} parent=23 // pred_check_branch
        %264 = sbr.rel (%p262) target = $region36
      $region35: #{down_block_3d.2} parent=23 // pred_region
        %s265 = sadd.s32 %s21, 2
        %p266 = scmp.lt.s32.totalorder %s20, 1
        %s267 = scalar_select %p266, %s20, 1
        %p268 = scmp.lt.s32.totalorder %s265, 5
        %s269 = scalar_select %p268, %s265, 5
        %s270 = smul.addr %s269, 72
        %s271 = smul.addr %s267, 432
        %s272 = sadd.s32 %s270, %s271
        %s273 = smul.addr %s272, 4
        %s274 = scalar_lea.vmem %s2, %s273
        %s275 = sadd.s32 %s21, 2
      $region36: #{down_block_3d.2} parent=23 // pred_fallthru
        _
    $region24: #{down_block_3d.2} parent=5 // pred_fallthru
      _
    %p276 = scmp.le.s32.totalorder 1, %s13
    %p277 = scmp.lt.s32.totalorder %s13, 9
    %p278 = pnand %p276, %p277
    %p279 = pneg %p278
    // Predicated region
    $region37: #{down_block_3d.2} parent=5 // pred_check
      _
    $region38: #{down_block_3d.2} parent=5 // pred_check_branch
      %281 = sbr.rel (%p278) target = $region40
    $region39: #{down_block_3d.2} parent=5 // pred_region
      %s282 = ssub.s32 %s13, 1
      %p283 = scmp.lt.s32.totalorder %s22, 1
      %s284 = scalar_select %p283, %s22, 1
      %p285 = scmp.lt.s32.totalorder %s23, 5
      %s286 = scalar_select %p285, %s23, 5
      %s287 = smul.addr %s286, 72
      %s288 = smul.addr %s284, 432
      %s289 = sadd.s32 %s287, %s288
      %s290 = smul.addr %s289, 4
      %s291 = scalar_lea.vmem %s0, %s290
      %p292 = pneg %p53
      %p293 = pneg %p50
      %s294 = sadd.s32 %s23, 1
      %p295 = scmp.lt.s32.totalorder %s22, 1
      %s296 = scalar_select %p295, %s22, 1
      %p297 = scmp.lt.s32.totalorder %s294, 5
      %s298 = scalar_select %p297, %s294, 5
      %s299 = smul.addr %s298, 72
      %s300 = smul.addr %s296, 432
      %s301 = sadd.s32 %s299, %s300
      %s302 = smul.addr %s301, 4
      %s303 = scalar_lea.vmem %s1, %s302
      %p304 = pneg %p83
      %p305 = pneg %p80
      %s306 = sadd.s32 %s23, 2
      %p307 = scmp.lt.s32.totalorder %s22, 1
      %s308 = scalar_select %p307, %s22, 1
      %p309 = scmp.lt.s32.totalorder %s306, 5
      %s310 = scalar_select %p309, %s306, 5
      %s311 = smul.addr %s310, 72
      %s312 = smul.addr %s308, 432
      %s313 = sadd.s32 %s311, %s312
      %s314 = smul.addr %s313, 4
      %s315 = scalar_lea.vmem %s2, %s314
      %p316 = pneg %p113
      %p317 = pneg %p110
      %p318 = pneg %p134
      %p319 = pneg %p131
      %p320 = pneg %p155
      %p321 = pneg %p152
      %p322 = pneg %p183
      %p323 = pneg %p180
      %p324 = scmp.lt.s32.totalorder %s22, 1
      %s325 = scalar_select %p324, %s22, 1
      %p326 = scmp.lt.s32.totalorder %s23, 3
      %s327 = scalar_select %p326, %s23, 3
      %s328 = smul.addr %s327, 32
      %s329 = smul.addr %s325, 128
      %s330 = sadd.s32 %s328, %s329
      %s331 = smul.addr %s330, 4
      %s332 = scalar_lea.vmem %s5, %s331
      %p333 = pneg %p211
      %p334 = pneg %p208
      %p335 = scmp.lt.s32.totalorder %s22, 1
      %s336 = scalar_select %p335, %s22, 1
      %p337 = scmp.lt.s32.totalorder %s23, 3
      %s338 = scalar_select %p337, %s23, 3
      %s339 = smul.addr %s336, 4
      %s340 = sadd.s32 %s338, %s339
      %s341 = smul.addr %s340, 2
      %s342 = scalar_lea.vmem %s6, %s341
      %p343 = scmp.lt.s32.totalorder %s22, 1
      %s344 = scalar_select %p343, %s22, 1
      %p345 = scmp.lt.s32.totalorder %s23, 5
      %s346 = scalar_select %p345, %s23, 5
      %s347 = smul.addr %s346, 72
      %s348 = smul.addr %s344, 432
      %s349 = sadd.s32 %s347, %s348
      %s350 = smul.addr %s349, 4
      %s351 = scalar_lea.vmem %s0, %s350
      %s352 = sadd.s32 %s23, 1
      %p353 = scmp.lt.s32.totalorder %s22, 1
      %s354 = scalar_select %p353, %s22, 1
      %p355 = scmp.lt.s32.totalorder %s352, 5
      %s356 = scalar_select %p355, %s352, 5
      %s357 = smul.addr %s356, 72
      %s358 = smul.addr %s354, 432
      %s359 = sadd.s32 %s357, %s358
      %s360 = smul.addr %s359, 4
      %s361 = scalar_lea.vmem %s1, %s360
      %s362 = sadd.s32 %s23, 1
      %s363 = sadd.s32 %s23, 2
      %p364 = scmp.lt.s32.totalorder %s22, 1
      %s365 = scalar_select %p364, %s22, 1
      %p366 = scmp.lt.s32.totalorder %s363, 5
      %s367 = scalar_select %p366, %s363, 5
      %s368 = smul.addr %s367, 72
      %s369 = smul.addr %s365, 432
      %s370 = sadd.s32 %s368, %s369
      %s371 = smul.addr %s370, 4
      %s372 = scalar_lea.vmem %s2, %s371
      %s373 = sadd.s32 %s23, 2
      %p374 = scmp.lt.s32.totalorder %s22, 1
      %s375 = scalar_select %p374, %s22, 1
      %p376 = scmp.lt.s32.totalorder %s23, 3
      %s377 = scalar_select %p376, %s23, 3
      %s378 = smul.addr %s377, 32
      %s379 = smul.addr %s375, 128
      %s380 = sadd.s32 %s378, %s379
      %s381 = smul.addr %s380, 4
      %s382 = scalar_lea.vmem %s5, %s381
      %p383 = scmp.lt.s32.totalorder %s22, 1
      %s384 = scalar_select %p383, %s22, 1
      %p385 = scmp.lt.s32.totalorder %s23, 3
      %s386 = scalar_select %p385, %s23, 3
      %s387 = smul.addr %s384, 4
      %s388 = sadd.s32 %s386, %s387
      %s389 = smul.addr %s388, 2
      %s390 = scalar_lea.vmem %s6, %s389
      %v392 = vld [vmem:[%s351] sm:$0xf]
      %v393 = vld [vmem:[%s351 + $0x4] sm:$0x1]
      %v394 = vld [vmem:[%s351 + $0x8] sm:$0xf]
      %v395 = vld [vmem:[%s351 + $0xc] sm:$0x1]
      %v396 = vld [vmem:[%s351 + $0x10] sm:$0xf]
      %v397 = vld [vmem:[%s351 + $0x14] sm:$0x1]
      %v398 = vld [vmem:[%s351 + $0x18] sm:$0xf]
      %v399 = vld [vmem:[%s351 + $0x1c] sm:$0x1]
      %v400 = vld [vmem:[%s351 + $0x20] sm:$0xf]
      %v401 = vld [vmem:[%s351 + $0x24] sm:$0x1]
      %v402 = vld [vmem:[%s351 + $0x28] sm:$0xf]
      %v403 = vld [vmem:[%s351 + $0x2c] sm:$0x1]
      %v404 = vld [vmem:[%s351 + $0x30] sm:$0xf]
      %v405 = vld [vmem:[%s351 + $0x34] sm:$0x1]
      %v406 = vld [vmem:[%s351 + $0x38] sm:$0xf]
      %v407 = vld [vmem:[%s351 + $0x3c] sm:$0x1]
      %v408 = vld [vmem:[%s351 + $0x40] sm:$0xf]
      %v409 = vld [vmem:[%s351 + $0x44] sm:$0x1]
      %v410 = vld [vmem:[%s351 + $0x48] sm:$0xf]
      %v411 = vld [vmem:[%s351 + $0x4c] sm:$0x1]
      %v412 = vld [vmem:[%s351 + $0x50] sm:$0xf]
      %v413 = vld [vmem:[%s351 + $0x54] sm:$0x1]
      %v414 = vld [vmem:[%s351 + $0x58] sm:$0xf]
      %v415 = vld [vmem:[%s351 + $0x5c] sm:$0x1]
      %v416 = vld [vmem:[%s351 + $0x60] sm:$0xf]
      %v417 = vld [vmem:[%s351 + $0x64] sm:$0x1]
      %v418 = vld [vmem:[%s351 + $0x68] sm:$0xf]
      %v419 = vld [vmem:[%s351 + $0x6c] sm:$0x1]
      %v420 = vld [vmem:[%s351 + $0x70] sm:$0xf]
      %v421 = vld [vmem:[%s351 + $0x74] sm:$0x1]
      %v422 = vld [vmem:[%s351 + $0x78] sm:$0xf]
      %v423 = vld [vmem:[%s351 + $0x7c] sm:$0x1]
      %v424 = vld [vmem:[%s351 + $0x80] sm:$0xf]
      %v425 = vld [vmem:[%s351 + $0x84] sm:$0x1]
      %v426 = vld [vmem:[%s351 + $0x88] sm:$0xf]
      %v427 = vld [vmem:[%s351 + $0x8c] sm:$0x1]
      %s428 = scalar_lea.vmem %s351, 144
      %v429 = vld [vmem:[%s428] sm:$0xf]
      %v430 = vld [vmem:[%s428 + $0x4] sm:$0x1]
      %v431 = vld [vmem:[%s428 + $0x8] sm:$0xf]
      %v432 = vld [vmem:[%s428 + $0xc] sm:$0x1]
      %v433 = vld [vmem:[%s428 + $0x10] sm:$0xf]
      %v434 = vld [vmem:[%s428 + $0x14] sm:$0x1]
      %v435 = vld [vmem:[%s428 + $0x18] sm:$0xf]
      %v436 = vld [vmem:[%s428 + $0x1c] sm:$0x1]
      %v437 = vld [vmem:[%s428 + $0x20] sm:$0xf]
      %v438 = vld [vmem:[%s428 + $0x24] sm:$0x1]
      %v439 = vld [vmem:[%s428 + $0x28] sm:$0xf]
      %v440 = vld [vmem:[%s428 + $0x2c] sm:$0x1]
      %v441 = vld [vmem:[%s428 + $0x30] sm:$0xf]
      %v442 = vld [vmem:[%s428 + $0x34] sm:$0x1]
      %v443 = vld [vmem:[%s428 + $0x38] sm:$0xf]
      %v444 = vld [vmem:[%s428 + $0x3c] sm:$0x1]
      %v445 = vld [vmem:[%s428 + $0x40] sm:$0xf]
      %v446 = vld [vmem:[%s428 + $0x44] sm:$0x1]
      %v447 = vld [vmem:[%s428 + $0x48] sm:$0xf]
      %v448 = vld [vmem:[%s428 + $0x4c] sm:$0x1]
      %v449 = vld [vmem:[%s428 + $0x50] sm:$0xf]
      %v450 = vld [vmem:[%s428 + $0x54] sm:$0x1]
      %v451 = vld [vmem:[%s428 + $0x58] sm:$0xf]
      %v452 = vld [vmem:[%s428 + $0x5c] sm:$0x1]
      %v453 = vld [vmem:[%s428 + $0x60] sm:$0xf]
      %v454 = vld [vmem:[%s428 + $0x64] sm:$0x1]
      %v455 = vld [vmem:[%s428 + $0x68] sm:$0xf]
      %v456 = vld [vmem:[%s428 + $0x6c] sm:$0x1]
      %v457 = vld [vmem:[%s428 + $0x70] sm:$0xf]
      %v458 = vld [vmem:[%s428 + $0x74] sm:$0x1]
      %v459 = vld [vmem:[%s428 + $0x78] sm:$0xf]
      %v460 = vld [vmem:[%s428 + $0x7c] sm:$0x1]
      %v461 = vld [vmem:[%s428 + $0x80] sm:$0xf]
      %v462 = vld [vmem:[%s428 + $0x84] sm:$0x1]
      %v463 = vld [vmem:[%s428 + $0x88] sm:$0xf]
      %v464 = vld [vmem:[%s428 + $0x8c] sm:$0x1]
      %v465 = vld [vmem:[%s361] sm:$0xf]
      %v466 = vld [vmem:[%s361 + $0x4] sm:$0x1]
      %v467 = vld [vmem:[%s361 + $0x8] sm:$0xf]
      %v468 = vld [vmem:[%s361 + $0xc] sm:$0x1]
      %v469 = vld [vmem:[%s361 + $0x10] sm:$0xf]
      %v470 = vld [vmem:[%s361 + $0x14] sm:$0x1]
      %v471 = vld [vmem:[%s361 + $0x18] sm:$0xf]
      %v472 = vld [vmem:[%s361 + $0x1c] sm:$0x1]
      %v473 = vld [vmem:[%s361 + $0x20] sm:$0xf]
      %v474 = vld [vmem:[%s361 + $0x24] sm:$0x1]
      %v475 = vld [vmem:[%s361 + $0x28] sm:$0xf]
      %v476 = vld [vmem:[%s361 + $0x2c] sm:$0x1]
      %v477 = vld [vmem:[%s361 + $0x30] sm:$0xf]
      %v478 = vld [vmem:[%s361 + $0x34] sm:$0x1]
      %v479 = vld [vmem:[%s361 + $0x38] sm:$0xf]
      %v480 = vld [vmem:[%s361 + $0x3c] sm:$0x1]
      %v481 = vld [vmem:[%s361 + $0x40] sm:$0xf]
      %v482 = vld [vmem:[%s361 + $0x44] sm:$0x1]
      %v483 = vld [vmem:[%s361 + $0x48] sm:$0xf]
      %v484 = vld [vmem:[%s361 + $0x4c] sm:$0x1]
      %v485 = vld [vmem:[%s361 + $0x50] sm:$0xf]
      %v486 = vld [vmem:[%s361 + $0x54] sm:$0x1]
      %v487 = vld [vmem:[%s361 + $0x58] sm:$0xf]
      %v488 = vld [vmem:[%s361 + $0x5c] sm:$0x1]
      %v489 = vld [vmem:[%s361 + $0x60] sm:$0xf]
      %v490 = vld [vmem:[%s361 + $0x64] sm:$0x1]
      %v491 = vld [vmem:[%s361 + $0x68] sm:$0xf]
      %v492 = vld [vmem:[%s361 + $0x6c] sm:$0x1]
      %v493 = vld [vmem:[%s361 + $0x70] sm:$0xf]
      %v494 = vld [vmem:[%s361 + $0x74] sm:$0x1]
      %v495 = vld [vmem:[%s361 + $0x78] sm:$0xf]
      %v496 = vld [vmem:[%s361 + $0x7c] sm:$0x1]
      %v497 = vld [vmem:[%s361 + $0x80] sm:$0xf]
      %v498 = vld [vmem:[%s361 + $0x84] sm:$0x1]
      %v499 = vld [vmem:[%s361 + $0x88] sm:$0xf]
      %v500 = vld [vmem:[%s361 + $0x8c] sm:$0x1]
      %s501 = scalar_lea.vmem %s361, 144
      %v502 = vld [vmem:[%s501] sm:$0xf]
      %v503 = vld [vmem:[%s501 + $0x4] sm:$0x1]
      %v504 = vld [vmem:[%s501 + $0x8] sm:$0xf]
      %v505 = vld [vmem:[%s501 + $0xc] sm:$0x1]
      %v506 = vld [vmem:[%s501 + $0x10] sm:$0xf]
      %v507 = vld [vmem:[%s501 + $0x14] sm:$0x1]
      %v508 = vld [vmem:[%s501 + $0x18] sm:$0xf]
      %v509 = vld [vmem:[%s501 + $0x1c] sm:$0x1]
      %v510 = vld [vmem:[%s501 + $0x20] sm:$0xf]
      %v511 = vld [vmem:[%s501 + $0x24] sm:$0x1]
      %v512 = vld [vmem:[%s501 + $0x28] sm:$0xf]
      %v513 = vld [vmem:[%s501 + $0x2c] sm:$0x1]
      %v514 = vld [vmem:[%s501 + $0x30] sm:$0xf]
      %v515 = vld [vmem:[%s501 + $0x34] sm:$0x1]
      %v516 = vld [vmem:[%s501 + $0x38] sm:$0xf]
      %v517 = vld [vmem:[%s501 + $0x3c] sm:$0x1]
      %v518 = vld [vmem:[%s501 + $0x40] sm:$0xf]
      %v519 = vld [vmem:[%s501 + $0x44] sm:$0x1]
      %v520 = vld [vmem:[%s501 + $0x48] sm:$0xf]
      %v521 = vld [vmem:[%s501 + $0x4c] sm:$0x1]
      %v522 = vld [vmem:[%s501 + $0x50] sm:$0xf]
      %v523 = vld [vmem:[%s501 + $0x54] sm:$0x1]
      %v524 = vld [vmem:[%s501 + $0x58] sm:$0xf]
      %v525 = vld [vmem:[%s501 + $0x5c] sm:$0x1]
      %v526 = vld [vmem:[%s501 + $0x60] sm:$0xf]
      %v527 = vld [vmem:[%s501 + $0x64] sm:$0x1]
      %v528 = vld [vmem:[%s501 + $0x68] sm:$0xf]
      %v529 = vld [vmem:[%s501 + $0x6c] sm:$0x1]
      %v530 = vld [vmem:[%s501 + $0x70] sm:$0xf]
      %v531 = vld [vmem:[%s501 + $0x74] sm:$0x1]
      %v532 = vld [vmem:[%s501 + $0x78] sm:$0xf]
      %v533 = vld [vmem:[%s501 + $0x7c] sm:$0x1]
      %v534 = vld [vmem:[%s501 + $0x80] sm:$0xf]
      %v535 = vld [vmem:[%s501 + $0x84] sm:$0x1]
      %v536 = vld [vmem:[%s501 + $0x88] sm:$0xf]
      %v537 = vld [vmem:[%s501 + $0x8c] sm:$0x1]
      %v538 = vld [vmem:[%s372] sm:$0xf]
      %v539 = vld [vmem:[%s372 + $0x4] sm:$0x1]
      %v540 = vld [vmem:[%s372 + $0x8] sm:$0xf]
      %v541 = vld [vmem:[%s372 + $0xc] sm:$0x1]
      %v542 = vld [vmem:[%s372 + $0x10] sm:$0xf]
      %v543 = vld [vmem:[%s372 + $0x14] sm:$0x1]
      %v544 = vld [vmem:[%s372 + $0x18] sm:$0xf]
      %v545 = vld [vmem:[%s372 + $0x1c] sm:$0x1]
      %v546 = vld [vmem:[%s372 + $0x20] sm:$0xf]
      %v547 = vld [vmem:[%s372 + $0x24] sm:$0x1]
      %v548 = vld [vmem:[%s372 + $0x28] sm:$0xf]
      %v549 = vld [vmem:[%s372 + $0x2c] sm:$0x1]
      %v550 = vld [vmem:[%s372 + $0x30] sm:$0xf]
      %v551 = vld [vmem:[%s372 + $0x34] sm:$0x1]
      %v552 = vld [vmem:[%s372 + $0x38] sm:$0xf]
      %v553 = vld [vmem:[%s372 + $0x3c] sm:$0x1]
      %v554 = vld [vmem:[%s372 + $0x40] sm:$0xf]
      %v555 = vld [vmem:[%s372 + $0x44] sm:$0x1]
      %v556 = vld [vmem:[%s372 + $0x48] sm:$0xf]
      %v557 = vld [vmem:[%s372 + $0x4c] sm:$0x1]
      %v558 = vld [vmem:[%s372 + $0x50] sm:$0xf]
      %v559 = vld [vmem:[%s372 + $0x54] sm:$0x1]
      %v560 = vld [vmem:[%s372 + $0x58] sm:$0xf]
      %v561 = vld [vmem:[%s372 + $0x5c] sm:$0x1]
      %v562 = vld [vmem:[%s372 + $0x60] sm:$0xf]
      %v563 = vld [vmem:[%s372 + $0x64] sm:$0x1]
      %v564 = vld [vmem:[%s372 + $0x68] sm:$0xf]
      %v565 = vld [vmem:[%s372 + $0x6c] sm:$0x1]
      %v566 = vld [vmem:[%s372 + $0x70] sm:$0xf]
      %v567 = vld [vmem:[%s372 + $0x74] sm:$0x1]
      %v568 = vld [vmem:[%s372 + $0x78] sm:$0xf]
      %v569 = vld [vmem:[%s372 + $0x7c] sm:$0x1]
      %v570 = vld [vmem:[%s372 + $0x80] sm:$0xf]
      %v571 = vld [vmem:[%s372 + $0x84] sm:$0x1]
      %v572 = vld [vmem:[%s372 + $0x88] sm:$0xf]
      %v573 = vld [vmem:[%s372 + $0x8c] sm:$0x1]
      %s574 = scalar_lea.vmem %s372, 144
      %v575 = vld [vmem:[%s574] sm:$0xf]
      %v576 = vld [vmem:[%s574 + $0x4] sm:$0x1]
      %v577 = vld [vmem:[%s574 + $0x8] sm:$0xf]
      %v578 = vld [vmem:[%s574 + $0xc] sm:$0x1]
      %v579 = vld [vmem:[%s574 + $0x10] sm:$0xf]
      %v580 = vld [vmem:[%s574 + $0x14] sm:$0x1]
      %v581 = vld [vmem:[%s574 + $0x18] sm:$0xf]
      %v582 = vld [vmem:[%s574 + $0x1c] sm:$0x1]
      %v583 = vld [vmem:[%s574 + $0x20] sm:$0xf]
      %v584 = vld [vmem:[%s574 + $0x24] sm:$0x1]
      %v585 = vld [vmem:[%s574 + $0x28] sm:$0xf]
      %v586 = vld [vmem:[%s574 + $0x2c] sm:$0x1]
      %v587 = vld [vmem:[%s574 + $0x30] sm:$0xf]
      %v588 = vld [vmem:[%s574 + $0x34] sm:$0x1]
      %v589 = vld [vmem:[%s574 + $0x38] sm:$0xf]
      %v590 = vld [vmem:[%s574 + $0x3c] sm:$0x1]
      %v591 = vld [vmem:[%s574 + $0x40] sm:$0xf]
      %v592 = vld [vmem:[%s574 + $0x44] sm:$0x1]
      %v593 = vld [vmem:[%s574 + $0x48] sm:$0xf]
      %v594 = vld [vmem:[%s574 + $0x4c] sm:$0x1]
      %v595 = vld [vmem:[%s574 + $0x50] sm:$0xf]
      %v596 = vld [vmem:[%s574 + $0x54] sm:$0x1]
      %v597 = vld [vmem:[%s574 + $0x58] sm:$0xf]
      %v598 = vld [vmem:[%s574 + $0x5c] sm:$0x1]
      %v599 = vld [vmem:[%s574 + $0x60] sm:$0xf]
      %v600 = vld [vmem:[%s574 + $0x64] sm:$0x1]
      %v601 = vld [vmem:[%s574 + $0x68] sm:$0xf]
      %v602 = vld [vmem:[%s574 + $0x6c] sm:$0x1]
      %v603 = vld [vmem:[%s574 + $0x70] sm:$0xf]
      %v604 = vld [vmem:[%s574 + $0x74] sm:$0x1]
      %v605 = vld [vmem:[%s574 + $0x78] sm:$0xf]
      %v606 = vld [vmem:[%s574 + $0x7c] sm:$0x1]
      %v607 = vld [vmem:[%s574 + $0x80] sm:$0xf]
      %v608 = vld [vmem:[%s574 + $0x84] sm:$0x1]
      %v609 = vld [vmem:[%s574 + $0x88] sm:$0xf]
      %v610 = vld [vmem:[%s574 + $0x8c] sm:$0x1]
      %v627 = vunpack.c.l.b16 %v429
      %v628 = vunpack.c.l.b16 %v431
      %v629 = vunpack.c.l.b16 %v433
      %v630 = vunpack.c.l.b16 %v435
      %v631 = vunpack.c.l.b16 %v437
      %v632 = vunpack.c.l.b16 %v439
      %v633 = vunpack.c.l.b16 %v441
      %v634 = vunpack.c.l.b16 %v443
      %v635 = vunpack.c.l.b16 %v445
      %v636 = vunpack.c.l.b16 %v447
      %v637 = vunpack.c.l.b16 %v449
      %v638 = vunpack.c.l.b16 %v451
      %v639 = vunpack.c.l.b16 %v453
      %v640 = vunpack.c.l.b16 %v455
      %v641 = vunpack.c.l.b16 %v457
      %v642 = vunpack.c.l.b16 %v459
      %v643 = vpack.c.b16 %v627, %v627
      %v644 = vpack.c.b16 %v628, %v628
      %v645 = vpack.c.b16 %v629, %v629
      %v646 = vpack.c.b16 %v630, %v630
      %v647 = vpack.c.b16 %v631, %v631
      %v648 = vpack.c.b16 %v632, %v632
      %v649 = vpack.c.b16 %v633, %v633
      %v650 = vpack.c.b16 %v634, %v634
      %v651 = vpack.c.b16 %v635, %v635
      %v652 = vpack.c.b16 %v636, %v636
      %v653 = vpack.c.b16 %v637, %v637
      %v654 = vpack.c.b16 %v638, %v638
      %v655 = vpack.c.b16 %v639, %v639
      %v656 = vpack.c.b16 %v640, %v640
      %v657 = vpack.c.b16 %v641, %v641
      %v658 = vpack.c.b16 %v642, %v642
      %659 = vrot.lane.b32.xlu0 %v643, 4
      %v660 = vpop.permute.xlu0 %659
      %661 = vrot.lane.b32.xlu0 %v644, 4
      %v662 = vpop.permute.xlu0 %661
      %663 = vrot.lane.b32.xlu0 %v645, 4
      %v664 = vpop.permute.xlu0 %663
      %665 = vrot.lane.b32.xlu0 %v646, 4
      %v666 = vpop.permute.xlu0 %665
      %667 = vrot.lane.b32.xlu0 %v647, 4
      %v668 = vpop.permute.xlu0 %667
      %669 = vrot.lane.b32.xlu0 %v648, 4
      %v670 = vpop.permute.xlu0 %669
      %671 = vrot.lane.b32.xlu0 %v649, 4
      %v672 = vpop.permute.xlu0 %671
      %673 = vrot.lane.b32.xlu0 %v650, 4
      %v674 = vpop.permute.xlu0 %673
      %675 = vrot.lane.b32.xlu0 %v651, 4
      %v676 = vpop.permute.xlu0 %675
      %677 = vrot.lane.b32.xlu0 %v652, 4
      %v678 = vpop.permute.xlu0 %677
      %679 = vrot.lane.b32.xlu0 %v653, 4
      %v680 = vpop.permute.xlu0 %679
      %681 = vrot.lane.b32.xlu0 %v654, 4
      %v682 = vpop.permute.xlu0 %681
      %683 = vrot.lane.b32.xlu0 %v655, 4
      %v684 = vpop.permute.xlu0 %683
      %685 = vrot.lane.b32.xlu0 %v656, 4
      %v686 = vpop.permute.xlu0 %685
      %687 = vrot.lane.b32.xlu0 %v657, 4
      %v688 = vpop.permute.xlu0 %687
      %689 = vrot.lane.b32.xlu0 %v658, 4
      %v690 = vpop.permute.xlu0 %689
      %v723 = vunpack.c.l.b16 %v392
      %v724 = vunpack.c.l.b16 %v393
      %v725 = vunpack.c.l.b16 %v394
      %v726 = vunpack.c.l.b16 %v395
      %v727 = vunpack.c.l.b16 %v396
      %v728 = vunpack.c.l.b16 %v397
      %v729 = vunpack.c.l.b16 %v398
      %v730 = vunpack.c.l.b16 %v399
      %v731 = vunpack.c.l.b16 %v400
      %v732 = vunpack.c.l.b16 %v401
      %v733 = vunpack.c.l.b16 %v402
      %v734 = vunpack.c.l.b16 %v403
      %v735 = vunpack.c.l.b16 %v404
      %v736 = vunpack.c.l.b16 %v405
      %v737 = vunpack.c.l.b16 %v406
      %v738 = vunpack.c.l.b16 %v407
      %v739 = vunpack.c.l.b16 %v408
      %v740 = vunpack.c.l.b16 %v409
      %v741 = vunpack.c.l.b16 %v410
      %v742 = vunpack.c.l.b16 %v411
      %v743 = vunpack.c.l.b16 %v412
      %v744 = vunpack.c.l.b16 %v413
      %v745 = vunpack.c.l.b16 %v414
      %v746 = vunpack.c.l.b16 %v415
      %v747 = vunpack.c.l.b16 %v416
      %v748 = vunpack.c.l.b16 %v417
      %v749 = vunpack.c.l.b16 %v418
      %v750 = vunpack.c.l.b16 %v419
      %v751 = vunpack.c.l.b16 %v420
      %v752 = vunpack.c.l.b16 %v421
      %v753 = vunpack.c.l.b16 %v422
      %v754 = vunpack.c.l.b16 %v423
      %v755 = vpack.c.b16 %v724, %v723
      %v756 = vpack.c.b16 %v726, %v725
      %v757 = vpack.c.b16 %v728, %v727
      %v758 = vpack.c.b16 %v730, %v729
      %v759 = vpack.c.b16 %v732, %v731
      %v760 = vpack.c.b16 %v734, %v733
      %v761 = vpack.c.b16 %v736, %v735
      %v762 = vpack.c.b16 %v738, %v737
      %v763 = vpack.c.b16 %v740, %v739
      %v764 = vpack.c.b16 %v742, %v741
      %v765 = vpack.c.b16 %v744, %v743
      %v766 = vpack.c.b16 %v746, %v745
      %v767 = vpack.c.b16 %v748, %v747
      %v768 = vpack.c.b16 %v750, %v749
      %v769 = vpack.c.b16 %v752, %v751
      %v770 = vpack.c.b16 %v754, %v753
      %v772 = vshrl.u32 %v755, 16
      %v774 = vshll.u32 %v755, 16
      %v776 = vrot.slane %v774, 1
      %v777 = vor.u32 %v772, %v776
      %v779 = vshrl.u32 %v756, 16
      %v781 = vshll.u32 %v756, 16
      %v783 = vrot.slane %v781, 1
      %v784 = vor.u32 %v779, %v783
      %v786 = vshrl.u32 %v757, 16
      %v788 = vshll.u32 %v757, 16
      %v790 = vrot.slane %v788, 1
      %v791 = vor.u32 %v786, %v790
      %v793 = vshrl.u32 %v758, 16
      %v795 = vshll.u32 %v758, 16
      %v797 = vrot.slane %v795, 1
      %v798 = vor.u32 %v793, %v797
      %v800 = vshrl.u32 %v759, 16
      %v802 = vshll.u32 %v759, 16
      %v804 = vrot.slane %v802, 1
      %v805 = vor.u32 %v800, %v804
      %v807 = vshrl.u32 %v760, 16
      %v809 = vshll.u32 %v760, 16
      %v811 = vrot.slane %v809, 1
      %v812 = vor.u32 %v807, %v811
      %v814 = vshrl.u32 %v761, 16
      %v816 = vshll.u32 %v761, 16
      %v818 = vrot.slane %v816, 1
      %v819 = vor.u32 %v814, %v818
      %v821 = vshrl.u32 %v762, 16
      %v823 = vshll.u32 %v762, 16
      %v825 = vrot.slane %v823, 1
      %v826 = vor.u32 %v821, %v825
      %v828 = vshrl.u32 %v763, 16
      %v830 = vshll.u32 %v763, 16
      %v832 = vrot.slane %v830, 1
      %v833 = vor.u32 %v828, %v832
      %v835 = vshrl.u32 %v764, 16
      %v837 = vshll.u32 %v764, 16
      %v839 = vrot.slane %v837, 1
      %v840 = vor.u32 %v835, %v839
      %v842 = vshrl.u32 %v765, 16
      %v844 = vshll.u32 %v765, 16
      %v846 = vrot.slane %v844, 1
      %v847 = vor.u32 %v842, %v846
      %v849 = vshrl.u32 %v766, 16
      %v851 = vshll.u32 %v766, 16
      %v853 = vrot.slane %v851, 1
      %v854 = vor.u32 %v849, %v853
      %v856 = vshrl.u32 %v767, 16
      %v858 = vshll.u32 %v767, 16
      %v860 = vrot.slane %v858, 1
      %v861 = vor.u32 %v856, %v860
      %v863 = vshrl.u32 %v768, 16
      %v865 = vshll.u32 %v768, 16
      %v867 = vrot.slane %v865, 1
      %v868 = vor.u32 %v863, %v867
      %v870 = vshrl.u32 %v769, 16
      %v872 = vshll.u32 %v769, 16
      %v874 = vrot.slane %v872, 1
      %v875 = vor.u32 %v870, %v874
      %v877 = vshrl.u32 %v770, 16
      %v879 = vshll.u32 %v770, 16
      %v881 = vrot.slane %v879, 1
      %v882 = vor.u32 %v877, %v881
      %883 = vrot.lane.b32.xlu0 %v777, 8
      %v884 = vpop.permute.xlu0 %883
      %885 = vrot.lane.b32.xlu0 %v784, 8
      %v886 = vpop.permute.xlu0 %885
      %887 = vrot.lane.b32.xlu0 %v791, 8
      %v888 = vpop.permute.xlu0 %887
      %889 = vrot.lane.b32.xlu0 %v798, 8
      %v890 = vpop.permute.xlu0 %889
      %891 = vrot.lane.b32.xlu0 %v805, 8
      %v892 = vpop.permute.xlu0 %891
      %893 = vrot.lane.b32.xlu0 %v812, 8
      %v894 = vpop.permute.xlu0 %893
      %895 = vrot.lane.b32.xlu0 %v819, 8
      %v896 = vpop.permute.xlu0 %895
      %897 = vrot.lane.b32.xlu0 %v826, 8
      %v898 = vpop.permute.xlu0 %897
      %899 = vrot.lane.b32.xlu0 %v833, 8
      %v900 = vpop.permute.xlu0 %899
      %901 = vrot.lane.b32.xlu0 %v840, 8
      %v902 = vpop.permute.xlu0 %901
      %903 = vrot.lane.b32.xlu0 %v847, 8
      %v904 = vpop.permute.xlu0 %903
      %905 = vrot.lane.b32.xlu0 %v854, 8
      %v906 = vpop.permute.xlu0 %905
      %907 = vrot.lane.b32.xlu0 %v861, 8
      %v908 = vpop.permute.xlu0 %907
      %909 = vrot.lane.b32.xlu0 %v868, 8
      %v910 = vpop.permute.xlu0 %909
      %911 = vrot.lane.b32.xlu0 %v875, 8
      %v912 = vpop.permute.xlu0 %911
      %913 = vrot.lane.b32.xlu0 %v882, 8
      %v914 = vpop.permute.xlu0 %913
      %v916 = vunpack.c.l.b16 %v424
      %v917 = vpack.c.b16 %v725, %v725
      %v918 = vpack.c.b16 %v727, %v727
      %v919 = vpack.c.b16 %v729, %v729
      %v920 = vpack.c.b16 %v731, %v731
      %v921 = vpack.c.b16 %v733, %v733
      %v922 = vpack.c.b16 %v735, %v735
      %v923 = vpack.c.b16 %v737, %v737
      %v924 = vpack.c.b16 %v739, %v739
      %v925 = vpack.c.b16 %v741, %v741
      %v926 = vpack.c.b16 %v743, %v743
      %v927 = vpack.c.b16 %v745, %v745
      %v928 = vpack.c.b16 %v747, %v747
      %v929 = vpack.c.b16 %v749, %v749
      %v930 = vpack.c.b16 %v751, %v751
      %v931 = vpack.c.b16 %v753, %v753
      %v932 = vpack.c.b16 %v916, %v916
      %933 = vrot.lane.b32.xlu0 %v917, 12
      %v934 = vpop.permute.xlu0 %933
      %935 = vrot.lane.b32.xlu0 %v918, 12
      %v936 = vpop.permute.xlu0 %935
      %937 = vrot.lane.b32.xlu0 %v919, 12
      %v938 = vpop.permute.xlu0 %937
      %939 = vrot.lane.b32.xlu0 %v920, 12
      %v940 = vpop.permute.xlu0 %939
      %941 = vrot.lane.b32.xlu0 %v921, 12
      %v942 = vpop.permute.xlu0 %941
      %943 = vrot.lane.b32.xlu0 %v922, 12
      %v944 = vpop.permute.xlu0 %943
      %945 = vrot.lane.b32.xlu0 %v923, 12
      %v946 = vpop.permute.xlu0 %945
      %947 = vrot.lane.b32.xlu0 %v924, 12
      %v948 = vpop.permute.xlu0 %947
      %949 = vrot.lane.b32.xlu0 %v925, 12
      %v950 = vpop.permute.xlu0 %949
      %951 = vrot.lane.b32.xlu0 %v926, 12
      %v952 = vpop.permute.xlu0 %951
      %953 = vrot.lane.b32.xlu0 %v927, 12
      %v954 = vpop.permute.xlu0 %953
      %955 = vrot.lane.b32.xlu0 %v928, 12
      %v956 = vpop.permute.xlu0 %955
      %957 = vrot.lane.b32.xlu0 %v929, 12
      %v958 = vpop.permute.xlu0 %957
      %959 = vrot.lane.b32.xlu0 %v930, 12
      %v960 = vpop.permute.xlu0 %959
      %961 = vrot.lane.b32.xlu0 %v931, 12
      %v962 = vpop.permute.xlu0 %961
      %963 = vrot.lane.b32.xlu0 %v932, 12
      %v964 = vpop.permute.xlu0 %963
      %v966 = vunpack.c.l.b16 %v461
      %v967 = vpack.c.b16 %v966, %v966
      %968 = vrot.lane.b32.xlu0 %v644, 16
      %v969 = vpop.permute.xlu0 %968
      %970 = vrot.lane.b32.xlu0 %v645, 16
      %v971 = vpop.permute.xlu0 %970
      %972 = vrot.lane.b32.xlu0 %v646, 16
      %v973 = vpop.permute.xlu0 %972
      %974 = vrot.lane.b32.xlu0 %v647, 16
      %v975 = vpop.permute.xlu0 %974
      %976 = vrot.lane.b32.xlu0 %v648, 16
      %v977 = vpop.permute.xlu0 %976
      %978 = vrot.lane.b32.xlu0 %v649, 16
      %v979 = vpop.permute.xlu0 %978
      %980 = vrot.lane.b32.xlu0 %v650, 16
      %v981 = vpop.permute.xlu0 %980
      %982 = vrot.lane.b32.xlu0 %v651, 16
      %v983 = vpop.permute.xlu0 %982
      %984 = vrot.lane.b32.xlu0 %v652, 16
      %v985 = vpop.permute.xlu0 %984
      %986 = vrot.lane.b32.xlu0 %v653, 16
      %v987 = vpop.permute.xlu0 %986
      %988 = vrot.lane.b32.xlu0 %v654, 16
      %v989 = vpop.permute.xlu0 %988
      %990 = vrot.lane.b32.xlu0 %v655, 16
      %v991 = vpop.permute.xlu0 %990
      %992 = vrot.lane.b32.xlu0 %v656, 16
      %v993 = vpop.permute.xlu0 %992
      %994 = vrot.lane.b32.xlu0 %v657, 16
      %v995 = vpop.permute.xlu0 %994
      %996 = vrot.lane.b32.xlu0 %v658, 16
      %v997 = vpop.permute.xlu0 %996
      %998 = vrot.lane.b32.xlu0 %v967, 16
      %v999 = vpop.permute.xlu0 %998
      %v1001 = vunpack.c.l.b16 %v425
      %v1002 = vpack.c.b16 %v1001, %v916
      %v1004 = vshrl.u32 %v1002, 16
      %v1006 = vshll.u32 %v1002, 16
      %v1008 = vrot.slane %v1006, 1
      %v1009 = vor.u32 %v1004, %v1008
      %1010 = vrot.lane.b32.xlu0 %v784, 20
      %v1011 = vpop.permute.xlu0 %1010
      %1012 = vrot.lane.b32.xlu0 %v791, 20
      %v1013 = vpop.permute.xlu0 %1012
      %1014 = vrot.lane.b32.xlu0 %v798, 20
      %v1015 = vpop.permute.xlu0 %1014
      %1016 = vrot.lane.b32.xlu0 %v805, 20
      %v1017 = vpop.permute.xlu0 %1016
      %1018 = vrot.lane.b32.xlu0 %v812, 20
      %v1019 = vpop.permute.xlu0 %1018
      %1020 = vrot.lane.b32.xlu0 %v819, 20
      %v1021 = vpop.permute.xlu0 %1020
      %1022 = vrot.lane.b32.xlu0 %v826, 20
      %v1023 = vpop.permute.xlu0 %1022
      %1024 = vrot.lane.b32.xlu0 %v833, 20
      %v1025 = vpop.permute.xlu0 %1024
      %1026 = vrot.lane.b32.xlu0 %v840, 20
      %v1027 = vpop.permute.xlu0 %1026
      %1028 = vrot.lane.b32.xlu0 %v847, 20
      %v1029 = vpop.permute.xlu0 %1028
      %1030 = vrot.lane.b32.xlu0 %v854, 20
      %v1031 = vpop.permute.xlu0 %1030
      %1032 = vrot.lane.b32.xlu0 %v861, 20
      %v1033 = vpop.permute.xlu0 %1032
      %1034 = vrot.lane.b32.xlu0 %v868, 20
      %v1035 = vpop.permute.xlu0 %1034
      %1036 = vrot.lane.b32.xlu0 %v875, 20
      %v1037 = vpop.permute.xlu0 %1036
      %1038 = vrot.lane.b32.xlu0 %v882, 20
      %v1039 = vpop.permute.xlu0 %1038
      %1040 = vrot.lane.b32.xlu0 %v1009, 20
      %v1041 = vpop.permute.xlu0 %1040
      %v1043 = vunpack.c.l.b16 %v426
      %v1044 = vpack.c.b16 %v1043, %v1043
      %1045 = vrot.lane.b32.xlu0 %v918, 24
      %v1046 = vpop.permute.xlu0 %1045
      %1047 = vrot.lane.b32.xlu0 %v919, 24
      %v1048 = vpop.permute.xlu0 %1047
      %1049 = vrot.lane.b32.xlu0 %v920, 24
      %v1050 = vpop.permute.xlu0 %1049
      %1051 = vrot.lane.b32.xlu0 %v921, 24
      %v1052 = vpop.permute.xlu0 %1051
      %1053 = vrot.lane.b32.xlu0 %v922, 24
      %v1054 = vpop.permute.xlu0 %1053
      %1055 = vrot.lane.b32.xlu0 %v923, 24
      %v1056 = vpop.permute.xlu0 %1055
      %1057 = vrot.lane.b32.xlu0 %v924, 24
      %v1058 = vpop.permute.xlu0 %1057
      %1059 = vrot.lane.b32.xlu0 %v925, 24
      %v1060 = vpop.permute.xlu0 %1059
      %1061 = vrot.lane.b32.xlu0 %v926, 24
      %v1062 = vpop.permute.xlu0 %1061
      %1063 = vrot.lane.b32.xlu0 %v927, 24
      %v1064 = vpop.permute.xlu0 %1063
      %1065 = vrot.lane.b32.xlu0 %v928, 24
      %v1066 = vpop.permute.xlu0 %1065
      %1067 = vrot.lane.b32.xlu0 %v929, 24
      %v1068 = vpop.permute.xlu0 %1067
      %1069 = vrot.lane.b32.xlu0 %v930, 24
      %v1070 = vpop.permute.xlu0 %1069
      %1071 = vrot.lane.b32.xlu0 %v931, 24
      %v1072 = vpop.permute.xlu0 %1071
      %1073 = vrot.lane.b32.xlu0 %v932, 24
      %v1074 = vpop.permute.xlu0 %1073
      %1075 = vrot.lane.b32.xlu0 %v1044, 24
      %v1076 = vpop.permute.xlu0 %1075
      %v1078 = vunpack.c.l.b16 %v463
      %v1079 = vpack.c.b16 %v1078, %v1078
      %1080 = vrot.lane.b32.xlu0 %v645, 28
      %v1081 = vpop.permute.xlu0 %1080
      %1082 = vrot.lane.b32.xlu0 %v646, 28
      %v1083 = vpop.permute.xlu0 %1082
      %1084 = vrot.lane.b32.xlu0 %v647, 28
      %v1085 = vpop.permute.xlu0 %1084
      %1086 = vrot.lane.b32.xlu0 %v648, 28
      %v1087 = vpop.permute.xlu0 %1086
      %1088 = vrot.lane.b32.xlu0 %v649, 28
      %v1089 = vpop.permute.xlu0 %1088
      %1090 = vrot.lane.b32.xlu0 %v650, 28
      %v1091 = vpop.permute.xlu0 %1090
      %1092 = vrot.lane.b32.xlu0 %v651, 28
      %v1093 = vpop.permute.xlu0 %1092
      %1094 = vrot.lane.b32.xlu0 %v652, 28
      %v1095 = vpop.permute.xlu0 %1094
      %1096 = vrot.lane.b32.xlu0 %v653, 28
      %v1097 = vpop.permute.xlu0 %1096
      %1098 = vrot.lane.b32.xlu0 %v654, 28
      %v1099 = vpop.permute.xlu0 %1098
      %1100 = vrot.lane.b32.xlu0 %v655, 28
      %v1101 = vpop.permute.xlu0 %1100
      %1102 = vrot.lane.b32.xlu0 %v656, 28
      %v1103 = vpop.permute.xlu0 %1102
      %1104 = vrot.lane.b32.xlu0 %v657, 28
      %v1105 = vpop.permute.xlu0 %1104
      %1106 = vrot.lane.b32.xlu0 %v658, 28
      %v1107 = vpop.permute.xlu0 %1106
      %1108 = vrot.lane.b32.xlu0 %v967, 28
      %v1109 = vpop.permute.xlu0 %1108
      %1110 = vrot.lane.b32.xlu0 %v1079, 28
      %v1111 = vpop.permute.xlu0 %1110
      %v1113 = vunpack.c.l.b16 %v427
      %v1114 = vpack.c.b16 %v1113, %v1043
      %v1116 = vshrl.u32 %v1114, 16
      %v1118 = vshll.u32 %v1114, 16
      %v1120 = vrot.slane %v1118, 1
      %v1121 = vor.u32 %v1116, %v1120
      %1122 = vrot.lane.b32.xlu0 %v791, 32
      %v1123 = vpop.permute.xlu0 %1122
      %1124 = vrot.lane.b32.xlu0 %v798, 32
      %v1125 = vpop.permute.xlu0 %1124
      %1126 = vrot.lane.b32.xlu0 %v805, 32
      %v1127 = vpop.permute.xlu0 %1126
      %1128 = vrot.lane.b32.xlu0 %v812, 32
      %v1129 = vpop.permute.xlu0 %1128
      %1130 = vrot.lane.b32.xlu0 %v819, 32
      %v1131 = vpop.permute.xlu0 %1130
      %1132 = vrot.lane.b32.xlu0 %v826, 32
      %v1133 = vpop.permute.xlu0 %1132
      %1134 = vrot.lane.b32.xlu0 %v833, 32
      %v1135 = vpop.permute.xlu0 %1134
      %1136 = vrot.lane.b32.xlu0 %v840, 32
      %v1137 = vpop.permute.xlu0 %1136
      %1138 = vrot.lane.b32.xlu0 %v847, 32
      %v1139 = vpop.permute.xlu0 %1138
      %1140 = vrot.lane.b32.xlu0 %v854, 32
      %v1141 = vpop.permute.xlu0 %1140
      %1142 = vrot.lane.b32.xlu0 %v861, 32
      %v1143 = vpop.permute.xlu0 %1142
      %1144 = vrot.lane.b32.xlu0 %v868, 32
      %v1145 = vpop.permute.xlu0 %1144
      %1146 = vrot.lane.b32.xlu0 %v875, 32
      %v1147 = vpop.permute.xlu0 %1146
      %1148 = vrot.lane.b32.xlu0 %v882, 32
      %v1149 = vpop.permute.xlu0 %1148
      %1150 = vrot.lane.b32.xlu0 %v1009, 32
      %v1151 = vpop.permute.xlu0 %1150
      %1152 = vrot.lane.b32.xlu0 %v1121, 32
      %v1153 = vpop.permute.xlu0 %1152
      %v1170 = vunpack.c.l.b16 %v465
      %v1171 = vunpack.c.l.b16 %v467
      %v1172 = vunpack.c.l.b16 %v469
      %v1173 = vunpack.c.l.b16 %v471
      %v1174 = vunpack.c.l.b16 %v473
      %v1175 = vunpack.c.l.b16 %v475
      %v1176 = vunpack.c.l.b16 %v477
      %v1177 = vunpack.c.l.b16 %v479
      %v1178 = vunpack.c.l.b16 %v481
      %v1179 = vunpack.c.l.b16 %v483
      %v1180 = vunpack.c.l.b16 %v485
      %v1181 = vunpack.c.l.b16 %v487
      %v1182 = vunpack.c.l.b16 %v489
      %v1183 = vunpack.c.l.b16 %v491
      %v1184 = vunpack.c.l.b16 %v493
      %v1185 = vunpack.c.l.b16 %v495
      %v1186 = vpack.c.b16 %v1170, %v1170
      %v1187 = vpack.c.b16 %v1171, %v1171
      %v1188 = vpack.c.b16 %v1172, %v1172
      %v1189 = vpack.c.b16 %v1173, %v1173
      %v1190 = vpack.c.b16 %v1174, %v1174
      %v1191 = vpack.c.b16 %v1175, %v1175
      %v1192 = vpack.c.b16 %v1176, %v1176
      %v1193 = vpack.c.b16 %v1177, %v1177
      %v1194 = vpack.c.b16 %v1178, %v1178
      %v1195 = vpack.c.b16 %v1179, %v1179
      %v1196 = vpack.c.b16 %v1180, %v1180
      %v1197 = vpack.c.b16 %v1181, %v1181
      %v1198 = vpack.c.b16 %v1182, %v1182
      %v1199 = vpack.c.b16 %v1183, %v1183
      %v1200 = vpack.c.b16 %v1184, %v1184
      %v1201 = vpack.c.b16 %v1185, %v1185
      %1202 = vrot.lane.b32.xlu0 %v1186, 36
      %v1203 = vpop.permute.xlu0 %1202
      %1204 = vrot.lane.b32.xlu0 %v1187, 36
      %v1205 = vpop.permute.xlu0 %1204
      %1206 = vrot.lane.b32.xlu0 %v1188, 36
      %v1207 = vpop.permute.xlu0 %1206
      %1208 = vrot.lane.b32.xlu0 %v1189, 36
      %v1209 = vpop.permute.xlu0 %1208
      %1210 = vrot.lane.b32.xlu0 %v1190, 36
      %v1211 = vpop.permute.xlu0 %1210
      %1212 = vrot.lane.b32.xlu0 %v1191, 36
      %v1213 = vpop.permute.xlu0 %1212
      %1214 = vrot.lane.b32.xlu0 %v1192, 36
      %v1215 = vpop.permute.xlu0 %1214
      %1216 = vrot.lane.b32.xlu0 %v1193, 36
      %v1217 = vpop.permute.xlu0 %1216
      %1218 = vrot.lane.b32.xlu0 %v1194, 36
      %v1219 = vpop.permute.xlu0 %1218
      %1220 = vrot.lane.b32.xlu0 %v1195, 36
      %v1221 = vpop.permute.xlu0 %1220
      %1222 = vrot.lane.b32.xlu0 %v1196, 36
      %v1223 = vpop.permute.xlu0 %1222
      %1224 = vrot.lane.b32.xlu0 %v1197, 36
      %v1225 = vpop.permute.xlu0 %1224
      %1226 = vrot.lane.b32.xlu0 %v1198, 36
      %v1227 = vpop.permute.xlu0 %1226
      %1228 = vrot.lane.b32.xlu0 %v1199, 36
      %v1229 = vpop.permute.xlu0 %1228
      %1230 = vrot.lane.b32.xlu0 %v1200, 36
      %v1231 = vpop.permute.xlu0 %1230
      %1232 = vrot.lane.b32.xlu0 %v1201, 36
      %v1233 = vpop.permute.xlu0 %1232
      %v1250 = vunpack.c.l.b16 %v502
      %v1251 = vunpack.c.l.b16 %v504
      %v1252 = vunpack.c.l.b16 %v506
      %v1253 = vunpack.c.l.b16 %v508
      %v1254 = vunpack.c.l.b16 %v510
      %v1255 = vunpack.c.l.b16 %v512
      %v1256 = vunpack.c.l.b16 %v514
      %v1257 = vunpack.c.l.b16 %v516
      %v1258 = vunpack.c.l.b16 %v518
      %v1259 = vunpack.c.l.b16 %v520
      %v1260 = vunpack.c.l.b16 %v522
      %v1261 = vunpack.c.l.b16 %v524
      %v1262 = vunpack.c.l.b16 %v526
      %v1263 = vunpack.c.l.b16 %v528
      %v1264 = vunpack.c.l.b16 %v530
      %v1265 = vunpack.c.l.b16 %v532
      %v1266 = vpack.c.b16 %v1250, %v1250
      %v1267 = vpack.c.b16 %v1251, %v1251
      %v1268 = vpack.c.b16 %v1252, %v1252
      %v1269 = vpack.c.b16 %v1253, %v1253
      %v1270 = vpack.c.b16 %v1254, %v1254
      %v1271 = vpack.c.b16 %v1255, %v1255
      %v1272 = vpack.c.b16 %v1256, %v1256
      %v1273 = vpack.c.b16 %v1257, %v1257
      %v1274 = vpack.c.b16 %v1258, %v1258
      %v1275 = vpack.c.b16 %v1259, %v1259
      %v1276 = vpack.c.b16 %v1260, %v1260
      %v1277 = vpack.c.b16 %v1261, %v1261
      %v1278 = vpack.c.b16 %v1262, %v1262
      %v1279 = vpack.c.b16 %v1263, %v1263
      %v1280 = vpack.c.b16 %v1264, %v1264
      %v1281 = vpack.c.b16 %v1265, %v1265
      %1282 = vrot.lane.b32.xlu0 %v1266, 40
      %v1283 = vpop.permute.xlu0 %1282
      %1284 = vrot.lane.b32.xlu0 %v1267, 40
      %v1285 = vpop.permute.xlu0 %1284
      %1286 = vrot.lane.b32.xlu0 %v1268, 40
      %v1287 = vpop.permute.xlu0 %1286
      %1288 = vrot.lane.b32.xlu0 %v1269, 40
      %v1289 = vpop.permute.xlu0 %1288
      %1290 = vrot.lane.b32.xlu0 %v1270, 40
      %v1291 = vpop.permute.xlu0 %1290
      %1292 = vrot.lane.b32.xlu0 %v1271, 40
      %v1293 = vpop.permute.xlu0 %1292
      %1294 = vrot.lane.b32.xlu0 %v1272, 40
      %v1295 = vpop.permute.xlu0 %1294
      %1296 = vrot.lane.b32.xlu0 %v1273, 40
      %v1297 = vpop.permute.xlu0 %1296
      %1298 = vrot.lane.b32.xlu0 %v1274, 40
      %v1299 = vpop.permute.xlu0 %1298
      %1300 = vrot.lane.b32.xlu0 %v1275, 40
      %v1301 = vpop.permute.xlu0 %1300
      %1302 = vrot.lane.b32.xlu0 %v1276, 40
      %v1303 = vpop.permute.xlu0 %1302
      %1304 = vrot.lane.b32.xlu0 %v1277, 40
      %v1305 = vpop.permute.xlu0 %1304
      %1306 = vrot.lane.b32.xlu0 %v1278, 40
      %v1307 = vpop.permute.xlu0 %1306
      %1308 = vrot.lane.b32.xlu0 %v1279, 40
      %v1309 = vpop.permute.xlu0 %1308
      %1310 = vrot.lane.b32.xlu0 %v1280, 40
      %v1311 = vpop.permute.xlu0 %1310
      %1312 = vrot.lane.b32.xlu0 %v1281, 40
      %v1313 = vpop.permute.xlu0 %1312
      %v1330 = vunpack.c.l.b16 %v466
      %v1331 = vunpack.c.l.b16 %v468
      %v1332 = vunpack.c.l.b16 %v470
      %v1333 = vunpack.c.l.b16 %v472
      %v1334 = vunpack.c.l.b16 %v474
      %v1335 = vunpack.c.l.b16 %v476
      %v1336 = vunpack.c.l.b16 %v478
      %v1337 = vunpack.c.l.b16 %v480
      %v1338 = vunpack.c.l.b16 %v482
      %v1339 = vunpack.c.l.b16 %v484
      %v1340 = vunpack.c.l.b16 %v486
      %v1341 = vunpack.c.l.b16 %v488
      %v1342 = vunpack.c.l.b16 %v490
      %v1343 = vunpack.c.l.b16 %v492
      %v1344 = vunpack.c.l.b16 %v494
      %v1345 = vunpack.c.l.b16 %v496
      %v1346 = vpack.c.b16 %v1330, %v1170
      %v1347 = vpack.c.b16 %v1331, %v1171
      %v1348 = vpack.c.b16 %v1332, %v1172
      %v1349 = vpack.c.b16 %v1333, %v1173
      %v1350 = vpack.c.b16 %v1334, %v1174
      %v1351 = vpack.c.b16 %v1335, %v1175
      %v1352 = vpack.c.b16 %v1336, %v1176
      %v1353 = vpack.c.b16 %v1337, %v1177
      %v1354 = vpack.c.b16 %v1338, %v1178
      %v1355 = vpack.c.b16 %v1339, %v1179
      %v1356 = vpack.c.b16 %v1340, %v1180
      %v1357 = vpack.c.b16 %v1341, %v1181
      %v1358 = vpack.c.b16 %v1342, %v1182
      %v1359 = vpack.c.b16 %v1343, %v1183
      %v1360 = vpack.c.b16 %v1344, %v1184
      %v1361 = vpack.c.b16 %v1345, %v1185
      %v1363 = vshrl.u32 %v1346, 16
      %v1365 = vshll.u32 %v1346, 16
      %v1367 = vrot.slane %v1365, 1
      %v1368 = vor.u32 %v1363, %v1367
      %v1370 = vshrl.u32 %v1347, 16
      %v1372 = vshll.u32 %v1347, 16
      %v1374 = vrot.slane %v1372, 1
      %v1375 = vor.u32 %v1370, %v1374
      %v1377 = vshrl.u32 %v1348, 16
      %v1379 = vshll.u32 %v1348, 16
      %v1381 = vrot.slane %v1379, 1
      %v1382 = vor.u32 %v1377, %v1381
      %v1384 = vshrl.u32 %v1349, 16
      %v1386 = vshll.u32 %v1349, 16
      %v1388 = vrot.slane %v1386, 1
      %v1389 = vor.u32 %v1384, %v1388
      %v1391 = vshrl.u32 %v1350, 16
      %v1393 = vshll.u32 %v1350, 16
      %v1395 = vrot.slane %v1393, 1
      %v1396 = vor.u32 %v1391, %v1395
      %v1398 = vshrl.u32 %v1351, 16
      %v1400 = vshll.u32 %v1351, 16
      %v1402 = vrot.slane %v1400, 1
      %v1403 = vor.u32 %v1398, %v1402
      %v1405 = vshrl.u32 %v1352, 16
      %v1407 = vshll.u32 %v1352, 16
      %v1409 = vrot.slane %v1407, 1
      %v1410 = vor.u32 %v1405, %v1409
      %v1412 = vshrl.u32 %v1353, 16
      %v1414 = vshll.u32 %v1353, 16
      %v1416 = vrot.slane %v1414, 1
      %v1417 = vor.u32 %v1412, %v1416
      %v1419 = vshrl.u32 %v1354, 16
      %v1421 = vshll.u32 %v1354, 16
      %v1423 = vrot.slane %v1421, 1
      %v1424 = vor.u32 %v1419, %v1423
      %v1426 = vshrl.u32 %v1355, 16
      %v1428 = vshll.u32 %v1355, 16
      %v1430 = vrot.slane %v1428, 1
      %v1431 = vor.u32 %v1426, %v1430
      %v1433 = vshrl.u32 %v1356, 16
      %v1435 = vshll.u32 %v1356, 16
      %v1437 = vrot.slane %v1435, 1
      %v1438 = vor.u32 %v1433, %v1437
      %v1440 = vshrl.u32 %v1357, 16
      %v1442 = vshll.u32 %v1357, 16
      %v1444 = vrot.slane %v1442, 1
      %v1445 = vor.u32 %v1440, %v1444
      %v1447 = vshrl.u32 %v1358, 16
      %v1449 = vshll.u32 %v1358, 16
      %v1451 = vrot.slane %v1449, 1
      %v1452 = vor.u32 %v1447, %v1451
      %v1454 = vshrl.u32 %v1359, 16
      %v1456 = vshll.u32 %v1359, 16
      %v1458 = vrot.slane %v1456, 1
      %v1459 = vor.u32 %v1454, %v1458
      %v1461 = vshrl.u32 %v1360, 16
      %v1463 = vshll.u32 %v1360, 16
      %v1465 = vrot.slane %v1463, 1
      %v1466 = vor.u32 %v1461, %v1465
      %v1468 = vshrl.u32 %v1361, 16
      %v1470 = vshll.u32 %v1361, 16
      %v1472 = vrot.slane %v1470, 1
      %v1473 = vor.u32 %v1468, %v1472
      %1474 = vrot.lane.b32.xlu0 %v1368, 44
      %v1475 = vpop.permute.xlu0 %1474
      %1476 = vrot.lane.b32.xlu0 %v1375, 44
      %v1477 = vpop.permute.xlu0 %1476
      %1478 = vrot.lane.b32.xlu0 %v1382, 44
      %v1479 = vpop.permute.xlu0 %1478
      %1480 = vrot.lane.b32.xlu0 %v1389, 44
      %v1481 = vpop.permute.xlu0 %1480
      %1482 = vrot.lane.b32.xlu0 %v1396, 44
      %v1483 = vpop.permute.xlu0 %1482
      %1484 = vrot.lane.b32.xlu0 %v1403, 44
      %v1485 = vpop.permute.xlu0 %1484
      %1486 = vrot.lane.b32.xlu0 %v1410, 44
      %v1487 = vpop.permute.xlu0 %1486
      %1488 = vrot.lane.b32.xlu0 %v1417, 44
      %v1489 = vpop.permute.xlu0 %1488
      %1490 = vrot.lane.b32.xlu0 %v1424, 44
      %v1491 = vpop.permute.xlu0 %1490
      %1492 = vrot.lane.b32.xlu0 %v1431, 44
      %v1493 = vpop.permute.xlu0 %1492
      %1494 = vrot.lane.b32.xlu0 %v1438, 44
      %v1495 = vpop.permute.xlu0 %1494
      %1496 = vrot.lane.b32.xlu0 %v1445, 44
      %v1497 = vpop.permute.xlu0 %1496
      %1498 = vrot.lane.b32.xlu0 %v1452, 44
      %v1499 = vpop.permute.xlu0 %1498
      %1500 = vrot.lane.b32.xlu0 %v1459, 44
      %v1501 = vpop.permute.xlu0 %1500
      %1502 = vrot.lane.b32.xlu0 %v1466, 44
      %v1503 = vpop.permute.xlu0 %1502
      %1504 = vrot.lane.b32.xlu0 %v1473, 44
      %v1505 = vpop.permute.xlu0 %1504
      %v1507 = vunpack.c.l.b16 %v497
      %v1508 = vpack.c.b16 %v1507, %v1507
      %1509 = vrot.lane.b32.xlu0 %v1187, 48
      %v1510 = vpop.permute.xlu0 %1509
      %1511 = vrot.lane.b32.xlu0 %v1188, 48
      %v1512 = vpop.permute.xlu0 %1511
      %1513 = vrot.lane.b32.xlu0 %v1189, 48
      %v1514 = vpop.permute.xlu0 %1513
      %1515 = vrot.lane.b32.xlu0 %v1190, 48
      %v1516 = vpop.permute.xlu0 %1515
      %1517 = vrot.lane.b32.xlu0 %v1191, 48
      %v1518 = vpop.permute.xlu0 %1517
      %1519 = vrot.lane.b32.xlu0 %v1192, 48
      %v1520 = vpop.permute.xlu0 %1519
      %1521 = vrot.lane.b32.xlu0 %v1193, 48
      %v1522 = vpop.permute.xlu0 %1521
      %1523 = vrot.lane.b32.xlu0 %v1194, 48
      %v1524 = vpop.permute.xlu0 %1523
      %1525 = vrot.lane.b32.xlu0 %v1195, 48
      %v1526 = vpop.permute.xlu0 %1525
      %1527 = vrot.lane.b32.xlu0 %v1196, 48
      %v1528 = vpop.permute.xlu0 %1527
      %1529 = vrot.lane.b32.xlu0 %v1197, 48
      %v1530 = vpop.permute.xlu0 %1529
      %1531 = vrot.lane.b32.xlu0 %v1198, 48
      %v1532 = vpop.permute.xlu0 %1531
      %1533 = vrot.lane.b32.xlu0 %v1199, 48
      %v1534 = vpop.permute.xlu0 %1533
      %1535 = vrot.lane.b32.xlu0 %v1200, 48
      %v1536 = vpop.permute.xlu0 %1535
      %1537 = vrot.lane.b32.xlu0 %v1201, 48
      %v1538 = vpop.permute.xlu0 %1537
      %1539 = vrot.lane.b32.xlu0 %v1508, 48
      %v1540 = vpop.permute.xlu0 %1539
      %v1542 = vunpack.c.l.b16 %v534
      %v1543 = vpack.c.b16 %v1542, %v1542
      %1544 = vrot.lane.b32.xlu0 %v1267, 52
      %v1545 = vpop.permute.xlu0 %1544
      %1546 = vrot.lane.b32.xlu0 %v1268, 52
      %v1547 = vpop.permute.xlu0 %1546
      %1548 = vrot.lane.b32.xlu0 %v1269, 52
      %v1549 = vpop.permute.xlu0 %1548
      %1550 = vrot.lane.b32.xlu0 %v1270, 52
      %v1551 = vpop.permute.xlu0 %1550
      %1552 = vrot.lane.b32.xlu0 %v1271, 52
      %v1553 = vpop.permute.xlu0 %1552
      %1554 = vrot.lane.b32.xlu0 %v1272, 52
      %v1555 = vpop.permute.xlu0 %1554
      %1556 = vrot.lane.b32.xlu0 %v1273, 52
      %v1557 = vpop.permute.xlu0 %1556
      %1558 = vrot.lane.b32.xlu0 %v1274, 52
      %v1559 = vpop.permute.xlu0 %1558
      %1560 = vrot.lane.b32.xlu0 %v1275, 52
      %v1561 = vpop.permute.xlu0 %1560
      %1562 = vrot.lane.b32.xlu0 %v1276, 52
      %v1563 = vpop.permute.xlu0 %1562
      %1564 = vrot.lane.b32.xlu0 %v1277, 52
      %v1565 = vpop.permute.xlu0 %1564
      %1566 = vrot.lane.b32.xlu0 %v1278, 52
      %v1567 = vpop.permute.xlu0 %1566
      %1568 = vrot.lane.b32.xlu0 %v1279, 52
      %v1569 = vpop.permute.xlu0 %1568
      %1570 = vrot.lane.b32.xlu0 %v1280, 52
      %v1571 = vpop.permute.xlu0 %1570
      %1572 = vrot.lane.b32.xlu0 %v1281, 52
      %v1573 = vpop.permute.xlu0 %1572
      %1574 = vrot.lane.b32.xlu0 %v1543, 52
      %v1575 = vpop.permute.xlu0 %1574
      %v1577 = vunpack.c.l.b16 %v498
      %v1578 = vpack.c.b16 %v1577, %v1507
      %v1580 = vshrl.u32 %v1578, 16
      %v1582 = vshll.u32 %v1578, 16
      %v1584 = vrot.slane %v1582, 1
      %v1585 = vor.u32 %v1580, %v1584
      %1586 = vrot.lane.b32.xlu0 %v1375, 56
      %v1587 = vpop.permute.xlu0 %1586
      %1588 = vrot.lane.b32.xlu0 %v1382, 56
      %v1589 = vpop.permute.xlu0 %1588
      %1590 = vrot.lane.b32.xlu0 %v1389, 56
      %v1591 = vpop.permute.xlu0 %1590
      %1592 = vrot.lane.b32.xlu0 %v1396, 56
      %v1593 = vpop.permute.xlu0 %1592
      %1594 = vrot.lane.b32.xlu0 %v1403, 56
      %v1595 = vpop.permute.xlu0 %1594
      %1596 = vrot.lane.b32.xlu0 %v1410, 56
      %v1597 = vpop.permute.xlu0 %1596
      %1598 = vrot.lane.b32.xlu0 %v1417, 56
      %v1599 = vpop.permute.xlu0 %1598
      %1600 = vrot.lane.b32.xlu0 %v1424, 56
      %v1601 = vpop.permute.xlu0 %1600
      %1602 = vrot.lane.b32.xlu0 %v1431, 56
      %v1603 = vpop.permute.xlu0 %1602
      %1604 = vrot.lane.b32.xlu0 %v1438, 56
      %v1605 = vpop.permute.xlu0 %1604
      %1606 = vrot.lane.b32.xlu0 %v1445, 56
      %v1607 = vpop.permute.xlu0 %1606
      %1608 = vrot.lane.b32.xlu0 %v1452, 56
      %v1609 = vpop.permute.xlu0 %1608
      %1610 = vrot.lane.b32.xlu0 %v1459, 56
      %v1611 = vpop.permute.xlu0 %1610
      %1612 = vrot.lane.b32.xlu0 %v1466, 56
      %v1613 = vpop.permute.xlu0 %1612
      %1614 = vrot.lane.b32.xlu0 %v1473, 56
      %v1615 = vpop.permute.xlu0 %1614
      %1616 = vrot.lane.b32.xlu0 %v1585, 56
      %v1617 = vpop.permute.xlu0 %1616
      %v1619 = vunpack.c.l.b16 %v499
      %v1620 = vpack.c.b16 %v1619, %v1619
      %1621 = vrot.lane.b32.xlu0 %v1188, 60
      %v1622 = vpop.permute.xlu0 %1621
      %1623 = vrot.lane.b32.xlu0 %v1189, 60
      %v1624 = vpop.permute.xlu0 %1623
      %1625 = vrot.lane.b32.xlu0 %v1190, 60
      %v1626 = vpop.permute.xlu0 %1625
      %1627 = vrot.lane.b32.xlu0 %v1191, 60
      %v1628 = vpop.permute.xlu0 %1627
      %1629 = vrot.lane.b32.xlu0 %v1192, 60
      %v1630 = vpop.permute.xlu0 %1629
      %1631 = vrot.lane.b32.xlu0 %v1193, 60
      %v1632 = vpop.permute.xlu0 %1631
      %1633 = vrot.lane.b32.xlu0 %v1194, 60
      %v1634 = vpop.permute.xlu0 %1633
      %1635 = vrot.lane.b32.xlu0 %v1195, 60
      %v1636 = vpop.permute.xlu0 %1635
      %1637 = vrot.lane.b32.xlu0 %v1196, 60
      %v1638 = vpop.permute.xlu0 %1637
      %1639 = vrot.lane.b32.xlu0 %v1197, 60
      %v1640 = vpop.permute.xlu0 %1639
      %1641 = vrot.lane.b32.xlu0 %v1198, 60
      %v1642 = vpop.permute.xlu0 %1641
      %1643 = vrot.lane.b32.xlu0 %v1199, 60
      %v1644 = vpop.permute.xlu0 %1643
      %1645 = vrot.lane.b32.xlu0 %v1200, 60
      %v1646 = vpop.permute.xlu0 %1645
      %1647 = vrot.lane.b32.xlu0 %v1201, 60
      %v1648 = vpop.permute.xlu0 %1647
      %1649 = vrot.lane.b32.xlu0 %v1508, 60
      %v1650 = vpop.permute.xlu0 %1649
      %1651 = vrot.lane.b32.xlu0 %v1620, 60
      %v1652 = vpop.permute.xlu0 %1651
      %vm1653 = vcmask 31744
      %v1656 = vsel %vm1653, %v392, %v660
      %v1659 = vsel %vm1653, %v394, %v662
      %v1662 = vsel %vm1653, %v396, %v664
      %v1665 = vsel %vm1653, %v398, %v666
      %v1668 = vsel %vm1653, %v400, %v668
      %v1671 = vsel %vm1653, %v402, %v670
      %v1674 = vsel %vm1653, %v404, %v672
      %v1677 = vsel %vm1653, %v406, %v674
      %v1680 = vsel %vm1653, %v408, %v676
      %v1683 = vsel %vm1653, %v410, %v678
      %v1686 = vsel %vm1653, %v412, %v680
      %v1689 = vsel %vm1653, %v414, %v682
      %v1692 = vsel %vm1653, %v416, %v684
      %v1695 = vsel %vm1653, %v418, %v686
      %v1698 = vsel %vm1653, %v420, %v688
      %v1701 = vsel %vm1653, %v422, %v690
      %vm1702 = vcmask 64512
      %v1704 = vsel %vm1702, %v1656, %v884
      %v1706 = vsel %vm1702, %v1659, %v886
      %v1708 = vsel %vm1702, %v1662, %v888
      %v1710 = vsel %vm1702, %v1665, %v890
      %v1712 = vsel %vm1702, %v1668, %v892
      %v1714 = vsel %vm1702, %v1671, %v894
      %v1716 = vsel %vm1702, %v1674, %v896
      %v1718 = vsel %vm1702, %v1677, %v898
      %v1720 = vsel %vm1702, %v1680, %v900
      %v1722 = vsel %vm1702, %v1683, %v902
      %v1724 = vsel %vm1702, %v1686, %v904
      %v1726 = vsel %vm1702, %v1689, %v906
      %v1728 = vsel %vm1702, %v1692, %v908
      %v1730 = vsel %vm1702, %v1695, %v910
      %v1732 = vsel %vm1702, %v1698, %v912
      %v1734 = vsel %vm1702, %v1701, %v914
      %vm1735 = vcmask 97280
      %v1737 = vsel %vm1735, %v1704, %v934
      %v1739 = vsel %vm1735, %v1706, %v936
      %v1741 = vsel %vm1735, %v1708, %v938
      %v1743 = vsel %vm1735, %v1710, %v940
      %v1745 = vsel %vm1735, %v1712, %v942
      %v1747 = vsel %vm1735, %v1714, %v944
      %v1749 = vsel %vm1735, %v1716, %v946
      %v1751 = vsel %vm1735, %v1718, %v948
      %v1753 = vsel %vm1735, %v1720, %v950
      %v1755 = vsel %vm1735, %v1722, %v952
      %v1757 = vsel %vm1735, %v1724, %v954
      %v1759 = vsel %vm1735, %v1726, %v956
      %v1761 = vsel %vm1735, %v1728, %v958
      %v1763 = vsel %vm1735, %v1730, %v960
      %v1765 = vsel %vm1735, %v1732, %v962
      %v1767 = vsel %vm1735, %v1734, %v964
      %vm1768 = vcmask 130048
      %v1770 = vsel %vm1768, %v1737, %v969
      %v1772 = vsel %vm1768, %v1739, %v971
      %v1774 = vsel %vm1768, %v1741, %v973
      %v1776 = vsel %vm1768, %v1743, %v975
      %v1778 = vsel %vm1768, %v1745, %v977
      %v1780 = vsel %vm1768, %v1747, %v979
      %v1782 = vsel %vm1768, %v1749, %v981
      %v1784 = vsel %vm1768, %v1751, %v983
      %v1786 = vsel %vm1768, %v1753, %v985
      %v1788 = vsel %vm1768, %v1755, %v987
      %v1790 = vsel %vm1768, %v1757, %v989
      %v1792 = vsel %vm1768, %v1759, %v991
      %v1794 = vsel %vm1768, %v1761, %v993
      %v1796 = vsel %vm1768, %v1763, %v995
      %v1798 = vsel %vm1768, %v1765, %v997
      %v1800 = vsel %vm1768, %v1767, %v999
      %vm1801 = vcmask 162816
      %v1803 = vsel %vm1801, %v1770, %v1011
      %v1805 = vsel %vm1801, %v1772, %v1013
      %v1807 = vsel %vm1801, %v1774, %v1015
      %v1809 = vsel %vm1801, %v1776, %v1017
      %v1811 = vsel %vm1801, %v1778, %v1019
      %v1813 = vsel %vm1801, %v1780, %v1021
      %v1815 = vsel %vm1801, %v1782, %v1023
      %v1817 = vsel %vm1801, %v1784, %v1025
      %v1819 = vsel %vm1801, %v1786, %v1027
      %v1821 = vsel %vm1801, %v1788, %v1029
      %v1823 = vsel %vm1801, %v1790, %v1031
      %v1825 = vsel %vm1801, %v1792, %v1033
      %v1827 = vsel %vm1801, %v1794, %v1035
      %v1829 = vsel %vm1801, %v1796, %v1037
      %v1831 = vsel %vm1801, %v1798, %v1039
      %v1833 = vsel %vm1801, %v1800, %v1041
      %vm1834 = vcmask 195584
      %v1836 = vsel %vm1834, %v1803, %v1046
      %v1838 = vsel %vm1834, %v1805, %v1048
      %v1840 = vsel %vm1834, %v1807, %v1050
      %v1842 = vsel %vm1834, %v1809, %v1052
      %v1844 = vsel %vm1834, %v1811, %v1054
      %v1846 = vsel %vm1834, %v1813, %v1056
      %v1848 = vsel %vm1834, %v1815, %v1058
      %v1850 = vsel %vm1834, %v1817, %v1060
      %v1852 = vsel %vm1834, %v1819, %v1062
      %v1854 = vsel %vm1834, %v1821, %v1064
      %v1856 = vsel %vm1834, %v1823, %v1066
      %v1858 = vsel %vm1834, %v1825, %v1068
      %v1860 = vsel %vm1834, %v1827, %v1070
      %v1862 = vsel %vm1834, %v1829, %v1072
      %v1864 = vsel %vm1834, %v1831, %v1074
      %v1866 = vsel %vm1834, %v1833, %v1076
      %vm1867 = vcmask 228352
      %v1869 = vsel %vm1867, %v1836, %v1081
      %v1871 = vsel %vm1867, %v1838, %v1083
      %v1873 = vsel %vm1867, %v1840, %v1085
      %v1875 = vsel %vm1867, %v1842, %v1087
      %v1877 = vsel %vm1867, %v1844, %v1089
      %v1879 = vsel %vm1867, %v1846, %v1091
      %v1881 = vsel %vm1867, %v1848, %v1093
      %v1883 = vsel %vm1867, %v1850, %v1095
      %v1885 = vsel %vm1867, %v1852, %v1097
      %v1887 = vsel %vm1867, %v1854, %v1099
      %v1889 = vsel %vm1867, %v1856, %v1101
      %v1891 = vsel %vm1867, %v1858, %v1103
      %v1893 = vsel %vm1867, %v1860, %v1105
      %v1895 = vsel %vm1867, %v1862, %v1107
      %v1897 = vsel %vm1867, %v1864, %v1109
      %v1899 = vsel %vm1867, %v1866, %v1111
      %vm1900 = vcmask 261120
      %v1902 = vsel %vm1900, %v1869, %v1123
      %v1904 = vsel %vm1900, %v1871, %v1125
      %v1906 = vsel %vm1900, %v1873, %v1127
      %v1908 = vsel %vm1900, %v1875, %v1129
      %v1910 = vsel %vm1900, %v1877, %v1131
      %v1912 = vsel %vm1900, %v1879, %v1133
      %v1914 = vsel %vm1900, %v1881, %v1135
      %v1916 = vsel %vm1900, %v1883, %v1137
      %v1918 = vsel %vm1900, %v1885, %v1139
      %v1920 = vsel %vm1900, %v1887, %v1141
      %v1922 = vsel %vm1900, %v1889, %v1143
      %v1924 = vsel %vm1900, %v1891, %v1145
      %v1926 = vsel %vm1900, %v1893, %v1147
      %v1928 = vsel %vm1900, %v1895, %v1149
      %v1930 = vsel %vm1900, %v1897, %v1151
      %v1932 = vsel %vm1900, %v1899, %v1153
      %vm1933 = vcmask 293888
      %v1935 = vsel %vm1933, %v1902, %v1203
      %v1937 = vsel %vm1933, %v1904, %v1205
      %v1939 = vsel %vm1933, %v1906, %v1207
      %v1941 = vsel %vm1933, %v1908, %v1209
      %v1943 = vsel %vm1933, %v1910, %v1211
      %v1945 = vsel %vm1933, %v1912, %v1213
      %v1947 = vsel %vm1933, %v1914, %v1215
      %v1949 = vsel %vm1933, %v1916, %v1217
      %v1951 = vsel %vm1933, %v1918, %v1219
      %v1953 = vsel %vm1933, %v1920, %v1221
      %v1955 = vsel %vm1933, %v1922, %v1223
      %v1957 = vsel %vm1933, %v1924, %v1225
      %v1959 = vsel %vm1933, %v1926, %v1227
      %v1961 = vsel %vm1933, %v1928, %v1229
      %v1963 = vsel %vm1933, %v1930, %v1231
      %v1965 = vsel %vm1933, %v1932, %v1233
      %vm1966 = vcmask 326656
      %v1968 = vsel %vm1966, %v1935, %v1283
      %v1970 = vsel %vm1966, %v1937, %v1285
      %v1972 = vsel %vm1966, %v1939, %v1287
      %v1974 = vsel %vm1966, %v1941, %v1289
      %v1976 = vsel %vm1966, %v1943, %v1291
      %v1978 = vsel %vm1966, %v1945, %v1293
      %v1980 = vsel %vm1966, %v1947, %v1295
      %v1982 = vsel %vm1966, %v1949, %v1297
      %v1984 = vsel %vm1966, %v1951, %v1299
      %v1986 = vsel %vm1966, %v1953, %v1301
      %v1988 = vsel %vm1966, %v1955, %v1303
      %v1990 = vsel %vm1966, %v1957, %v1305
      %v1992 = vsel %vm1966, %v1959, %v1307
      %v1994 = vsel %vm1966, %v1961, %v1309
      %v1996 = vsel %vm1966, %v1963, %v1311
      %v1998 = vsel %vm1966, %v1965, %v1313
      %vm1999 = vcmask 359424
      %v2001 = vsel %vm1999, %v1968, %v1475
      %v2003 = vsel %vm1999, %v1970, %v1477
      %v2005 = vsel %vm1999, %v1972, %v1479
      %v2007 = vsel %vm1999, %v1974, %v1481
      %v2009 = vsel %vm1999, %v1976, %v1483
      %v2011 = vsel %vm1999, %v1978, %v1485
      %v2013 = vsel %vm1999, %v1980, %v1487
      %v2015 = vsel %vm1999, %v1982, %v1489
      %v2017 = vsel %vm1999, %v1984, %v1491
      %v2019 = vsel %vm1999, %v1986, %v1493
      %v2021 = vsel %vm1999, %v1988, %v1495
      %v2023 = vsel %vm1999, %v1990, %v1497
      %v2025 = vsel %vm1999, %v1992, %v1499
      %v2027 = vsel %vm1999, %v1994, %v1501
      %v2029 = vsel %vm1999, %v1996, %v1503
      %v2031 = vsel %vm1999, %v1998, %v1505
      %vm2032 = vcmask 392192
      %v2034 = vsel %vm2032, %v2001, %v1510
      %v2036 = vsel %vm2032, %v2003, %v1512
      %v2038 = vsel %vm2032, %v2005, %v1514
      %v2040 = vsel %vm2032, %v2007, %v1516
      %v2042 = vsel %vm2032, %v2009, %v1518
      %v2044 = vsel %vm2032, %v2011, %v1520
      %v2046 = vsel %vm2032, %v2013, %v1522
      %v2048 = vsel %vm2032, %v2015, %v1524
      %v2050 = vsel %vm2032, %v2017, %v1526
      %v2052 = vsel %vm2032, %v2019, %v1528
      %v2054 = vsel %vm2032, %v2021, %v1530
      %v2056 = vsel %vm2032, %v2023, %v1532
      %v2058 = vsel %vm2032, %v2025, %v1534
      %v2060 = vsel %vm2032, %v2027, %v1536
      %v2062 = vsel %vm2032, %v2029, %v1538
      %v2064 = vsel %vm2032, %v2031, %v1540
      %vm2065 = vcmask 424960
      %v2067 = vsel %vm2065, %v2034, %v1545
      %v2069 = vsel %vm2065, %v2036, %v1547
      %v2071 = vsel %vm2065, %v2038, %v1549
      %v2073 = vsel %vm2065, %v2040, %v1551
      %v2075 = vsel %vm2065, %v2042, %v1553
      %v2077 = vsel %vm2065, %v2044, %v1555
      %v2079 = vsel %vm2065, %v2046, %v1557
      %v2081 = vsel %vm2065, %v2048, %v1559
      %v2083 = vsel %vm2065, %v2050, %v1561
      %v2085 = vsel %vm2065, %v2052, %v1563
      %v2087 = vsel %vm2065, %v2054, %v1565
      %v2089 = vsel %vm2065, %v2056, %v1567
      %v2091 = vsel %vm2065, %v2058, %v1569
      %v2093 = vsel %vm2065, %v2060, %v1571
      %v2095 = vsel %vm2065, %v2062, %v1573
      %v2097 = vsel %vm2065, %v2064, %v1575
      %vm2098 = vcmask 457728
      %v2100 = vsel %vm2098, %v2067, %v1587
      %v2102 = vsel %vm2098, %v2069, %v1589
      %v2104 = vsel %vm2098, %v2071, %v1591
      %v2106 = vsel %vm2098, %v2073, %v1593
      %v2108 = vsel %vm2098, %v2075, %v1595
      %v2110 = vsel %vm2098, %v2077, %v1597
      %v2112 = vsel %vm2098, %v2079, %v1599
      %v2114 = vsel %vm2098, %v2081, %v1601
      %v2116 = vsel %vm2098, %v2083, %v1603
      %v2118 = vsel %vm2098, %v2085, %v1605
      %v2120 = vsel %vm2098, %v2087, %v1607
      %v2122 = vsel %vm2098, %v2089, %v1609
      %v2124 = vsel %vm2098, %v2091, %v1611
      %v2126 = vsel %vm2098, %v2093, %v1613
      %v2128 = vsel %vm2098, %v2095, %v1615
      %v2130 = vsel %vm2098, %v2097, %v1617
      %vm2131 = vcmask 490496
      %v2133 = vsel %vm2131, %v2100, %v1622
      %v2135 = vsel %vm2131, %v2102, %v1624
      %v2137 = vsel %vm2131, %v2104, %v1626
      %v2139 = vsel %vm2131, %v2106, %v1628
      %v2141 = vsel %vm2131, %v2108, %v1630
      %v2143 = vsel %vm2131, %v2110, %v1632
      %v2145 = vsel %vm2131, %v2112, %v1634
      %v2147 = vsel %vm2131, %v2114, %v1636
      %v2149 = vsel %vm2131, %v2116, %v1638
      %v2151 = vsel %vm2131, %v2118, %v1640
      %v2153 = vsel %vm2131, %v2120, %v1642
      %v2155 = vsel %vm2131, %v2122, %v1644
      %v2157 = vsel %vm2131, %v2124, %v1646
      %v2159 = vsel %vm2131, %v2126, %v1648
      %v2161 = vsel %vm2131, %v2128, %v1650
      %v2163 = vsel %vm2131, %v2130, %v1652
      %v2165 = vunpack.c.l.b16 %v500
      %v2166 = vpack.c.b16 %v2165, %v1619
      %v2168 = vshrl.u32 %v2166, 16
      %v2170 = vshll.u32 %v2166, 16
      %v2172 = vrot.slane %v2170, 1
      %v2173 = vor.u32 %v2168, %v2172
      %2174 = vrot.lane.b32.xlu0 %v1382, 4
      %v2175 = vpop.permute.xlu0 %2174
      %2176 = vrot.lane.b32.xlu0 %v1389, 4
      %v2177 = vpop.permute.xlu0 %2176
      %2178 = vrot.lane.b32.xlu0 %v1396, 4
      %v2179 = vpop.permute.xlu0 %2178
      %2180 = vrot.lane.b32.xlu0 %v1403, 4
      %v2181 = vpop.permute.xlu0 %2180
      %2182 = vrot.lane.b32.xlu0 %v1410, 4
      %v2183 = vpop.permute.xlu0 %2182
      %2184 = vrot.lane.b32.xlu0 %v1417, 4
      %v2185 = vpop.permute.xlu0 %2184
      %2186 = vrot.lane.b32.xlu0 %v1424, 4
      %v2187 = vpop.permute.xlu0 %2186
      %2188 = vrot.lane.b32.xlu0 %v1431, 4
      %v2189 = vpop.permute.xlu0 %2188
      %2190 = vrot.lane.b32.xlu0 %v1438, 4
      %v2191 = vpop.permute.xlu0 %2190
      %2192 = vrot.lane.b32.xlu0 %v1445, 4
      %v2193 = vpop.permute.xlu0 %2192
      %2194 = vrot.lane.b32.xlu0 %v1452, 4
      %v2195 = vpop.permute.xlu0 %2194
      %2196 = vrot.lane.b32.xlu0 %v1459, 4
      %v2197 = vpop.permute.xlu0 %2196
      %2198 = vrot.lane.b32.xlu0 %v1466, 4
      %v2199 = vpop.permute.xlu0 %2198
      %2200 = vrot.lane.b32.xlu0 %v1473, 4
      %v2201 = vpop.permute.xlu0 %2200
      %2202 = vrot.lane.b32.xlu0 %v1585, 4
      %v2203 = vpop.permute.xlu0 %2202
      %2204 = vrot.lane.b32.xlu0 %v2173, 4
      %v2205 = vpop.permute.xlu0 %2204
      %v2222 = vunpack.c.l.b16 %v538
      %v2223 = vunpack.c.l.b16 %v540
      %v2224 = vunpack.c.l.b16 %v542
      %v2225 = vunpack.c.l.b16 %v544
      %v2226 = vunpack.c.l.b16 %v546
      %v2227 = vunpack.c.l.b16 %v548
      %v2228 = vunpack.c.l.b16 %v550
      %v2229 = vunpack.c.l.b16 %v552
      %v2230 = vunpack.c.l.b16 %v554
      %v2231 = vunpack.c.l.b16 %v556
      %v2232 = vunpack.c.l.b16 %v558
      %v2233 = vunpack.c.l.b16 %v560
      %v2234 = vunpack.c.l.b16 %v562
      %v2235 = vunpack.c.l.b16 %v564
      %v2236 = vunpack.c.l.b16 %v566
      %v2237 = vunpack.c.l.b16 %v568
      %v2238 = vpack.c.b16 %v2222, %v2222
      %v2239 = vpack.c.b16 %v2223, %v2223
      %v2240 = vpack.c.b16 %v2224, %v2224
      %v2241 = vpack.c.b16 %v2225, %v2225
      %v2242 = vpack.c.b16 %v2226, %v2226
      %v2243 = vpack.c.b16 %v2227, %v2227
      %v2244 = vpack.c.b16 %v2228, %v2228
      %v2245 = vpack.c.b16 %v2229, %v2229
      %v2246 = vpack.c.b16 %v2230, %v2230
      %v2247 = vpack.c.b16 %v2231, %v2231
      %v2248 = vpack.c.b16 %v2232, %v2232
      %v2249 = vpack.c.b16 %v2233, %v2233
      %v2250 = vpack.c.b16 %v2234, %v2234
      %v2251 = vpack.c.b16 %v2235, %v2235
      %v2252 = vpack.c.b16 %v2236, %v2236
      %v2253 = vpack.c.b16 %v2237, %v2237
      %2254 = vrot.lane.b32.xlu0 %v2238, 8
      %v2255 = vpop.permute.xlu0 %2254
      %2256 = vrot.lane.b32.xlu0 %v2239, 8
      %v2257 = vpop.permute.xlu0 %2256
      %2258 = vrot.lane.b32.xlu0 %v2240, 8
      %v2259 = vpop.permute.xlu0 %2258
      %2260 = vrot.lane.b32.xlu0 %v2241, 8
      %v2261 = vpop.permute.xlu0 %2260
      %2262 = vrot.lane.b32.xlu0 %v2242, 8
      %v2263 = vpop.permute.xlu0 %2262
      %2264 = vrot.lane.b32.xlu0 %v2243, 8
      %v2265 = vpop.permute.xlu0 %2264
      %2266 = vrot.lane.b32.xlu0 %v2244, 8
      %v2267 = vpop.permute.xlu0 %2266
      %2268 = vrot.lane.b32.xlu0 %v2245, 8
      %v2269 = vpop.permute.xlu0 %2268
      %2270 = vrot.lane.b32.xlu0 %v2246, 8
      %v2271 = vpop.permute.xlu0 %2270
      %2272 = vrot.lane.b32.xlu0 %v2247, 8
      %v2273 = vpop.permute.xlu0 %2272
      %2274 = vrot.lane.b32.xlu0 %v2248, 8
      %v2275 = vpop.permute.xlu0 %2274
      %2276 = vrot.lane.b32.xlu0 %v2249, 8
      %v2277 = vpop.permute.xlu0 %2276
      %2278 = vrot.lane.b32.xlu0 %v2250, 8
      %v2279 = vpop.permute.xlu0 %2278
      %2280 = vrot.lane.b32.xlu0 %v2251, 8
      %v2281 = vpop.permute.xlu0 %2280
      %2282 = vrot.lane.b32.xlu0 %v2252, 8
      %v2283 = vpop.permute.xlu0 %2282
      %2284 = vrot.lane.b32.xlu0 %v2253, 8
      %v2285 = vpop.permute.xlu0 %2284
      %v2302 = vunpack.c.l.b16 %v575
      %v2303 = vunpack.c.l.b16 %v577
      %v2304 = vunpack.c.l.b16 %v579
      %v2305 = vunpack.c.l.b16 %v581
      %v2306 = vunpack.c.l.b16 %v583
      %v2307 = vunpack.c.l.b16 %v585
      %v2308 = vunpack.c.l.b16 %v587
      %v2309 = vunpack.c.l.b16 %v589
      %v2310 = vunpack.c.l.b16 %v591
      %v2311 = vunpack.c.l.b16 %v593
      %v2312 = vunpack.c.l.b16 %v595
      %v2313 = vunpack.c.l.b16 %v597
      %v2314 = vunpack.c.l.b16 %v599
      %v2315 = vunpack.c.l.b16 %v601
      %v2316 = vunpack.c.l.b16 %v603
      %v2317 = vunpack.c.l.b16 %v605
      %v2318 = vpack.c.b16 %v2302, %v2302
      %v2319 = vpack.c.b16 %v2303, %v2303
      %v2320 = vpack.c.b16 %v2304, %v2304
      %v2321 = vpack.c.b16 %v2305, %v2305
      %v2322 = vpack.c.b16 %v2306, %v2306
      %v2323 = vpack.c.b16 %v2307, %v2307
      %v2324 = vpack.c.b16 %v2308, %v2308
      %v2325 = vpack.c.b16 %v2309, %v2309
      %v2326 = vpack.c.b16 %v2310, %v2310
      %v2327 = vpack.c.b16 %v2311, %v2311
      %v2328 = vpack.c.b16 %v2312, %v2312
      %v2329 = vpack.c.b16 %v2313, %v2313
      %v2330 = vpack.c.b16 %v2314, %v2314
      %v2331 = vpack.c.b16 %v2315, %v2315
      %v2332 = vpack.c.b16 %v2316, %v2316
      %v2333 = vpack.c.b16 %v2317, %v2317
      %2334 = vrot.lane.b32.xlu0 %v2318, 12
      %v2335 = vpop.permute.xlu0 %2334
      %2336 = vrot.lane.b32.xlu0 %v2319, 12
      %v2337 = vpop.permute.xlu0 %2336
      %2338 = vrot.lane.b32.xlu0 %v2320, 12
      %v2339 = vpop.permute.xlu0 %2338
      %2340 = vrot.lane.b32.xlu0 %v2321, 12
      %v2341 = vpop.permute.xlu0 %2340
      %2342 = vrot.lane.b32.xlu0 %v2322, 12
      %v2343 = vpop.permute.xlu0 %2342
      %2344 = vrot.lane.b32.xlu0 %v2323, 12
      %v2345 = vpop.permute.xlu0 %2344
      %2346 = vrot.lane.b32.xlu0 %v2324, 12
      %v2347 = vpop.permute.xlu0 %2346
      %2348 = vrot.lane.b32.xlu0 %v2325, 12
      %v2349 = vpop.permute.xlu0 %2348
      %2350 = vrot.lane.b32.xlu0 %v2326, 12
      %v2351 = vpop.permute.xlu0 %2350
      %2352 = vrot.lane.b32.xlu0 %v2327, 12
      %v2353 = vpop.permute.xlu0 %2352
      %2354 = vrot.lane.b32.xlu0 %v2328, 12
      %v2355 = vpop.permute.xlu0 %2354
      %2356 = vrot.lane.b32.xlu0 %v2329, 12
      %v2357 = vpop.permute.xlu0 %2356
      %2358 = vrot.lane.b32.xlu0 %v2330, 12
      %v2359 = vpop.permute.xlu0 %2358
      %2360 = vrot.lane.b32.xlu0 %v2331, 12
      %v2361 = vpop.permute.xlu0 %2360
      %2362 = vrot.lane.b32.xlu0 %v2332, 12
      %v2363 = vpop.permute.xlu0 %2362
      %2364 = vrot.lane.b32.xlu0 %v2333, 12
      %v2365 = vpop.permute.xlu0 %2364
      %v2382 = vunpack.c.l.b16 %v539
      %v2383 = vunpack.c.l.b16 %v541
      %v2384 = vunpack.c.l.b16 %v543
      %v2385 = vunpack.c.l.b16 %v545
      %v2386 = vunpack.c.l.b16 %v547
      %v2387 = vunpack.c.l.b16 %v549
      %v2388 = vunpack.c.l.b16 %v551
      %v2389 = vunpack.c.l.b16 %v553
      %v2390 = vunpack.c.l.b16 %v555
      %v2391 = vunpack.c.l.b16 %v557
      %v2392 = vunpack.c.l.b16 %v559
      %v2393 = vunpack.c.l.b16 %v561
      %v2394 = vunpack.c.l.b16 %v563
      %v2395 = vunpack.c.l.b16 %v565
      %v2396 = vunpack.c.l.b16 %v567
      %v2397 = vunpack.c.l.b16 %v569
      %v2398 = vpack.c.b16 %v2382, %v2222
      %v2399 = vpack.c.b16 %v2383, %v2223
      %v2400 = vpack.c.b16 %v2384, %v2224
      %v2401 = vpack.c.b16 %v2385, %v2225
      %v2402 = vpack.c.b16 %v2386, %v2226
      %v2403 = vpack.c.b16 %v2387, %v2227
      %v2404 = vpack.c.b16 %v2388, %v2228
      %v2405 = vpack.c.b16 %v2389, %v2229
      %v2406 = vpack.c.b16 %v2390, %v2230
      %v2407 = vpack.c.b16 %v2391, %v2231
      %v2408 = vpack.c.b16 %v2392, %v2232
      %v2409 = vpack.c.b16 %v2393, %v2233
      %v2410 = vpack.c.b16 %v2394, %v2234
      %v2411 = vpack.c.b16 %v2395, %v2235
      %v2412 = vpack.c.b16 %v2396, %v2236
      %v2413 = vpack.c.b16 %v2397, %v2237
      %v2415 = vshrl.u32 %v2398, 16
      %v2417 = vshll.u32 %v2398, 16
      %v2419 = vrot.slane %v2417, 1
      %v2420 = vor.u32 %v2415, %v2419
      %v2422 = vshrl.u32 %v2399, 16
      %v2424 = vshll.u32 %v2399, 16
      %v2426 = vrot.slane %v2424, 1
      %v2427 = vor.u32 %v2422, %v2426
      %v2429 = vshrl.u32 %v2400, 16
      %v2431 = vshll.u32 %v2400, 16
      %v2433 = vrot.slane %v2431, 1
      %v2434 = vor.u32 %v2429, %v2433
      %v2436 = vshrl.u32 %v2401, 16
      %v2438 = vshll.u32 %v2401, 16
      %v2440 = vrot.slane %v2438, 1
      %v2441 = vor.u32 %v2436, %v2440
      %v2443 = vshrl.u32 %v2402, 16
      %v2445 = vshll.u32 %v2402, 16
      %v2447 = vrot.slane %v2445, 1
      %v2448 = vor.u32 %v2443, %v2447
      %v2450 = vshrl.u32 %v2403, 16
      %v2452 = vshll.u32 %v2403, 16
      %v2454 = vrot.slane %v2452, 1
      %v2455 = vor.u32 %v2450, %v2454
      %v2457 = vshrl.u32 %v2404, 16
      %v2459 = vshll.u32 %v2404, 16
      %v2461 = vrot.slane %v2459, 1
      %v2462 = vor.u32 %v2457, %v2461
      %v2464 = vshrl.u32 %v2405, 16
      %v2466 = vshll.u32 %v2405, 16
      %v2468 = vrot.slane %v2466, 1
      %v2469 = vor.u32 %v2464, %v2468
      %v2471 = vshrl.u32 %v2406, 16
      %v2473 = vshll.u32 %v2406, 16
      %v2475 = vrot.slane %v2473, 1
      %v2476 = vor.u32 %v2471, %v2475
      %v2478 = vshrl.u32 %v2407, 16
      %v2480 = vshll.u32 %v2407, 16
      %v2482 = vrot.slane %v2480, 1
      %v2483 = vor.u32 %v2478, %v2482
      %v2485 = vshrl.u32 %v2408, 16
      %v2487 = vshll.u32 %v2408, 16
      %v2489 = vrot.slane %v2487, 1
      %v2490 = vor.u32 %v2485, %v2489
      %v2492 = vshrl.u32 %v2409, 16
      %v2494 = vshll.u32 %v2409, 16
      %v2496 = vrot.slane %v2494, 1
      %v2497 = vor.u32 %v2492, %v2496
      %v2499 = vshrl.u32 %v2410, 16
      %v2501 = vshll.u32 %v2410, 16
      %v2503 = vrot.slane %v2501, 1
      %v2504 = vor.u32 %v2499, %v2503
      %v2506 = vshrl.u32 %v2411, 16
      %v2508 = vshll.u32 %v2411, 16
      %v2510 = vrot.slane %v2508, 1
      %v2511 = vor.u32 %v2506, %v2510
      %v2513 = vshrl.u32 %v2412, 16
      %v2515 = vshll.u32 %v2412, 16
      %v2517 = vrot.slane %v2515, 1
      %v2518 = vor.u32 %v2513, %v2517
      %v2520 = vshrl.u32 %v2413, 16
      %v2522 = vshll.u32 %v2413, 16
      %v2524 = vrot.slane %v2522, 1
      %v2525 = vor.u32 %v2520, %v2524
      %2526 = vrot.lane.b32.xlu0 %v2420, 16
      %v2527 = vpop.permute.xlu0 %2526
      %2528 = vrot.lane.b32.xlu0 %v2427, 16
      %v2529 = vpop.permute.xlu0 %2528
      %2530 = vrot.lane.b32.xlu0 %v2434, 16
      %v2531 = vpop.permute.xlu0 %2530
      %2532 = vrot.lane.b32.xlu0 %v2441, 16
      %v2533 = vpop.permute.xlu0 %2532
      %2534 = vrot.lane.b32.xlu0 %v2448, 16
      %v2535 = vpop.permute.xlu0 %2534
      %2536 = vrot.lane.b32.xlu0 %v2455, 16
      %v2537 = vpop.permute.xlu0 %2536
      %2538 = vrot.lane.b32.xlu0 %v2462, 16
      %v2539 = vpop.permute.xlu0 %2538
      %2540 = vrot.lane.b32.xlu0 %v2469, 16
      %v2541 = vpop.permute.xlu0 %2540
      %2542 = vrot.lane.b32.xlu0 %v2476, 16
      %v2543 = vpop.permute.xlu0 %2542
      %2544 = vrot.lane.b32.xlu0 %v2483, 16
      %v2545 = vpop.permute.xlu0 %2544
      %2546 = vrot.lane.b32.xlu0 %v2490, 16
      %v2547 = vpop.permute.xlu0 %2546
      %2548 = vrot.lane.b32.xlu0 %v2497, 16
      %v2549 = vpop.permute.xlu0 %2548
      %2550 = vrot.lane.b32.xlu0 %v2504, 16
      %v2551 = vpop.permute.xlu0 %2550
      %2552 = vrot.lane.b32.xlu0 %v2511, 16
      %v2553 = vpop.permute.xlu0 %2552
      %2554 = vrot.lane.b32.xlu0 %v2518, 16
      %v2555 = vpop.permute.xlu0 %2554
      %2556 = vrot.lane.b32.xlu0 %v2525, 16
      %v2557 = vpop.permute.xlu0 %2556
      %v2559 = vunpack.c.l.b16 %v570
      %v2560 = vpack.c.b16 %v2559, %v2559
      %2561 = vrot.lane.b32.xlu0 %v2239, 20
      %v2562 = vpop.permute.xlu0 %2561
      %2563 = vrot.lane.b32.xlu0 %v2240, 20
      %v2564 = vpop.permute.xlu0 %2563
      %2565 = vrot.lane.b32.xlu0 %v2241, 20
      %v2566 = vpop.permute.xlu0 %2565
      %2567 = vrot.lane.b32.xlu0 %v2242, 20
      %v2568 = vpop.permute.xlu0 %2567
      %2569 = vrot.lane.b32.xlu0 %v2243, 20
      %v2570 = vpop.permute.xlu0 %2569
      %2571 = vrot.lane.b32.xlu0 %v2244, 20
      %v2572 = vpop.permute.xlu0 %2571
      %2573 = vrot.lane.b32.xlu0 %v2245, 20
      %v2574 = vpop.permute.xlu0 %2573
      %2575 = vrot.lane.b32.xlu0 %v2246, 20
      %v2576 = vpop.permute.xlu0 %2575
      %2577 = vrot.lane.b32.xlu0 %v2247, 20
      %v2578 = vpop.permute.xlu0 %2577
      %2579 = vrot.lane.b32.xlu0 %v2248, 20
      %v2580 = vpop.permute.xlu0 %2579
      %2581 = vrot.lane.b32.xlu0 %v2249, 20
      %v2582 = vpop.permute.xlu0 %2581
      %2583 = vrot.lane.b32.xlu0 %v2250, 20
      %v2584 = vpop.permute.xlu0 %2583
      %2585 = vrot.lane.b32.xlu0 %v2251, 20
      %v2586 = vpop.permute.xlu0 %2585
      %2587 = vrot.lane.b32.xlu0 %v2252, 20
      %v2588 = vpop.permute.xlu0 %2587
      %2589 = vrot.lane.b32.xlu0 %v2253, 20
      %v2590 = vpop.permute.xlu0 %2589
      %2591 = vrot.lane.b32.xlu0 %v2560, 20
      %v2592 = vpop.permute.xlu0 %2591
      %v2594 = vunpack.c.l.b16 %v607
      %v2595 = vpack.c.b16 %v2594, %v2594
      %2596 = vrot.lane.b32.xlu0 %v2319, 24
      %v2597 = vpop.permute.xlu0 %2596
      %2598 = vrot.lane.b32.xlu0 %v2320, 24
      %v2599 = vpop.permute.xlu0 %2598
      %2600 = vrot.lane.b32.xlu0 %v2321, 24
      %v2601 = vpop.permute.xlu0 %2600
      %2602 = vrot.lane.b32.xlu0 %v2322, 24
      %v2603 = vpop.permute.xlu0 %2602
      %2604 = vrot.lane.b32.xlu0 %v2323, 24
      %v2605 = vpop.permute.xlu0 %2604
      %2606 = vrot.lane.b32.xlu0 %v2324, 24
      %v2607 = vpop.permute.xlu0 %2606
      %2608 = vrot.lane.b32.xlu0 %v2325, 24
      %v2609 = vpop.permute.xlu0 %2608
      %2610 = vrot.lane.b32.xlu0 %v2326, 24
      %v2611 = vpop.permute.xlu0 %2610
      %2612 = vrot.lane.b32.xlu0 %v2327, 24
      %v2613 = vpop.permute.xlu0 %2612
      %2614 = vrot.lane.b32.xlu0 %v2328, 24
      %v2615 = vpop.permute.xlu0 %2614
      %2616 = vrot.lane.b32.xlu0 %v2329, 24
      %v2617 = vpop.permute.xlu0 %2616
      %2618 = vrot.lane.b32.xlu0 %v2330, 24
      %v2619 = vpop.permute.xlu0 %2618
      %2620 = vrot.lane.b32.xlu0 %v2331, 24
      %v2621 = vpop.permute.xlu0 %2620
      %2622 = vrot.lane.b32.xlu0 %v2332, 24
      %v2623 = vpop.permute.xlu0 %2622
      %2624 = vrot.lane.b32.xlu0 %v2333, 24
      %v2625 = vpop.permute.xlu0 %2624
      %2626 = vrot.lane.b32.xlu0 %v2595, 24
      %v2627 = vpop.permute.xlu0 %2626
      %v2629 = vunpack.c.l.b16 %v571
      %v2630 = vpack.c.b16 %v2629, %v2559
      %v2632 = vshrl.u32 %v2630, 16
      %v2634 = vshll.u32 %v2630, 16
      %v2636 = vrot.slane %v2634, 1
      %v2637 = vor.u32 %v2632, %v2636
      %2638 = vrot.lane.b32.xlu0 %v2427, 28
      %v2639 = vpop.permute.xlu0 %2638
      %2640 = vrot.lane.b32.xlu0 %v2434, 28
      %v2641 = vpop.permute.xlu0 %2640
      %2642 = vrot.lane.b32.xlu0 %v2441, 28
      %v2643 = vpop.permute.xlu0 %2642
      %2644 = vrot.lane.b32.xlu0 %v2448, 28
      %v2645 = vpop.permute.xlu0 %2644
      %2646 = vrot.lane.b32.xlu0 %v2455, 28
      %v2647 = vpop.permute.xlu0 %2646
      %2648 = vrot.lane.b32.xlu0 %v2462, 28
      %v2649 = vpop.permute.xlu0 %2648
      %2650 = vrot.lane.b32.xlu0 %v2469, 28
      %v2651 = vpop.permute.xlu0 %2650
      %2652 = vrot.lane.b32.xlu0 %v2476, 28
      %v2653 = vpop.permute.xlu0 %2652
      %2654 = vrot.lane.b32.xlu0 %v2483, 28
      %v2655 = vpop.permute.xlu0 %2654
      %2656 = vrot.lane.b32.xlu0 %v2490, 28
      %v2657 = vpop.permute.xlu0 %2656
      %2658 = vrot.lane.b32.xlu0 %v2497, 28
      %v2659 = vpop.permute.xlu0 %2658
      %2660 = vrot.lane.b32.xlu0 %v2504, 28
      %v2661 = vpop.permute.xlu0 %2660
      %2662 = vrot.lane.b32.xlu0 %v2511, 28
      %v2663 = vpop.permute.xlu0 %2662
      %2664 = vrot.lane.b32.xlu0 %v2518, 28
      %v2665 = vpop.permute.xlu0 %2664
      %2666 = vrot.lane.b32.xlu0 %v2525, 28
      %v2667 = vpop.permute.xlu0 %2666
      %2668 = vrot.lane.b32.xlu0 %v2637, 28
      %v2669 = vpop.permute.xlu0 %2668
      %v2671 = vunpack.c.l.b16 %v572
      %v2672 = vpack.c.b16 %v2671, %v2671
      %2673 = vrot.lane.b32.xlu0 %v2240, 32
      %v2674 = vpop.permute.xlu0 %2673
      %2675 = vrot.lane.b32.xlu0 %v2241, 32
      %v2676 = vpop.permute.xlu0 %2675
      %2677 = vrot.lane.b32.xlu0 %v2242, 32
      %v2678 = vpop.permute.xlu0 %2677
      %2679 = vrot.lane.b32.xlu0 %v2243, 32
      %v2680 = vpop.permute.xlu0 %2679
      %2681 = vrot.lane.b32.xlu0 %v2244, 32
      %v2682 = vpop.permute.xlu0 %2681
      %2683 = vrot.lane.b32.xlu0 %v2245, 32
      %v2684 = vpop.permute.xlu0 %2683
      %2685 = vrot.lane.b32.xlu0 %v2246, 32
      %v2686 = vpop.permute.xlu0 %2685
      %2687 = vrot.lane.b32.xlu0 %v2247, 32
      %v2688 = vpop.permute.xlu0 %2687
      %2689 = vrot.lane.b32.xlu0 %v2248, 32
      %v2690 = vpop.permute.xlu0 %2689
      %2691 = vrot.lane.b32.xlu0 %v2249, 32
      %v2692 = vpop.permute.xlu0 %2691
      %2693 = vrot.lane.b32.xlu0 %v2250, 32
      %v2694 = vpop.permute.xlu0 %2693
      %2695 = vrot.lane.b32.xlu0 %v2251, 32
      %v2696 = vpop.permute.xlu0 %2695
      %2697 = vrot.lane.b32.xlu0 %v2252, 32
      %v2698 = vpop.permute.xlu0 %2697
      %2699 = vrot.lane.b32.xlu0 %v2253, 32
      %v2700 = vpop.permute.xlu0 %2699
      %2701 = vrot.lane.b32.xlu0 %v2560, 32
      %v2702 = vpop.permute.xlu0 %2701
      %2703 = vrot.lane.b32.xlu0 %v2672, 32
      %v2704 = vpop.permute.xlu0 %2703
      %v2706 = vunpack.c.l.b16 %v609
      %v2707 = vpack.c.b16 %v2706, %v2706
      %2708 = vrot.lane.b32.xlu0 %v2320, 36
      %v2709 = vpop.permute.xlu0 %2708
      %2710 = vrot.lane.b32.xlu0 %v2321, 36
      %v2711 = vpop.permute.xlu0 %2710
      %2712 = vrot.lane.b32.xlu0 %v2322, 36
      %v2713 = vpop.permute.xlu0 %2712
      %2714 = vrot.lane.b32.xlu0 %v2323, 36
      %v2715 = vpop.permute.xlu0 %2714
      %2716 = vrot.lane.b32.xlu0 %v2324, 36
      %v2717 = vpop.permute.xlu0 %2716
      %2718 = vrot.lane.b32.xlu0 %v2325, 36
      %v2719 = vpop.permute.xlu0 %2718
      %2720 = vrot.lane.b32.xlu0 %v2326, 36
      %v2721 = vpop.permute.xlu0 %2720
      %2722 = vrot.lane.b32.xlu0 %v2327, 36
      %v2723 = vpop.permute.xlu0 %2722
      %2724 = vrot.lane.b32.xlu0 %v2328, 36
      %v2725 = vpop.permute.xlu0 %2724
      %2726 = vrot.lane.b32.xlu0 %v2329, 36
      %v2727 = vpop.permute.xlu0 %2726
      %2728 = vrot.lane.b32.xlu0 %v2330, 36
      %v2729 = vpop.permute.xlu0 %2728
      %2730 = vrot.lane.b32.xlu0 %v2331, 36
      %v2731 = vpop.permute.xlu0 %2730
      %2732 = vrot.lane.b32.xlu0 %v2332, 36
      %v2733 = vpop.permute.xlu0 %2732
      %2734 = vrot.lane.b32.xlu0 %v2333, 36
      %v2735 = vpop.permute.xlu0 %2734
      %2736 = vrot.lane.b32.xlu0 %v2595, 36
      %v2737 = vpop.permute.xlu0 %2736
      %2738 = vrot.lane.b32.xlu0 %v2707, 36
      %v2739 = vpop.permute.xlu0 %2738
      %v2741 = vunpack.c.l.b16 %v573
      %v2742 = vpack.c.b16 %v2741, %v2671
      %v2744 = vshrl.u32 %v2742, 16
      %v2746 = vshll.u32 %v2742, 16
      %v2748 = vrot.slane %v2746, 1
      %v2749 = vor.u32 %v2744, %v2748
      %2750 = vrot.lane.b32.xlu0 %v2434, 40
      %v2751 = vpop.permute.xlu0 %2750
      %2752 = vrot.lane.b32.xlu0 %v2441, 40
      %v2753 = vpop.permute.xlu0 %2752
      %2754 = vrot.lane.b32.xlu0 %v2448, 40
      %v2755 = vpop.permute.xlu0 %2754
      %2756 = vrot.lane.b32.xlu0 %v2455, 40
      %v2757 = vpop.permute.xlu0 %2756
      %2758 = vrot.lane.b32.xlu0 %v2462, 40
      %v2759 = vpop.permute.xlu0 %2758
      %2760 = vrot.lane.b32.xlu0 %v2469, 40
      %v2761 = vpop.permute.xlu0 %2760
      %2762 = vrot.lane.b32.xlu0 %v2476, 40
      %v2763 = vpop.permute.xlu0 %2762
      %2764 = vrot.lane.b32.xlu0 %v2483, 40
      %v2765 = vpop.permute.xlu0 %2764
      %2766 = vrot.lane.b32.xlu0 %v2490, 40
      %v2767 = vpop.permute.xlu0 %2766
      %2768 = vrot.lane.b32.xlu0 %v2497, 40
      %v2769 = vpop.permute.xlu0 %2768
      %2770 = vrot.lane.b32.xlu0 %v2504, 40
      %v2771 = vpop.permute.xlu0 %2770
      %2772 = vrot.lane.b32.xlu0 %v2511, 40
      %v2773 = vpop.permute.xlu0 %2772
      %2774 = vrot.lane.b32.xlu0 %v2518, 40
      %v2775 = vpop.permute.xlu0 %2774
      %2776 = vrot.lane.b32.xlu0 %v2525, 40
      %v2777 = vpop.permute.xlu0 %2776
      %2778 = vrot.lane.b32.xlu0 %v2637, 40
      %v2779 = vpop.permute.xlu0 %2778
      %2780 = vrot.lane.b32.xlu0 %v2749, 40
      %v2781 = vpop.permute.xlu0 %2780
      %v2784 = vsel %vm1653, %v506, %v2175
      %v2787 = vsel %vm1653, %v508, %v2177
      %v2790 = vsel %vm1653, %v510, %v2179
      %v2793 = vsel %vm1653, %v512, %v2181
      %v2796 = vsel %vm1653, %v514, %v2183
      %v2799 = vsel %vm1653, %v516, %v2185
      %v2802 = vsel %vm1653, %v518, %v2187
      %v2805 = vsel %vm1653, %v520, %v2189
      %v2808 = vsel %vm1653, %v522, %v2191
      %v2811 = vsel %vm1653, %v524, %v2193
      %v2814 = vsel %vm1653, %v526, %v2195
      %v2817 = vsel %vm1653, %v528, %v2197
      %v2820 = vsel %vm1653, %v530, %v2199
      %v2823 = vsel %vm1653, %v532, %v2201
      %v2826 = vsel %vm1653, %v534, %v2203
      %v2829 = vsel %vm1653, %v536, %v2205
      %v2831 = vsel %vm1702, %v2784, %v2255
      %v2833 = vsel %vm1702, %v2787, %v2257
      %v2835 = vsel %vm1702, %v2790, %v2259
      %v2837 = vsel %vm1702, %v2793, %v2261
      %v2839 = vsel %vm1702, %v2796, %v2263
      %v2841 = vsel %vm1702, %v2799, %v2265
      %v2843 = vsel %vm1702, %v2802, %v2267
      %v2845 = vsel %vm1702, %v2805, %v2269
      %v2847 = vsel %vm1702, %v2808, %v2271
      %v2849 = vsel %vm1702, %v2811, %v2273
      %v2851 = vsel %vm1702, %v2814, %v2275
      %v2853 = vsel %vm1702, %v2817, %v2277
      %v2855 = vsel %vm1702, %v2820, %v2279
      %v2857 = vsel %vm1702, %v2823, %v2281
      %v2859 = vsel %vm1702, %v2826, %v2283
      %v2861 = vsel %vm1702, %v2829, %v2285
      %v2863 = vsel %vm1735, %v2831, %v2335
      %v2865 = vsel %vm1735, %v2833, %v2337
      %v2867 = vsel %vm1735, %v2835, %v2339
      %v2869 = vsel %vm1735, %v2837, %v2341
      %v2871 = vsel %vm1735, %v2839, %v2343
      %v2873 = vsel %vm1735, %v2841, %v2345
      %v2875 = vsel %vm1735, %v2843, %v2347
      %v2877 = vsel %vm1735, %v2845, %v2349
      %v2879 = vsel %vm1735, %v2847, %v2351
      %v2881 = vsel %vm1735, %v2849, %v2353
      %v2883 = vsel %vm1735, %v2851, %v2355
      %v2885 = vsel %vm1735, %v2853, %v2357
      %v2887 = vsel %vm1735, %v2855, %v2359
      %v2889 = vsel %vm1735, %v2857, %v2361
      %v2891 = vsel %vm1735, %v2859, %v2363
      %v2893 = vsel %vm1735, %v2861, %v2365
      %v2895 = vsel %vm1768, %v2863, %v2527
      %v2897 = vsel %vm1768, %v2865, %v2529
      %v2899 = vsel %vm1768, %v2867, %v2531
      %v2901 = vsel %vm1768, %v2869, %v2533
      %v2903 = vsel %vm1768, %v2871, %v2535
      %v2905 = vsel %vm1768, %v2873, %v2537
      %v2907 = vsel %vm1768, %v2875, %v2539
      %v2909 = vsel %vm1768, %v2877, %v2541
      %v2911 = vsel %vm1768, %v2879, %v2543
      %v2913 = vsel %vm1768, %v2881, %v2545
      %v2915 = vsel %vm1768, %v2883, %v2547
      %v2917 = vsel %vm1768, %v2885, %v2549
      %v2919 = vsel %vm1768, %v2887, %v2551
      %v2921 = vsel %vm1768, %v2889, %v2553
      %v2923 = vsel %vm1768, %v2891, %v2555
      %v2925 = vsel %vm1768, %v2893, %v2557
      %v2927 = vsel %vm1801, %v2895, %v2562
      %v2929 = vsel %vm1801, %v2897, %v2564
      %v2931 = vsel %vm1801, %v2899, %v2566
      %v2933 = vsel %vm1801, %v2901, %v2568
      %v2935 = vsel %vm1801, %v2903, %v2570
      %v2937 = vsel %vm1801, %v2905, %v2572
      %v2939 = vsel %vm1801, %v2907, %v2574
      %v2941 = vsel %vm1801, %v2909, %v2576
      %v2943 = vsel %vm1801, %v2911, %v2578
      %v2945 = vsel %vm1801, %v2913, %v2580
      %v2947 = vsel %vm1801, %v2915, %v2582
      %v2949 = vsel %vm1801, %v2917, %v2584
      %v2951 = vsel %vm1801, %v2919, %v2586
      %v2953 = vsel %vm1801, %v2921, %v2588
      %v2955 = vsel %vm1801, %v2923, %v2590
      %v2957 = vsel %vm1801, %v2925, %v2592
      %v2959 = vsel %vm1834, %v2927, %v2597
      %v2961 = vsel %vm1834, %v2929, %v2599
      %v2963 = vsel %vm1834, %v2931, %v2601
      %v2965 = vsel %vm1834, %v2933, %v2603
      %v2967 = vsel %vm1834, %v2935, %v2605
      %v2969 = vsel %vm1834, %v2937, %v2607
      %v2971 = vsel %vm1834, %v2939, %v2609
      %v2973 = vsel %vm1834, %v2941, %v2611
      %v2975 = vsel %vm1834, %v2943, %v2613
      %v2977 = vsel %vm1834, %v2945, %v2615
      %v2979 = vsel %vm1834, %v2947, %v2617
      %v2981 = vsel %vm1834, %v2949, %v2619
      %v2983 = vsel %vm1834, %v2951, %v2621
      %v2985 = vsel %vm1834, %v2953, %v2623
      %v2987 = vsel %vm1834, %v2955, %v2625
      %v2989 = vsel %vm1834, %v2957, %v2627
      %v2991 = vsel %vm1867, %v2959, %v2639
      %v2993 = vsel %vm1867, %v2961, %v2641
      %v2995 = vsel %vm1867, %v2963, %v2643
      %v2997 = vsel %vm1867, %v2965, %v2645
      %v2999 = vsel %vm1867, %v2967, %v2647
      %v3001 = vsel %vm1867, %v2969, %v2649
      %v3003 = vsel %vm1867, %v2971, %v2651
      %v3005 = vsel %vm1867, %v2973, %v2653
      %v3007 = vsel %vm1867, %v2975, %v2655
      %v3009 = vsel %vm1867, %v2977, %v2657
      %v3011 = vsel %vm1867, %v2979, %v2659
      %v3013 = vsel %vm1867, %v2981, %v2661
      %v3015 = vsel %vm1867, %v2983, %v2663
      %v3017 = vsel %vm1867, %v2985, %v2665
      %v3019 = vsel %vm1867, %v2987, %v2667
      %v3021 = vsel %vm1867, %v2989, %v2669
      %v3023 = vsel %vm1900, %v2991, %v2674
      %v3025 = vsel %vm1900, %v2993, %v2676
      %v3027 = vsel %vm1900, %v2995, %v2678
      %v3029 = vsel %vm1900, %v2997, %v2680
      %v3031 = vsel %vm1900, %v2999, %v2682
      %v3033 = vsel %vm1900, %v3001, %v2684
      %v3035 = vsel %vm1900, %v3003, %v2686
      %v3037 = vsel %vm1900, %v3005, %v2688
      %v3039 = vsel %vm1900, %v3007, %v2690
      %v3041 = vsel %vm1900, %v3009, %v2692
      %v3043 = vsel %vm1900, %v3011, %v2694
      %v3045 = vsel %vm1900, %v3013, %v2696
      %v3047 = vsel %vm1900, %v3015, %v2698
      %v3049 = vsel %vm1900, %v3017, %v2700
      %v3051 = vsel %vm1900, %v3019, %v2702
      %v3053 = vsel %vm1900, %v3021, %v2704
      %v3055 = vsel %vm1933, %v3023, %v2709
      %v3057 = vsel %vm1933, %v3025, %v2711
      %v3059 = vsel %vm1933, %v3027, %v2713
      %v3061 = vsel %vm1933, %v3029, %v2715
      %v3063 = vsel %vm1933, %v3031, %v2717
      %v3065 = vsel %vm1933, %v3033, %v2719
      %v3067 = vsel %vm1933, %v3035, %v2721
      %v3069 = vsel %vm1933, %v3037, %v2723
      %v3071 = vsel %vm1933, %v3039, %v2725
      %v3073 = vsel %vm1933, %v3041, %v2727
      %v3075 = vsel %vm1933, %v3043, %v2729
      %v3077 = vsel %vm1933, %v3045, %v2731
      %v3079 = vsel %vm1933, %v3047, %v2733
      %v3081 = vsel %vm1933, %v3049, %v2735
      %v3083 = vsel %vm1933, %v3051, %v2737
      %v3085 = vsel %vm1933, %v3053, %v2739
      %v3087 = vsel %vm1966, %v3055, %v2751
      %v3089 = vsel %vm1966, %v3057, %v2753
      %v3091 = vsel %vm1966, %v3059, %v2755
      %v3093 = vsel %vm1966, %v3061, %v2757
      %v3095 = vsel %vm1966, %v3063, %v2759
      %v3097 = vsel %vm1966, %v3065, %v2761
      %v3099 = vsel %vm1966, %v3067, %v2763
      %v3101 = vsel %vm1966, %v3069, %v2765
      %v3103 = vsel %vm1966, %v3071, %v2767
      %v3105 = vsel %vm1966, %v3073, %v2769
      %v3107 = vsel %vm1966, %v3075, %v2771
      %v3109 = vsel %vm1966, %v3077, %v2773
      %v3111 = vsel %vm1966, %v3079, %v2775
      %v3113 = vsel %vm1966, %v3081, %v2777
      %v3115 = vsel %vm1966, %v3083, %v2779
      %v3117 = vsel %vm1966, %v3085, %v2781
      %3134 = vrot.lane.b32.xlu0 %v3087, 64
      %v3135 = vpop.permute.xlu0 %3134
      %3136 = vrot.lane.b32.xlu0 %v3089, 64
      %v3137 = vpop.permute.xlu0 %3136
      %3138 = vrot.lane.b32.xlu0 %v3091, 64
      %v3139 = vpop.permute.xlu0 %3138
      %3140 = vrot.lane.b32.xlu0 %v3093, 64
      %v3141 = vpop.permute.xlu0 %3140
      %3142 = vrot.lane.b32.xlu0 %v3095, 64
      %v3143 = vpop.permute.xlu0 %3142
      %3144 = vrot.lane.b32.xlu0 %v3097, 64
      %v3145 = vpop.permute.xlu0 %3144
      %3146 = vrot.lane.b32.xlu0 %v3099, 64
      %v3147 = vpop.permute.xlu0 %3146
      %3148 = vrot.lane.b32.xlu0 %v3101, 64
      %v3149 = vpop.permute.xlu0 %3148
      %3150 = vrot.lane.b32.xlu0 %v3103, 64
      %v3151 = vpop.permute.xlu0 %3150
      %3152 = vrot.lane.b32.xlu0 %v3105, 64
      %v3153 = vpop.permute.xlu0 %3152
      %3154 = vrot.lane.b32.xlu0 %v3107, 64
      %v3155 = vpop.permute.xlu0 %3154
      %3156 = vrot.lane.b32.xlu0 %v3109, 64
      %v3157 = vpop.permute.xlu0 %3156
      %3158 = vrot.lane.b32.xlu0 %v3111, 64
      %v3159 = vpop.permute.xlu0 %3158
      %3160 = vrot.lane.b32.xlu0 %v3113, 64
      %v3161 = vpop.permute.xlu0 %3160
      %3162 = vrot.lane.b32.xlu0 %v3115, 64
      %v3163 = vpop.permute.xlu0 %3162
      %3164 = vrot.lane.b32.xlu0 %v3117, 64
      %v3165 = vpop.permute.xlu0 %3164
      %vm3166 = vcmask 523264
      %v3168 = vsel %vm3166, %v2133, %v3135
      %v3170 = vsel %vm3166, %v2135, %v3137
      %v3172 = vsel %vm3166, %v2137, %v3139
      %v3174 = vsel %vm3166, %v2139, %v3141
      %v3176 = vsel %vm3166, %v2141, %v3143
      %v3178 = vsel %vm3166, %v2143, %v3145
      %v3180 = vsel %vm3166, %v2145, %v3147
      %v3182 = vsel %vm3166, %v2147, %v3149
      %v3184 = vsel %vm3166, %v2149, %v3151
      %v3186 = vsel %vm3166, %v2151, %v3153
      %v3188 = vsel %vm3166, %v2153, %v3155
      %v3190 = vsel %vm3166, %v2155, %v3157
      %v3192 = vsel %vm3166, %v2157, %v3159
      %v3194 = vsel %vm3166, %v2159, %v3161
      %v3196 = vsel %vm3166, %v2161, %v3163
      %v3198 = vsel %vm3166, %v2163, %v3165
      %3199 = vrot.lane.b32.xlu0 %v777, 4
      %v3200 = vpop.permute.xlu0 %3199
      %3201 = vrot.lane.b32.xlu0 %v784, 4
      %v3202 = vpop.permute.xlu0 %3201
      %3203 = vrot.lane.b32.xlu0 %v791, 4
      %v3204 = vpop.permute.xlu0 %3203
      %3205 = vrot.lane.b32.xlu0 %v798, 4
      %v3206 = vpop.permute.xlu0 %3205
      %3207 = vrot.lane.b32.xlu0 %v805, 4
      %v3208 = vpop.permute.xlu0 %3207
      %3209 = vrot.lane.b32.xlu0 %v812, 4
      %v3210 = vpop.permute.xlu0 %3209
      %3211 = vrot.lane.b32.xlu0 %v819, 4
      %v3212 = vpop.permute.xlu0 %3211
      %3213 = vrot.lane.b32.xlu0 %v826, 4
      %v3214 = vpop.permute.xlu0 %3213
      %3215 = vrot.lane.b32.xlu0 %v833, 4
      %v3216 = vpop.permute.xlu0 %3215
      %3217 = vrot.lane.b32.xlu0 %v840, 4
      %v3218 = vpop.permute.xlu0 %3217
      %3219 = vrot.lane.b32.xlu0 %v847, 4
      %v3220 = vpop.permute.xlu0 %3219
      %3221 = vrot.lane.b32.xlu0 %v854, 4
      %v3222 = vpop.permute.xlu0 %3221
      %3223 = vrot.lane.b32.xlu0 %v861, 4
      %v3224 = vpop.permute.xlu0 %3223
      %3225 = vrot.lane.b32.xlu0 %v868, 4
      %v3226 = vpop.permute.xlu0 %3225
      %3227 = vrot.lane.b32.xlu0 %v875, 4
      %v3228 = vpop.permute.xlu0 %3227
      %3229 = vrot.lane.b32.xlu0 %v882, 4
      %v3230 = vpop.permute.xlu0 %3229
      %v3247 = vunpack.c.l.b16 %v430
      %v3248 = vunpack.c.l.b16 %v432
      %v3249 = vunpack.c.l.b16 %v434
      %v3250 = vunpack.c.l.b16 %v436
      %v3251 = vunpack.c.l.b16 %v438
      %v3252 = vunpack.c.l.b16 %v440
      %v3253 = vunpack.c.l.b16 %v442
      %v3254 = vunpack.c.l.b16 %v444
      %v3255 = vunpack.c.l.b16 %v446
      %v3256 = vunpack.c.l.b16 %v448
      %v3257 = vunpack.c.l.b16 %v450
      %v3258 = vunpack.c.l.b16 %v452
      %v3259 = vunpack.c.l.b16 %v454
      %v3260 = vunpack.c.l.b16 %v456
      %v3261 = vunpack.c.l.b16 %v458
      %v3262 = vunpack.c.l.b16 %v460
      %v3263 = vpack.c.b16 %v3247, %v627
      %v3264 = vpack.c.b16 %v3248, %v628
      %v3265 = vpack.c.b16 %v3249, %v629
      %v3266 = vpack.c.b16 %v3250, %v630
      %v3267 = vpack.c.b16 %v3251, %v631
      %v3268 = vpack.c.b16 %v3252, %v632
      %v3269 = vpack.c.b16 %v3253, %v633
      %v3270 = vpack.c.b16 %v3254, %v634
      %v3271 = vpack.c.b16 %v3255, %v635
      %v3272 = vpack.c.b16 %v3256, %v636
      %v3273 = vpack.c.b16 %v3257, %v637
      %v3274 = vpack.c.b16 %v3258, %v638
      %v3275 = vpack.c.b16 %v3259, %v639
      %v3276 = vpack.c.b16 %v3260, %v640
      %v3277 = vpack.c.b16 %v3261, %v641
      %v3278 = vpack.c.b16 %v3262, %v642
      %v3280 = vshrl.u32 %v3263, 16
      %v3282 = vshll.u32 %v3263, 16
      %v3284 = vrot.slane %v3282, 1
      %v3285 = vor.u32 %v3280, %v3284
      %v3287 = vshrl.u32 %v3264, 16
      %v3289 = vshll.u32 %v3264, 16
      %v3291 = vrot.slane %v3289, 1
      %v3292 = vor.u32 %v3287, %v3291
      %v3294 = vshrl.u32 %v3265, 16
      %v3296 = vshll.u32 %v3265, 16
      %v3298 = vrot.slane %v3296, 1
      %v3299 = vor.u32 %v3294, %v3298
      %v3301 = vshrl.u32 %v3266, 16
      %v3303 = vshll.u32 %v3266, 16
      %v3305 = vrot.slane %v3303, 1
      %v3306 = vor.u32 %v3301, %v3305
      %v3308 = vshrl.u32 %v3267, 16
      %v3310 = vshll.u32 %v3267, 16
      %v3312 = vrot.slane %v3310, 1
      %v3313 = vor.u32 %v3308, %v3312
      %v3315 = vshrl.u32 %v3268, 16
      %v3317 = vshll.u32 %v3268, 16
      %v3319 = vrot.slane %v3317, 1
      %v3320 = vor.u32 %v3315, %v3319
      %v3322 = vshrl.u32 %v3269, 16
      %v3324 = vshll.u32 %v3269, 16
      %v3326 = vrot.slane %v3324, 1
      %v3327 = vor.u32 %v3322, %v3326
      %v3329 = vshrl.u32 %v3270, 16
      %v3331 = vshll.u32 %v3270, 16
      %v3333 = vrot.slane %v3331, 1
      %v3334 = vor.u32 %v3329, %v3333
      %v3336 = vshrl.u32 %v3271, 16
      %v3338 = vshll.u32 %v3271, 16
      %v3340 = vrot.slane %v3338, 1
      %v3341 = vor.u32 %v3336, %v3340
      %v3343 = vshrl.u32 %v3272, 16
      %v3345 = vshll.u32 %v3272, 16
      %v3347 = vrot.slane %v3345, 1
      %v3348 = vor.u32 %v3343, %v3347
      %v3350 = vshrl.u32 %v3273, 16
      %v3352 = vshll.u32 %v3273, 16
      %v3354 = vrot.slane %v3352, 1
      %v3355 = vor.u32 %v3350, %v3354
      %v3357 = vshrl.u32 %v3274, 16
      %v3359 = vshll.u32 %v3274, 16
      %v3361 = vrot.slane %v3359, 1
      %v3362 = vor.u32 %v3357, %v3361
      %v3364 = vshrl.u32 %v3275, 16
      %v3366 = vshll.u32 %v3275, 16
      %v3368 = vrot.slane %v3366, 1
      %v3369 = vor.u32 %v3364, %v3368
      %v3371 = vshrl.u32 %v3276, 16
      %v3373 = vshll.u32 %v3276, 16
      %v3375 = vrot.slane %v3373, 1
      %v3376 = vor.u32 %v3371, %v3375
      %v3378 = vshrl.u32 %v3277, 16
      %v3380 = vshll.u32 %v3277, 16
      %v3382 = vrot.slane %v3380, 1
      %v3383 = vor.u32 %v3378, %v3382
      %v3385 = vshrl.u32 %v3278, 16
      %v3387 = vshll.u32 %v3278, 16
      %v3389 = vrot.slane %v3387, 1
      %v3390 = vor.u32 %v3385, %v3389
      %3391 = vrot.lane.b32.xlu0 %v3285, 8
      %v3392 = vpop.permute.xlu0 %3391
      %3393 = vrot.lane.b32.xlu0 %v3292, 8
      %v3394 = vpop.permute.xlu0 %3393
      %3395 = vrot.lane.b32.xlu0 %v3299, 8
      %v3396 = vpop.permute.xlu0 %3395
      %3397 = vrot.lane.b32.xlu0 %v3306, 8
      %v3398 = vpop.permute.xlu0 %3397
      %3399 = vrot.lane.b32.xlu0 %v3313, 8
      %v3400 = vpop.permute.xlu0 %3399
      %3401 = vrot.lane.b32.xlu0 %v3320, 8
      %v3402 = vpop.permute.xlu0 %3401
      %3403 = vrot.lane.b32.xlu0 %v3327, 8
      %v3404 = vpop.permute.xlu0 %3403
      %3405 = vrot.lane.b32.xlu0 %v3334, 8
      %v3406 = vpop.permute.xlu0 %3405
      %3407 = vrot.lane.b32.xlu0 %v3341, 8
      %v3408 = vpop.permute.xlu0 %3407
      %3409 = vrot.lane.b32.xlu0 %v3348, 8
      %v3410 = vpop.permute.xlu0 %3409
      %3411 = vrot.lane.b32.xlu0 %v3355, 8
      %v3412 = vpop.permute.xlu0 %3411
      %3413 = vrot.lane.b32.xlu0 %v3362, 8
      %v3414 = vpop.permute.xlu0 %3413
      %3415 = vrot.lane.b32.xlu0 %v3369, 8
      %v3416 = vpop.permute.xlu0 %3415
      %3417 = vrot.lane.b32.xlu0 %v3376, 8
      %v3418 = vpop.permute.xlu0 %3417
      %3419 = vrot.lane.b32.xlu0 %v3383, 8
      %v3420 = vpop.permute.xlu0 %3419
      %3421 = vrot.lane.b32.xlu0 %v3390, 8
      %v3422 = vpop.permute.xlu0 %3421
      %3423 = vrot.lane.b32.xlu0 %v644, 12
      %v3424 = vpop.permute.xlu0 %3423
      %3425 = vrot.lane.b32.xlu0 %v645, 12
      %v3426 = vpop.permute.xlu0 %3425
      %3427 = vrot.lane.b32.xlu0 %v646, 12
      %v3428 = vpop.permute.xlu0 %3427
      %3429 = vrot.lane.b32.xlu0 %v647, 12
      %v3430 = vpop.permute.xlu0 %3429
      %3431 = vrot.lane.b32.xlu0 %v648, 12
      %v3432 = vpop.permute.xlu0 %3431
      %3433 = vrot.lane.b32.xlu0 %v649, 12
      %v3434 = vpop.permute.xlu0 %3433
      %3435 = vrot.lane.b32.xlu0 %v650, 12
      %v3436 = vpop.permute.xlu0 %3435
      %3437 = vrot.lane.b32.xlu0 %v651, 12
      %v3438 = vpop.permute.xlu0 %3437
      %3439 = vrot.lane.b32.xlu0 %v652, 12
      %v3440 = vpop.permute.xlu0 %3439
      %3441 = vrot.lane.b32.xlu0 %v653, 12
      %v3442 = vpop.permute.xlu0 %3441
      %3443 = vrot.lane.b32.xlu0 %v654, 12
      %v3444 = vpop.permute.xlu0 %3443
      %3445 = vrot.lane.b32.xlu0 %v655, 12
      %v3446 = vpop.permute.xlu0 %3445
      %3447 = vrot.lane.b32.xlu0 %v656, 12
      %v3448 = vpop.permute.xlu0 %3447
      %3449 = vrot.lane.b32.xlu0 %v657, 12
      %v3450 = vpop.permute.xlu0 %3449
      %3451 = vrot.lane.b32.xlu0 %v658, 12
      %v3452 = vpop.permute.xlu0 %3451
      %3453 = vrot.lane.b32.xlu0 %v967, 12
      %v3454 = vpop.permute.xlu0 %3453
      %3455 = vrot.lane.b32.xlu0 %v784, 16
      %v3456 = vpop.permute.xlu0 %3455
      %3457 = vrot.lane.b32.xlu0 %v791, 16
      %v3458 = vpop.permute.xlu0 %3457
      %3459 = vrot.lane.b32.xlu0 %v798, 16
      %v3460 = vpop.permute.xlu0 %3459
      %3461 = vrot.lane.b32.xlu0 %v805, 16
      %v3462 = vpop.permute.xlu0 %3461
      %3463 = vrot.lane.b32.xlu0 %v812, 16
      %v3464 = vpop.permute.xlu0 %3463
      %3465 = vrot.lane.b32.xlu0 %v819, 16
      %v3466 = vpop.permute.xlu0 %3465
      %3467 = vrot.lane.b32.xlu0 %v826, 16
      %v3468 = vpop.permute.xlu0 %3467
      %3469 = vrot.lane.b32.xlu0 %v833, 16
      %v3470 = vpop.permute.xlu0 %3469
      %3471 = vrot.lane.b32.xlu0 %v840, 16
      %v3472 = vpop.permute.xlu0 %3471
      %3473 = vrot.lane.b32.xlu0 %v847, 16
      %v3474 = vpop.permute.xlu0 %3473
      %3475 = vrot.lane.b32.xlu0 %v854, 16
      %v3476 = vpop.permute.xlu0 %3475
      %3477 = vrot.lane.b32.xlu0 %v861, 16
      %v3478 = vpop.permute.xlu0 %3477
      %3479 = vrot.lane.b32.xlu0 %v868, 16
      %v3480 = vpop.permute.xlu0 %3479
      %3481 = vrot.lane.b32.xlu0 %v875, 16
      %v3482 = vpop.permute.xlu0 %3481
      %3483 = vrot.lane.b32.xlu0 %v882, 16
      %v3484 = vpop.permute.xlu0 %3483
      %3485 = vrot.lane.b32.xlu0 %v1009, 16
      %v3486 = vpop.permute.xlu0 %3485
      %v3488 = vunpack.c.l.b16 %v462
      %v3489 = vpack.c.b16 %v3488, %v966
      %v3491 = vshrl.u32 %v3489, 16
      %v3493 = vshll.u32 %v3489, 16
      %v3495 = vrot.slane %v3493, 1
      %v3496 = vor.u32 %v3491, %v3495
      %3497 = vrot.lane.b32.xlu0 %v3292, 20
      %v3498 = vpop.permute.xlu0 %3497
      %3499 = vrot.lane.b32.xlu0 %v3299, 20
      %v3500 = vpop.permute.xlu0 %3499
      %3501 = vrot.lane.b32.xlu0 %v3306, 20
      %v3502 = vpop.permute.xlu0 %3501
      %3503 = vrot.lane.b32.xlu0 %v3313, 20
      %v3504 = vpop.permute.xlu0 %3503
      %3505 = vrot.lane.b32.xlu0 %v3320, 20
      %v3506 = vpop.permute.xlu0 %3505
      %3507 = vrot.lane.b32.xlu0 %v3327, 20
      %v3508 = vpop.permute.xlu0 %3507
      %3509 = vrot.lane.b32.xlu0 %v3334, 20
      %v3510 = vpop.permute.xlu0 %3509
      %3511 = vrot.lane.b32.xlu0 %v3341, 20
      %v3512 = vpop.permute.xlu0 %3511
      %3513 = vrot.lane.b32.xlu0 %v3348, 20
      %v3514 = vpop.permute.xlu0 %3513
      %3515 = vrot.lane.b32.xlu0 %v3355, 20
      %v3516 = vpop.permute.xlu0 %3515
      %3517 = vrot.lane.b32.xlu0 %v3362, 20
      %v3518 = vpop.permute.xlu0 %3517
      %3519 = vrot.lane.b32.xlu0 %v3369, 20
      %v3520 = vpop.permute.xlu0 %3519
      %3521 = vrot.lane.b32.xlu0 %v3376, 20
      %v3522 = vpop.permute.xlu0 %3521
      %3523 = vrot.lane.b32.xlu0 %v3383, 20
      %v3524 = vpop.permute.xlu0 %3523
      %3525 = vrot.lane.b32.xlu0 %v3390, 20
      %v3526 = vpop.permute.xlu0 %3525
      %3527 = vrot.lane.b32.xlu0 %v3496, 20
      %v3528 = vpop.permute.xlu0 %3527
      %3529 = vrot.lane.b32.xlu0 %v645, 24
      %v3530 = vpop.permute.xlu0 %3529
      %3531 = vrot.lane.b32.xlu0 %v646, 24
      %v3532 = vpop.permute.xlu0 %3531
      %3533 = vrot.lane.b32.xlu0 %v647, 24
      %v3534 = vpop.permute.xlu0 %3533
      %3535 = vrot.lane.b32.xlu0 %v648, 24
      %v3536 = vpop.permute.xlu0 %3535
      %3537 = vrot.lane.b32.xlu0 %v649, 24
      %v3538 = vpop.permute.xlu0 %3537
      %3539 = vrot.lane.b32.xlu0 %v650, 24
      %v3540 = vpop.permute.xlu0 %3539
      %3541 = vrot.lane.b32.xlu0 %v651, 24
      %v3542 = vpop.permute.xlu0 %3541
      %3543 = vrot.lane.b32.xlu0 %v652, 24
      %v3544 = vpop.permute.xlu0 %3543
      %3545 = vrot.lane.b32.xlu0 %v653, 24
      %v3546 = vpop.permute.xlu0 %3545
      %3547 = vrot.lane.b32.xlu0 %v654, 24
      %v3548 = vpop.permute.xlu0 %3547
      %3549 = vrot.lane.b32.xlu0 %v655, 24
      %v3550 = vpop.permute.xlu0 %3549
      %3551 = vrot.lane.b32.xlu0 %v656, 24
      %v3552 = vpop.permute.xlu0 %3551
      %3553 = vrot.lane.b32.xlu0 %v657, 24
      %v3554 = vpop.permute.xlu0 %3553
      %3555 = vrot.lane.b32.xlu0 %v658, 24
      %v3556 = vpop.permute.xlu0 %3555
      %3557 = vrot.lane.b32.xlu0 %v967, 24
      %v3558 = vpop.permute.xlu0 %3557
      %3559 = vrot.lane.b32.xlu0 %v1079, 24
      %v3560 = vpop.permute.xlu0 %3559
      %3561 = vrot.lane.b32.xlu0 %v791, 28
      %v3562 = vpop.permute.xlu0 %3561
      %3563 = vrot.lane.b32.xlu0 %v798, 28
      %v3564 = vpop.permute.xlu0 %3563
      %3565 = vrot.lane.b32.xlu0 %v805, 28
      %v3566 = vpop.permute.xlu0 %3565
      %3567 = vrot.lane.b32.xlu0 %v812, 28
      %v3568 = vpop.permute.xlu0 %3567
      %3569 = vrot.lane.b32.xlu0 %v819, 28
      %v3570 = vpop.permute.xlu0 %3569
      %3571 = vrot.lane.b32.xlu0 %v826, 28
      %v3572 = vpop.permute.xlu0 %3571
      %3573 = vrot.lane.b32.xlu0 %v833, 28
      %v3574 = vpop.permute.xlu0 %3573
      %3575 = vrot.lane.b32.xlu0 %v840, 28
      %v3576 = vpop.permute.xlu0 %3575
      %3577 = vrot.lane.b32.xlu0 %v847, 28
      %v3578 = vpop.permute.xlu0 %3577
      %3579 = vrot.lane.b32.xlu0 %v854, 28
      %v3580 = vpop.permute.xlu0 %3579
      %3581 = vrot.lane.b32.xlu0 %v861, 28
      %v3582 = vpop.permute.xlu0 %3581
      %3583 = vrot.lane.b32.xlu0 %v868, 28
      %v3584 = vpop.permute.xlu0 %3583
      %3585 = vrot.lane.b32.xlu0 %v875, 28
      %v3586 = vpop.permute.xlu0 %3585
      %3587 = vrot.lane.b32.xlu0 %v882, 28
      %v3588 = vpop.permute.xlu0 %3587
      %3589 = vrot.lane.b32.xlu0 %v1009, 28
      %v3590 = vpop.permute.xlu0 %3589
      %3591 = vrot.lane.b32.xlu0 %v1121, 28
      %v3592 = vpop.permute.xlu0 %3591
      %v3594 = vunpack.c.l.b16 %v464
      %v3595 = vpack.c.b16 %v3594, %v1078
      %v3597 = vshrl.u32 %v3595, 16
      %v3599 = vshll.u32 %v3595, 16
      %v3601 = vrot.slane %v3599, 1
      %v3602 = vor.u32 %v3597, %v3601
      %3603 = vrot.lane.b32.xlu0 %v3299, 32
      %v3604 = vpop.permute.xlu0 %3603
      %3605 = vrot.lane.b32.xlu0 %v3306, 32
      %v3606 = vpop.permute.xlu0 %3605
      %3607 = vrot.lane.b32.xlu0 %v3313, 32
      %v3608 = vpop.permute.xlu0 %3607
      %3609 = vrot.lane.b32.xlu0 %v3320, 32
      %v3610 = vpop.permute.xlu0 %3609
      %3611 = vrot.lane.b32.xlu0 %v3327, 32
      %v3612 = vpop.permute.xlu0 %3611
      %3613 = vrot.lane.b32.xlu0 %v3334, 32
      %v3614 = vpop.permute.xlu0 %3613
      %3615 = vrot.lane.b32.xlu0 %v3341, 32
      %v3616 = vpop.permute.xlu0 %3615
      %3617 = vrot.lane.b32.xlu0 %v3348, 32
      %v3618 = vpop.permute.xlu0 %3617
      %3619 = vrot.lane.b32.xlu0 %v3355, 32
      %v3620 = vpop.permute.xlu0 %3619
      %3621 = vrot.lane.b32.xlu0 %v3362, 32
      %v3622 = vpop.permute.xlu0 %3621
      %3623 = vrot.lane.b32.xlu0 %v3369, 32
      %v3624 = vpop.permute.xlu0 %3623
      %3625 = vrot.lane.b32.xlu0 %v3376, 32
      %v3626 = vpop.permute.xlu0 %3625
      %3627 = vrot.lane.b32.xlu0 %v3383, 32
      %v3628 = vpop.permute.xlu0 %3627
      %3629 = vrot.lane.b32.xlu0 %v3390, 32
      %v3630 = vpop.permute.xlu0 %3629
      %3631 = vrot.lane.b32.xlu0 %v3496, 32
      %v3632 = vpop.permute.xlu0 %3631
      %3633 = vrot.lane.b32.xlu0 %v3602, 32
      %v3634 = vpop.permute.xlu0 %3633
      %3635 = vrot.lane.b32.xlu0 %v1266, 36
      %v3636 = vpop.permute.xlu0 %3635
      %3637 = vrot.lane.b32.xlu0 %v1267, 36
      %v3638 = vpop.permute.xlu0 %3637
      %3639 = vrot.lane.b32.xlu0 %v1268, 36
      %v3640 = vpop.permute.xlu0 %3639
      %3641 = vrot.lane.b32.xlu0 %v1269, 36
      %v3642 = vpop.permute.xlu0 %3641
      %3643 = vrot.lane.b32.xlu0 %v1270, 36
      %v3644 = vpop.permute.xlu0 %3643
      %3645 = vrot.lane.b32.xlu0 %v1271, 36
      %v3646 = vpop.permute.xlu0 %3645
      %3647 = vrot.lane.b32.xlu0 %v1272, 36
      %v3648 = vpop.permute.xlu0 %3647
      %3649 = vrot.lane.b32.xlu0 %v1273, 36
      %v3650 = vpop.permute.xlu0 %3649
      %3651 = vrot.lane.b32.xlu0 %v1274, 36
      %v3652 = vpop.permute.xlu0 %3651
      %3653 = vrot.lane.b32.xlu0 %v1275, 36
      %v3654 = vpop.permute.xlu0 %3653
      %3655 = vrot.lane.b32.xlu0 %v1276, 36
      %v3656 = vpop.permute.xlu0 %3655
      %3657 = vrot.lane.b32.xlu0 %v1277, 36
      %v3658 = vpop.permute.xlu0 %3657
      %3659 = vrot.lane.b32.xlu0 %v1278, 36
      %v3660 = vpop.permute.xlu0 %3659
      %3661 = vrot.lane.b32.xlu0 %v1279, 36
      %v3662 = vpop.permute.xlu0 %3661
      %3663 = vrot.lane.b32.xlu0 %v1280, 36
      %v3664 = vpop.permute.xlu0 %3663
      %3665 = vrot.lane.b32.xlu0 %v1281, 36
      %v3666 = vpop.permute.xlu0 %3665
      %3667 = vrot.lane.b32.xlu0 %v1368, 40
      %v3668 = vpop.permute.xlu0 %3667
      %3669 = vrot.lane.b32.xlu0 %v1375, 40
      %v3670 = vpop.permute.xlu0 %3669
      %3671 = vrot.lane.b32.xlu0 %v1382, 40
      %v3672 = vpop.permute.xlu0 %3671
      %3673 = vrot.lane.b32.xlu0 %v1389, 40
      %v3674 = vpop.permute.xlu0 %3673
      %3675 = vrot.lane.b32.xlu0 %v1396, 40
      %v3676 = vpop.permute.xlu0 %3675
      %3677 = vrot.lane.b32.xlu0 %v1403, 40
      %v3678 = vpop.permute.xlu0 %3677
      %3679 = vrot.lane.b32.xlu0 %v1410, 40
      %v3680 = vpop.permute.xlu0 %3679
      %3681 = vrot.lane.b32.xlu0 %v1417, 40
      %v3682 = vpop.permute.xlu0 %3681
      %3683 = vrot.lane.b32.xlu0 %v1424, 40
      %v3684 = vpop.permute.xlu0 %3683
      %3685 = vrot.lane.b32.xlu0 %v1431, 40
      %v3686 = vpop.permute.xlu0 %3685
      %3687 = vrot.lane.b32.xlu0 %v1438, 40
      %v3688 = vpop.permute.xlu0 %3687
      %3689 = vrot.lane.b32.xlu0 %v1445, 40
      %v3690 = vpop.permute.xlu0 %3689
      %3691 = vrot.lane.b32.xlu0 %v1452, 40
      %v3692 = vpop.permute.xlu0 %3691
      %3693 = vrot.lane.b32.xlu0 %v1459, 40
      %v3694 = vpop.permute.xlu0 %3693
      %3695 = vrot.lane.b32.xlu0 %v1466, 40
      %v3696 = vpop.permute.xlu0 %3695
      %3697 = vrot.lane.b32.xlu0 %v1473, 40
      %v3698 = vpop.permute.xlu0 %3697
      %v3715 = vunpack.c.l.b16 %v503
      %v3716 = vunpack.c.l.b16 %v505
      %v3717 = vunpack.c.l.b16 %v507
      %v3718 = vunpack.c.l.b16 %v509
      %v3719 = vunpack.c.l.b16 %v511
      %v3720 = vunpack.c.l.b16 %v513
      %v3721 = vunpack.c.l.b16 %v515
      %v3722 = vunpack.c.l.b16 %v517
      %v3723 = vunpack.c.l.b16 %v519
      %v3724 = vunpack.c.l.b16 %v521
      %v3725 = vunpack.c.l.b16 %v523
      %v3726 = vunpack.c.l.b16 %v525
      %v3727 = vunpack.c.l.b16 %v527
      %v3728 = vunpack.c.l.b16 %v529
      %v3729 = vunpack.c.l.b16 %v531
      %v3730 = vunpack.c.l.b16 %v533
      %v3731 = vpack.c.b16 %v3715, %v1250
      %v3732 = vpack.c.b16 %v3716, %v1251
      %v3733 = vpack.c.b16 %v3717, %v1252
      %v3734 = vpack.c.b16 %v3718, %v1253
      %v3735 = vpack.c.b16 %v3719, %v1254
      %v3736 = vpack.c.b16 %v3720, %v1255
      %v3737 = vpack.c.b16 %v3721, %v1256
      %v3738 = vpack.c.b16 %v3722, %v1257
      %v3739 = vpack.c.b16 %v3723, %v1258
      %v3740 = vpack.c.b16 %v3724, %v1259
      %v3741 = vpack.c.b16 %v3725, %v1260
      %v3742 = vpack.c.b16 %v3726, %v1261
      %v3743 = vpack.c.b16 %v3727, %v1262
      %v3744 = vpack.c.b16 %v3728, %v1263
      %v3745 = vpack.c.b16 %v3729, %v1264
      %v3746 = vpack.c.b16 %v3730, %v1265
      %v3748 = vshrl.u32 %v3731, 16
      %v3750 = vshll.u32 %v3731, 16
      %v3752 = vrot.slane %v3750, 1
      %v3753 = vor.u32 %v3748, %v3752
      %v3755 = vshrl.u32 %v3732, 16
      %v3757 = vshll.u32 %v3732, 16
      %v3759 = vrot.slane %v3757, 1
      %v3760 = vor.u32 %v3755, %v3759
      %v3762 = vshrl.u32 %v3733, 16
      %v3764 = vshll.u32 %v3733, 16
      %v3766 = vrot.slane %v3764, 1
      %v3767 = vor.u32 %v3762, %v3766
      %v3769 = vshrl.u32 %v3734, 16
      %v3771 = vshll.u32 %v3734, 16
      %v3773 = vrot.slane %v3771, 1
      %v3774 = vor.u32 %v3769, %v3773
      %v3776 = vshrl.u32 %v3735, 16
      %v3778 = vshll.u32 %v3735, 16
      %v3780 = vrot.slane %v3778, 1
      %v3781 = vor.u32 %v3776, %v3780
      %v3783 = vshrl.u32 %v3736, 16
      %v3785 = vshll.u32 %v3736, 16
      %v3787 = vrot.slane %v3785, 1
      %v3788 = vor.u32 %v3783, %v3787
      %v3790 = vshrl.u32 %v3737, 16
      %v3792 = vshll.u32 %v3737, 16
      %v3794 = vrot.slane %v3792, 1
      %v3795 = vor.u32 %v3790, %v3794
      %v3797 = vshrl.u32 %v3738, 16
      %v3799 = vshll.u32 %v3738, 16
      %v3801 = vrot.slane %v3799, 1
      %v3802 = vor.u32 %v3797, %v3801
      %v3804 = vshrl.u32 %v3739, 16
      %v3806 = vshll.u32 %v3739, 16
      %v3808 = vrot.slane %v3806, 1
      %v3809 = vor.u32 %v3804, %v3808
      %v3811 = vshrl.u32 %v3740, 16
      %v3813 = vshll.u32 %v3740, 16
      %v3815 = vrot.slane %v3813, 1
      %v3816 = vor.u32 %v3811, %v3815
      %v3818 = vshrl.u32 %v3741, 16
      %v3820 = vshll.u32 %v3741, 16
      %v3822 = vrot.slane %v3820, 1
      %v3823 = vor.u32 %v3818, %v3822
      %v3825 = vshrl.u32 %v3742, 16
      %v3827 = vshll.u32 %v3742, 16
      %v3829 = vrot.slane %v3827, 1
      %v3830 = vor.u32 %v3825, %v3829
      %v3832 = vshrl.u32 %v3743, 16
      %v3834 = vshll.u32 %v3743, 16
      %v3836 = vrot.slane %v3834, 1
      %v3837 = vor.u32 %v3832, %v3836
      %v3839 = vshrl.u32 %v3744, 16
      %v3841 = vshll.u32 %v3744, 16
      %v3843 = vrot.slane %v3841, 1
      %v3844 = vor.u32 %v3839, %v3843
      %v3846 = vshrl.u32 %v3745, 16
      %v3848 = vshll.u32 %v3745, 16
      %v3850 = vrot.slane %v3848, 1
      %v3851 = vor.u32 %v3846, %v3850
      %v3853 = vshrl.u32 %v3746, 16
      %v3855 = vshll.u32 %v3746, 16
      %v3857 = vrot.slane %v3855, 1
      %v3858 = vor.u32 %v3853, %v3857
      %3859 = vrot.lane.b32.xlu0 %v3753, 44
      %v3860 = vpop.permute.xlu0 %3859
      %3861 = vrot.lane.b32.xlu0 %v3760, 44
      %v3862 = vpop.permute.xlu0 %3861
      %3863 = vrot.lane.b32.xlu0 %v3767, 44
      %v3864 = vpop.permute.xlu0 %3863
      %3865 = vrot.lane.b32.xlu0 %v3774, 44
      %v3866 = vpop.permute.xlu0 %3865
      %3867 = vrot.lane.b32.xlu0 %v3781, 44
      %v3868 = vpop.permute.xlu0 %3867
      %3869 = vrot.lane.b32.xlu0 %v3788, 44
      %v3870 = vpop.permute.xlu0 %3869
      %3871 = vrot.lane.b32.xlu0 %v3795, 44
      %v3872 = vpop.permute.xlu0 %3871
      %3873 = vrot.lane.b32.xlu0 %v3802, 44
      %v3874 = vpop.permute.xlu0 %3873
      %3875 = vrot.lane.b32.xlu0 %v3809, 44
      %v3876 = vpop.permute.xlu0 %3875
      %3877 = vrot.lane.b32.xlu0 %v3816, 44
      %v3878 = vpop.permute.xlu0 %3877
      %3879 = vrot.lane.b32.xlu0 %v3823, 44
      %v3880 = vpop.permute.xlu0 %3879
      %3881 = vrot.lane.b32.xlu0 %v3830, 44
      %v3882 = vpop.permute.xlu0 %3881
      %3883 = vrot.lane.b32.xlu0 %v3837, 44
      %v3884 = vpop.permute.xlu0 %3883
      %3885 = vrot.lane.b32.xlu0 %v3844, 44
      %v3886 = vpop.permute.xlu0 %3885
      %3887 = vrot.lane.b32.xlu0 %v3851, 44
      %v3888 = vpop.permute.xlu0 %3887
      %3889 = vrot.lane.b32.xlu0 %v3858, 44
      %v3890 = vpop.permute.xlu0 %3889
      %3891 = vrot.lane.b32.xlu0 %v1267, 48
      %v3892 = vpop.permute.xlu0 %3891
      %3893 = vrot.lane.b32.xlu0 %v1268, 48
      %v3894 = vpop.permute.xlu0 %3893
      %3895 = vrot.lane.b32.xlu0 %v1269, 48
      %v3896 = vpop.permute.xlu0 %3895
      %3897 = vrot.lane.b32.xlu0 %v1270, 48
      %v3898 = vpop.permute.xlu0 %3897
      %3899 = vrot.lane.b32.xlu0 %v1271, 48
      %v3900 = vpop.permute.xlu0 %3899
      %3901 = vrot.lane.b32.xlu0 %v1272, 48
      %v3902 = vpop.permute.xlu0 %3901
      %3903 = vrot.lane.b32.xlu0 %v1273, 48
      %v3904 = vpop.permute.xlu0 %3903
      %3905 = vrot.lane.b32.xlu0 %v1274, 48
      %v3906 = vpop.permute.xlu0 %3905
      %3907 = vrot.lane.b32.xlu0 %v1275, 48
      %v3908 = vpop.permute.xlu0 %3907
      %3909 = vrot.lane.b32.xlu0 %v1276, 48
      %v3910 = vpop.permute.xlu0 %3909
      %3911 = vrot.lane.b32.xlu0 %v1277, 48
      %v3912 = vpop.permute.xlu0 %3911
      %3913 = vrot.lane.b32.xlu0 %v1278, 48
      %v3914 = vpop.permute.xlu0 %3913
      %3915 = vrot.lane.b32.xlu0 %v1279, 48
      %v3916 = vpop.permute.xlu0 %3915
      %3917 = vrot.lane.b32.xlu0 %v1280, 48
      %v3918 = vpop.permute.xlu0 %3917
      %3919 = vrot.lane.b32.xlu0 %v1281, 48
      %v3920 = vpop.permute.xlu0 %3919
      %3921 = vrot.lane.b32.xlu0 %v1543, 48
      %v3922 = vpop.permute.xlu0 %3921
      %3923 = vrot.lane.b32.xlu0 %v1375, 52
      %v3924 = vpop.permute.xlu0 %3923
      %3925 = vrot.lane.b32.xlu0 %v1382, 52
      %v3926 = vpop.permute.xlu0 %3925
      %3927 = vrot.lane.b32.xlu0 %v1389, 52
      %v3928 = vpop.permute.xlu0 %3927
      %3929 = vrot.lane.b32.xlu0 %v1396, 52
      %v3930 = vpop.permute.xlu0 %3929
      %3931 = vrot.lane.b32.xlu0 %v1403, 52
      %v3932 = vpop.permute.xlu0 %3931
      %3933 = vrot.lane.b32.xlu0 %v1410, 52
      %v3934 = vpop.permute.xlu0 %3933
      %3935 = vrot.lane.b32.xlu0 %v1417, 52
      %v3936 = vpop.permute.xlu0 %3935
      %3937 = vrot.lane.b32.xlu0 %v1424, 52
      %v3938 = vpop.permute.xlu0 %3937
      %3939 = vrot.lane.b32.xlu0 %v1431, 52
      %v3940 = vpop.permute.xlu0 %3939
      %3941 = vrot.lane.b32.xlu0 %v1438, 52
      %v3942 = vpop.permute.xlu0 %3941
      %3943 = vrot.lane.b32.xlu0 %v1445, 52
      %v3944 = vpop.permute.xlu0 %3943
      %3945 = vrot.lane.b32.xlu0 %v1452, 52
      %v3946 = vpop.permute.xlu0 %3945
      %3947 = vrot.lane.b32.xlu0 %v1459, 52
      %v3948 = vpop.permute.xlu0 %3947
      %3949 = vrot.lane.b32.xlu0 %v1466, 52
      %v3950 = vpop.permute.xlu0 %3949
      %3951 = vrot.lane.b32.xlu0 %v1473, 52
      %v3952 = vpop.permute.xlu0 %3951
      %3953 = vrot.lane.b32.xlu0 %v1585, 52
      %v3954 = vpop.permute.xlu0 %3953
      %v3956 = vunpack.c.l.b16 %v535
      %v3957 = vpack.c.b16 %v3956, %v1542
      %v3959 = vshrl.u32 %v3957, 16
      %v3961 = vshll.u32 %v3957, 16
      %v3963 = vrot.slane %v3961, 1
      %v3964 = vor.u32 %v3959, %v3963
      %3965 = vrot.lane.b32.xlu0 %v3760, 56
      %v3966 = vpop.permute.xlu0 %3965
      %3967 = vrot.lane.b32.xlu0 %v3767, 56
      %v3968 = vpop.permute.xlu0 %3967
      %3969 = vrot.lane.b32.xlu0 %v3774, 56
      %v3970 = vpop.permute.xlu0 %3969
      %3971 = vrot.lane.b32.xlu0 %v3781, 56
      %v3972 = vpop.permute.xlu0 %3971
      %3973 = vrot.lane.b32.xlu0 %v3788, 56
      %v3974 = vpop.permute.xlu0 %3973
      %3975 = vrot.lane.b32.xlu0 %v3795, 56
      %v3976 = vpop.permute.xlu0 %3975
      %3977 = vrot.lane.b32.xlu0 %v3802, 56
      %v3978 = vpop.permute.xlu0 %3977
      %3979 = vrot.lane.b32.xlu0 %v3809, 56
      %v3980 = vpop.permute.xlu0 %3979
      %3981 = vrot.lane.b32.xlu0 %v3816, 56
      %v3982 = vpop.permute.xlu0 %3981
      %3983 = vrot.lane.b32.xlu0 %v3823, 56
      %v3984 = vpop.permute.xlu0 %3983
      %3985 = vrot.lane.b32.xlu0 %v3830, 56
      %v3986 = vpop.permute.xlu0 %3985
      %3987 = vrot.lane.b32.xlu0 %v3837, 56
      %v3988 = vpop.permute.xlu0 %3987
      %3989 = vrot.lane.b32.xlu0 %v3844, 56
      %v3990 = vpop.permute.xlu0 %3989
      %3991 = vrot.lane.b32.xlu0 %v3851, 56
      %v3992 = vpop.permute.xlu0 %3991
      %3993 = vrot.lane.b32.xlu0 %v3858, 56
      %v3994 = vpop.permute.xlu0 %3993
      %3995 = vrot.lane.b32.xlu0 %v3964, 56
      %v3996 = vpop.permute.xlu0 %3995
      %v3998 = vunpack.c.l.b16 %v536
      %v3999 = vpack.c.b16 %v3998, %v3998
      %4000 = vrot.lane.b32.xlu0 %v1268, 60
      %v4001 = vpop.permute.xlu0 %4000
      %4002 = vrot.lane.b32.xlu0 %v1269, 60
      %v4003 = vpop.permute.xlu0 %4002
      %4004 = vrot.lane.b32.xlu0 %v1270, 60
      %v4005 = vpop.permute.xlu0 %4004
      %4006 = vrot.lane.b32.xlu0 %v1271, 60
      %v4007 = vpop.permute.xlu0 %4006
      %4008 = vrot.lane.b32.xlu0 %v1272, 60
      %v4009 = vpop.permute.xlu0 %4008
      %4010 = vrot.lane.b32.xlu0 %v1273, 60
      %v4011 = vpop.permute.xlu0 %4010
      %4012 = vrot.lane.b32.xlu0 %v1274, 60
      %v4013 = vpop.permute.xlu0 %4012
      %4014 = vrot.lane.b32.xlu0 %v1275, 60
      %v4015 = vpop.permute.xlu0 %4014
      %4016 = vrot.lane.b32.xlu0 %v1276, 60
      %v4017 = vpop.permute.xlu0 %4016
      %4018 = vrot.lane.b32.xlu0 %v1277, 60
      %v4019 = vpop.permute.xlu0 %4018
      %4020 = vrot.lane.b32.xlu0 %v1278, 60
      %v4021 = vpop.permute.xlu0 %4020
      %4022 = vrot.lane.b32.xlu0 %v1279, 60
      %v4023 = vpop.permute.xlu0 %4022
      %4024 = vrot.lane.b32.xlu0 %v1280, 60
      %v4025 = vpop.permute.xlu0 %4024
      %4026 = vrot.lane.b32.xlu0 %v1281, 60
      %v4027 = vpop.permute.xlu0 %4026
      %4028 = vrot.lane.b32.xlu0 %v1543, 60
      %v4029 = vpop.permute.xlu0 %4028
      %4030 = vrot.lane.b32.xlu0 %v3999, 60
      %v4031 = vpop.permute.xlu0 %4030
      %v4034 = vsel %vm1653, %v429, %v3200
      %v4037 = vsel %vm1653, %v431, %v3202
      %v4040 = vsel %vm1653, %v433, %v3204
      %v4043 = vsel %vm1653, %v435, %v3206
      %v4046 = vsel %vm1653, %v437, %v3208
      %v4049 = vsel %vm1653, %v439, %v3210
      %v4052 = vsel %vm1653, %v441, %v3212
      %v4055 = vsel %vm1653, %v443, %v3214
      %v4058 = vsel %vm1653, %v445, %v3216
      %v4061 = vsel %vm1653, %v447, %v3218
      %v4064 = vsel %vm1653, %v449, %v3220
      %v4067 = vsel %vm1653, %v451, %v3222
      %v4070 = vsel %vm1653, %v453, %v3224
      %v4073 = vsel %vm1653, %v455, %v3226
      %v4076 = vsel %vm1653, %v457, %v3228
      %v4079 = vsel %vm1653, %v459, %v3230
      %v4081 = vsel %vm1702, %v4034, %v3392
      %v4083 = vsel %vm1702, %v4037, %v3394
      %v4085 = vsel %vm1702, %v4040, %v3396
      %v4087 = vsel %vm1702, %v4043, %v3398
      %v4089 = vsel %vm1702, %v4046, %v3400
      %v4091 = vsel %vm1702, %v4049, %v3402
      %v4093 = vsel %vm1702, %v4052, %v3404
      %v4095 = vsel %vm1702, %v4055, %v3406
      %v4097 = vsel %vm1702, %v4058, %v3408
      %v4099 = vsel %vm1702, %v4061, %v3410
      %v4101 = vsel %vm1702, %v4064, %v3412
      %v4103 = vsel %vm1702, %v4067, %v3414
      %v4105 = vsel %vm1702, %v4070, %v3416
      %v4107 = vsel %vm1702, %v4073, %v3418
      %v4109 = vsel %vm1702, %v4076, %v3420
      %v4111 = vsel %vm1702, %v4079, %v3422
      %v4113 = vsel %vm1735, %v4081, %v3424
      %v4115 = vsel %vm1735, %v4083, %v3426
      %v4117 = vsel %vm1735, %v4085, %v3428
      %v4119 = vsel %vm1735, %v4087, %v3430
      %v4121 = vsel %vm1735, %v4089, %v3432
      %v4123 = vsel %vm1735, %v4091, %v3434
      %v4125 = vsel %vm1735, %v4093, %v3436
      %v4127 = vsel %vm1735, %v4095, %v3438
      %v4129 = vsel %vm1735, %v4097, %v3440
      %v4131 = vsel %vm1735, %v4099, %v3442
      %v4133 = vsel %vm1735, %v4101, %v3444
      %v4135 = vsel %vm1735, %v4103, %v3446
      %v4137 = vsel %vm1735, %v4105, %v3448
      %v4139 = vsel %vm1735, %v4107, %v3450
      %v4141 = vsel %vm1735, %v4109, %v3452
      %v4143 = vsel %vm1735, %v4111, %v3454
      %v4145 = vsel %vm1768, %v4113, %v3456
      %v4147 = vsel %vm1768, %v4115, %v3458
      %v4149 = vsel %vm1768, %v4117, %v3460
      %v4151 = vsel %vm1768, %v4119, %v3462
      %v4153 = vsel %vm1768, %v4121, %v3464
      %v4155 = vsel %vm1768, %v4123, %v3466
      %v4157 = vsel %vm1768, %v4125, %v3468
      %v4159 = vsel %vm1768, %v4127, %v3470
      %v4161 = vsel %vm1768, %v4129, %v3472
      %v4163 = vsel %vm1768, %v4131, %v3474
      %v4165 = vsel %vm1768, %v4133, %v3476
      %v4167 = vsel %vm1768, %v4135, %v3478
      %v4169 = vsel %vm1768, %v4137, %v3480
      %v4171 = vsel %vm1768, %v4139, %v3482
      %v4173 = vsel %vm1768, %v4141, %v3484
      %v4175 = vsel %vm1768, %v4143, %v3486
      %v4177 = vsel %vm1801, %v4145, %v3498
      %v4179 = vsel %vm1801, %v4147, %v3500
      %v4181 = vsel %vm1801, %v4149, %v3502
      %v4183 = vsel %vm1801, %v4151, %v3504
      %v4185 = vsel %vm1801, %v4153, %v3506
      %v4187 = vsel %vm1801, %v4155, %v3508
      %v4189 = vsel %vm1801, %v4157, %v3510
      %v4191 = vsel %vm1801, %v4159, %v3512
      %v4193 = vsel %vm1801, %v4161, %v3514
      %v4195 = vsel %vm1801, %v4163, %v3516
      %v4197 = vsel %vm1801, %v4165, %v3518
      %v4199 = vsel %vm1801, %v4167, %v3520
      %v4201 = vsel %vm1801, %v4169, %v3522
      %v4203 = vsel %vm1801, %v4171, %v3524
      %v4205 = vsel %vm1801, %v4173, %v3526
      %v4207 = vsel %vm1801, %v4175, %v3528
      %v4209 = vsel %vm1834, %v4177, %v3530
      %v4211 = vsel %vm1834, %v4179, %v3532
      %v4213 = vsel %vm1834, %v4181, %v3534
      %v4215 = vsel %vm1834, %v4183, %v3536
      %v4217 = vsel %vm1834, %v4185, %v3538
      %v4219 = vsel %vm1834, %v4187, %v3540
      %v4221 = vsel %vm1834, %v4189, %v3542
      %v4223 = vsel %vm1834, %v4191, %v3544
      %v4225 = vsel %vm1834, %v4193, %v3546
      %v4227 = vsel %vm1834, %v4195, %v3548
      %v4229 = vsel %vm1834, %v4197, %v3550
      %v4231 = vsel %vm1834, %v4199, %v3552
      %v4233 = vsel %vm1834, %v4201, %v3554
      %v4235 = vsel %vm1834, %v4203, %v3556
      %v4237 = vsel %vm1834, %v4205, %v3558
      %v4239 = vsel %vm1834, %v4207, %v3560
      %v4241 = vsel %vm1867, %v4209, %v3562
      %v4243 = vsel %vm1867, %v4211, %v3564
      %v4245 = vsel %vm1867, %v4213, %v3566
      %v4247 = vsel %vm1867, %v4215, %v3568
      %v4249 = vsel %vm1867, %v4217, %v3570
      %v4251 = vsel %vm1867, %v4219, %v3572
      %v4253 = vsel %vm1867, %v4221, %v3574
      %v4255 = vsel %vm1867, %v4223, %v3576
      %v4257 = vsel %vm1867, %v4225, %v3578
      %v4259 = vsel %vm1867, %v4227, %v3580
      %v4261 = vsel %vm1867, %v4229, %v3582
      %v4263 = vsel %vm1867, %v4231, %v3584
      %v4265 = vsel %vm1867, %v4233, %v3586
      %v4267 = vsel %vm1867, %v4235, %v3588
      %v4269 = vsel %vm1867, %v4237, %v3590
      %v4271 = vsel %vm1867, %v4239, %v3592
      %v4273 = vsel %vm1900, %v4241, %v3604
      %v4275 = vsel %vm1900, %v4243, %v3606
      %v4277 = vsel %vm1900, %v4245, %v3608
      %v4279 = vsel %vm1900, %v4247, %v3610
      %v4281 = vsel %vm1900, %v4249, %v3612
      %v4283 = vsel %vm1900, %v4251, %v3614
      %v4285 = vsel %vm1900, %v4253, %v3616
      %v4287 = vsel %vm1900, %v4255, %v3618
      %v4289 = vsel %vm1900, %v4257, %v3620
      %v4291 = vsel %vm1900, %v4259, %v3622
      %v4293 = vsel %vm1900, %v4261, %v3624
      %v4295 = vsel %vm1900, %v4263, %v3626
      %v4297 = vsel %vm1900, %v4265, %v3628
      %v4299 = vsel %vm1900, %v4267, %v3630
      %v4301 = vsel %vm1900, %v4269, %v3632
      %v4303 = vsel %vm1900, %v4271, %v3634
      %v4305 = vsel %vm1933, %v4273, %v3636
      %v4307 = vsel %vm1933, %v4275, %v3638
      %v4309 = vsel %vm1933, %v4277, %v3640
      %v4311 = vsel %vm1933, %v4279, %v3642
      %v4313 = vsel %vm1933, %v4281, %v3644
      %v4315 = vsel %vm1933, %v4283, %v3646
      %v4317 = vsel %vm1933, %v4285, %v3648
      %v4319 = vsel %vm1933, %v4287, %v3650
      %v4321 = vsel %vm1933, %v4289, %v3652
      %v4323 = vsel %vm1933, %v4291, %v3654
      %v4325 = vsel %vm1933, %v4293, %v3656
      %v4327 = vsel %vm1933, %v4295, %v3658
      %v4329 = vsel %vm1933, %v4297, %v3660
      %v4331 = vsel %vm1933, %v4299, %v3662
      %v4333 = vsel %vm1933, %v4301, %v3664
      %v4335 = vsel %vm1933, %v4303, %v3666
      %v4337 = vsel %vm1966, %v4305, %v3668
      %v4339 = vsel %vm1966, %v4307, %v3670
      %v4341 = vsel %vm1966, %v4309, %v3672
      %v4343 = vsel %vm1966, %v4311, %v3674
      %v4345 = vsel %vm1966, %v4313, %v3676
      %v4347 = vsel %vm1966, %v4315, %v3678
      %v4349 = vsel %vm1966, %v4317, %v3680
      %v4351 = vsel %vm1966, %v4319, %v3682
      %v4353 = vsel %vm1966, %v4321, %v3684
      %v4355 = vsel %vm1966, %v4323, %v3686
      %v4357 = vsel %vm1966, %v4325, %v3688
      %v4359 = vsel %vm1966, %v4327, %v3690
      %v4361 = vsel %vm1966, %v4329, %v3692
      %v4363 = vsel %vm1966, %v4331, %v3694
      %v4365 = vsel %vm1966, %v4333, %v3696
      %v4367 = vsel %vm1966, %v4335, %v3698
      %v4369 = vsel %vm1999, %v4337, %v3860
      %v4371 = vsel %vm1999, %v4339, %v3862
      %v4373 = vsel %vm1999, %v4341, %v3864
      %v4375 = vsel %vm1999, %v4343, %v3866
      %v4377 = vsel %vm1999, %v4345, %v3868
      %v4379 = vsel %vm1999, %v4347, %v3870
      %v4381 = vsel %vm1999, %v4349, %v3872
      %v4383 = vsel %vm1999, %v4351, %v3874
      %v4385 = vsel %vm1999, %v4353, %v3876
      %v4387 = vsel %vm1999, %v4355, %v3878
      %v4389 = vsel %vm1999, %v4357, %v3880
      %v4391 = vsel %vm1999, %v4359, %v3882
      %v4393 = vsel %vm1999, %v4361, %v3884
      %v4395 = vsel %vm1999, %v4363, %v3886
      %v4397 = vsel %vm1999, %v4365, %v3888
      %v4399 = vsel %vm1999, %v4367, %v3890
      %v4401 = vsel %vm2032, %v4369, %v3892
      %v4403 = vsel %vm2032, %v4371, %v3894
      %v4405 = vsel %vm2032, %v4373, %v3896
      %v4407 = vsel %vm2032, %v4375, %v3898
      %v4409 = vsel %vm2032, %v4377, %v3900
      %v4411 = vsel %vm2032, %v4379, %v3902
      %v4413 = vsel %vm2032, %v4381, %v3904
      %v4415 = vsel %vm2032, %v4383, %v3906
      %v4417 = vsel %vm2032, %v4385, %v3908
      %v4419 = vsel %vm2032, %v4387, %v3910
      %v4421 = vsel %vm2032, %v4389, %v3912
      %v4423 = vsel %vm2032, %v4391, %v3914
      %v4425 = vsel %vm2032, %v4393, %v3916
      %v4427 = vsel %vm2032, %v4395, %v3918
      %v4429 = vsel %vm2032, %v4397, %v3920
      %v4431 = vsel %vm2032, %v4399, %v3922
      %v4433 = vsel %vm2065, %v4401, %v3924
      %v4435 = vsel %vm2065, %v4403, %v3926
      %v4437 = vsel %vm2065, %v4405, %v3928
      %v4439 = vsel %vm2065, %v4407, %v3930
      %v4441 = vsel %vm2065, %v4409, %v3932
      %v4443 = vsel %vm2065, %v4411, %v3934
      %v4445 = vsel %vm2065, %v4413, %v3936
      %v4447 = vsel %vm2065, %v4415, %v3938
      %v4449 = vsel %vm2065, %v4417, %v3940
      %v4451 = vsel %vm2065, %v4419, %v3942
      %v4453 = vsel %vm2065, %v4421, %v3944
      %v4455 = vsel %vm2065, %v4423, %v3946
      %v4457 = vsel %vm2065, %v4425, %v3948
      %v4459 = vsel %vm2065, %v4427, %v3950
      %v4461 = vsel %vm2065, %v4429, %v3952
      %v4463 = vsel %vm2065, %v4431, %v3954
      %v4465 = vsel %vm2098, %v4433, %v3966
      %v4467 = vsel %vm2098, %v4435, %v3968
      %v4469 = vsel %vm2098, %v4437, %v3970
      %v4471 = vsel %vm2098, %v4439, %v3972
      %v4473 = vsel %vm2098, %v4441, %v3974
      %v4475 = vsel %vm2098, %v4443, %v3976
      %v4477 = vsel %vm2098, %v4445, %v3978
      %v4479 = vsel %vm2098, %v4447, %v3980
      %v4481 = vsel %vm2098, %v4449, %v3982
      %v4483 = vsel %vm2098, %v4451, %v3984
      %v4485 = vsel %vm2098, %v4453, %v3986
      %v4487 = vsel %vm2098, %v4455, %v3988
      %v4489 = vsel %vm2098, %v4457, %v3990
      %v4491 = vsel %vm2098, %v4459, %v3992
      %v4493 = vsel %vm2098, %v4461, %v3994
      %v4495 = vsel %vm2098, %v4463, %v3996
      %v4497 = vsel %vm2131, %v4465, %v4001
      %v4499 = vsel %vm2131, %v4467, %v4003
      %v4501 = vsel %vm2131, %v4469, %v4005
      %v4503 = vsel %vm2131, %v4471, %v4007
      %v4505 = vsel %vm2131, %v4473, %v4009
      %v4507 = vsel %vm2131, %v4475, %v4011
      %v4509 = vsel %vm2131, %v4477, %v4013
      %v4511 = vsel %vm2131, %v4479, %v4015
      %v4513 = vsel %vm2131, %v4481, %v4017
      %v4515 = vsel %vm2131, %v4483, %v4019
      %v4517 = vsel %vm2131, %v4485, %v4021
      %v4519 = vsel %vm2131, %v4487, %v4023
      %v4521 = vsel %vm2131, %v4489, %v4025
      %v4523 = vsel %vm2131, %v4491, %v4027
      %v4525 = vsel %vm2131, %v4493, %v4029
      %v4527 = vsel %vm2131, %v4495, %v4031
      %v4529 = vunpack.c.l.b16 %v537
      %v4530 = vpack.c.b16 %v4529, %v3998
      %4531 = vrot.lane.b32.xlu0 %v3733, 4
      %v4532 = vpop.permute.xlu0 %4531
      %4533 = vrot.lane.b32.xlu0 %v3734, 4
      %v4534 = vpop.permute.xlu0 %4533
      %4535 = vrot.lane.b32.xlu0 %v3735, 4
      %v4536 = vpop.permute.xlu0 %4535
      %4537 = vrot.lane.b32.xlu0 %v3736, 4
      %v4538 = vpop.permute.xlu0 %4537
      %4539 = vrot.lane.b32.xlu0 %v3737, 4
      %v4540 = vpop.permute.xlu0 %4539
      %4541 = vrot.lane.b32.xlu0 %v3738, 4
      %v4542 = vpop.permute.xlu0 %4541
      %4543 = vrot.lane.b32.xlu0 %v3739, 4
      %v4544 = vpop.permute.xlu0 %4543
      %4545 = vrot.lane.b32.xlu0 %v3740, 4
      %v4546 = vpop.permute.xlu0 %4545
      %4547 = vrot.lane.b32.xlu0 %v3741, 4
      %v4548 = vpop.permute.xlu0 %4547
      %4549 = vrot.lane.b32.xlu0 %v3742, 4
      %v4550 = vpop.permute.xlu0 %4549
      %4551 = vrot.lane.b32.xlu0 %v3743, 4
      %v4552 = vpop.permute.xlu0 %4551
      %4553 = vrot.lane.b32.xlu0 %v3744, 4
      %v4554 = vpop.permute.xlu0 %4553
      %4555 = vrot.lane.b32.xlu0 %v3745, 4
      %v4556 = vpop.permute.xlu0 %4555
      %4557 = vrot.lane.b32.xlu0 %v3746, 4
      %v4558 = vpop.permute.xlu0 %4557
      %4559 = vrot.lane.b32.xlu0 %v3957, 4
      %v4560 = vpop.permute.xlu0 %4559
      %4561 = vrot.lane.b32.xlu0 %v4530, 4
      %v4562 = vpop.permute.xlu0 %4561
      %v4564 = vshrl.u32 %v2318, 16
      %v4566 = vrot.slane %v4564, 7
      %v4567 = vshll.u32 %v2318, 16
      %v4569 = vor.u32 %v4566, %v4567
      %v4571 = vshrl.u32 %v2319, 16
      %v4573 = vrot.slane %v4571, 7
      %v4574 = vshll.u32 %v2319, 16
      %v4576 = vor.u32 %v4573, %v4574
      %v4578 = vshrl.u32 %v2320, 16
      %v4580 = vrot.slane %v4578, 7
      %v4581 = vshll.u32 %v2320, 16
      %v4583 = vor.u32 %v4580, %v4581
      %v4585 = vshrl.u32 %v2321, 16
      %v4587 = vrot.slane %v4585, 7
      %v4588 = vshll.u32 %v2321, 16
      %v4590 = vor.u32 %v4587, %v4588
      %v4592 = vshrl.u32 %v2322, 16
      %v4594 = vrot.slane %v4592, 7
      %v4595 = vshll.u32 %v2322, 16
      %v4597 = vor.u32 %v4594, %v4595
      %v4599 = vshrl.u32 %v2323, 16
      %v4601 = vrot.slane %v4599, 7
      %v4602 = vshll.u32 %v2323, 16
      %v4604 = vor.u32 %v4601, %v4602
      %v4606 = vshrl.u32 %v2324, 16
      %v4608 = vrot.slane %v4606, 7
      %v4609 = vshll.u32 %v2324, 16
      %v4611 = vor.u32 %v4608, %v4609
      %v4613 = vshrl.u32 %v2325, 16
      %v4615 = vrot.slane %v4613, 7
      %v4616 = vshll.u32 %v2325, 16
      %v4618 = vor.u32 %v4615, %v4616
      %v4620 = vshrl.u32 %v2326, 16
      %v4622 = vrot.slane %v4620, 7
      %v4623 = vshll.u32 %v2326, 16
      %v4625 = vor.u32 %v4622, %v4623
      %v4627 = vshrl.u32 %v2327, 16
      %v4629 = vrot.slane %v4627, 7
      %v4630 = vshll.u32 %v2327, 16
      %v4632 = vor.u32 %v4629, %v4630
      %v4634 = vshrl.u32 %v2328, 16
      %v4636 = vrot.slane %v4634, 7
      %v4637 = vshll.u32 %v2328, 16
      %v4639 = vor.u32 %v4636, %v4637
      %v4641 = vshrl.u32 %v2329, 16
      %v4643 = vrot.slane %v4641, 7
      %v4644 = vshll.u32 %v2329, 16
      %v4646 = vor.u32 %v4643, %v4644
      %v4648 = vshrl.u32 %v2330, 16
      %v4650 = vrot.slane %v4648, 7
      %v4651 = vshll.u32 %v2330, 16
      %v4653 = vor.u32 %v4650, %v4651
      %v4655 = vshrl.u32 %v2331, 16
      %v4657 = vrot.slane %v4655, 7
      %v4658 = vshll.u32 %v2331, 16
      %v4660 = vor.u32 %v4657, %v4658
      %v4662 = vshrl.u32 %v2332, 16
      %v4664 = vrot.slane %v4662, 7
      %v4665 = vshll.u32 %v2332, 16
      %v4667 = vor.u32 %v4664, %v4665
      %v4669 = vshrl.u32 %v2333, 16
      %v4671 = vrot.slane %v4669, 7
      %v4672 = vshll.u32 %v2333, 16
      %v4674 = vor.u32 %v4671, %v4672
      %4675 = vrot.lane.b32.xlu0 %v4569, 8
      %v4676 = vpop.permute.xlu0 %4675
      %4677 = vrot.lane.b32.xlu0 %v4576, 8
      %v4678 = vpop.permute.xlu0 %4677
      %4679 = vrot.lane.b32.xlu0 %v4583, 8
      %v4680 = vpop.permute.xlu0 %4679
      %4681 = vrot.lane.b32.xlu0 %v4590, 8
      %v4682 = vpop.permute.xlu0 %4681
      %4683 = vrot.lane.b32.xlu0 %v4597, 8
      %v4684 = vpop.permute.xlu0 %4683
      %4685 = vrot.lane.b32.xlu0 %v4604, 8
      %v4686 = vpop.permute.xlu0 %4685
      %4687 = vrot.lane.b32.xlu0 %v4611, 8
      %v4688 = vpop.permute.xlu0 %4687
      %4689 = vrot.lane.b32.xlu0 %v4618, 8
      %v4690 = vpop.permute.xlu0 %4689
      %4691 = vrot.lane.b32.xlu0 %v4625, 8
      %v4692 = vpop.permute.xlu0 %4691
      %4693 = vrot.lane.b32.xlu0 %v4632, 8
      %v4694 = vpop.permute.xlu0 %4693
      %4695 = vrot.lane.b32.xlu0 %v4639, 8
      %v4696 = vpop.permute.xlu0 %4695
      %4697 = vrot.lane.b32.xlu0 %v4646, 8
      %v4698 = vpop.permute.xlu0 %4697
      %4699 = vrot.lane.b32.xlu0 %v4653, 8
      %v4700 = vpop.permute.xlu0 %4699
      %4701 = vrot.lane.b32.xlu0 %v4660, 8
      %v4702 = vpop.permute.xlu0 %4701
      %4703 = vrot.lane.b32.xlu0 %v4667, 8
      %v4704 = vpop.permute.xlu0 %4703
      %4705 = vrot.lane.b32.xlu0 %v4674, 8
      %v4706 = vpop.permute.xlu0 %4705
      %4707 = vrot.lane.b32.xlu0 %v2398, 12
      %v4708 = vpop.permute.xlu0 %4707
      %4709 = vrot.lane.b32.xlu0 %v2399, 12
      %v4710 = vpop.permute.xlu0 %4709
      %4711 = vrot.lane.b32.xlu0 %v2400, 12
      %v4712 = vpop.permute.xlu0 %4711
      %4713 = vrot.lane.b32.xlu0 %v2401, 12
      %v4714 = vpop.permute.xlu0 %4713
      %4715 = vrot.lane.b32.xlu0 %v2402, 12
      %v4716 = vpop.permute.xlu0 %4715
      %4717 = vrot.lane.b32.xlu0 %v2403, 12
      %v4718 = vpop.permute.xlu0 %4717
      %4719 = vrot.lane.b32.xlu0 %v2404, 12
      %v4720 = vpop.permute.xlu0 %4719
      %4721 = vrot.lane.b32.xlu0 %v2405, 12
      %v4722 = vpop.permute.xlu0 %4721
      %4723 = vrot.lane.b32.xlu0 %v2406, 12
      %v4724 = vpop.permute.xlu0 %4723
      %4725 = vrot.lane.b32.xlu0 %v2407, 12
      %v4726 = vpop.permute.xlu0 %4725
      %4727 = vrot.lane.b32.xlu0 %v2408, 12
      %v4728 = vpop.permute.xlu0 %4727
      %4729 = vrot.lane.b32.xlu0 %v2409, 12
      %v4730 = vpop.permute.xlu0 %4729
      %4731 = vrot.lane.b32.xlu0 %v2410, 12
      %v4732 = vpop.permute.xlu0 %4731
      %4733 = vrot.lane.b32.xlu0 %v2411, 12
      %v4734 = vpop.permute.xlu0 %4733
      %4735 = vrot.lane.b32.xlu0 %v2412, 12
      %v4736 = vpop.permute.xlu0 %4735
      %4737 = vrot.lane.b32.xlu0 %v2413, 12
      %v4738 = vpop.permute.xlu0 %4737
      %v4755 = vunpack.c.l.b16 %v576
      %v4756 = vunpack.c.l.b16 %v578
      %v4757 = vunpack.c.l.b16 %v580
      %v4758 = vunpack.c.l.b16 %v582
      %v4759 = vunpack.c.l.b16 %v584
      %v4760 = vunpack.c.l.b16 %v586
      %v4761 = vunpack.c.l.b16 %v588
      %v4762 = vunpack.c.l.b16 %v590
      %v4763 = vunpack.c.l.b16 %v592
      %v4764 = vunpack.c.l.b16 %v594
      %v4765 = vunpack.c.l.b16 %v596
      %v4766 = vunpack.c.l.b16 %v598
      %v4767 = vunpack.c.l.b16 %v600
      %v4768 = vunpack.c.l.b16 %v602
      %v4769 = vunpack.c.l.b16 %v604
      %v4770 = vunpack.c.l.b16 %v606
      %v4771 = vpack.c.b16 %v4755, %v2302
      %v4772 = vpack.c.b16 %v4756, %v2303
      %v4773 = vpack.c.b16 %v4757, %v2304
      %v4774 = vpack.c.b16 %v4758, %v2305
      %v4775 = vpack.c.b16 %v4759, %v2306
      %v4776 = vpack.c.b16 %v4760, %v2307
      %v4777 = vpack.c.b16 %v4761, %v2308
      %v4778 = vpack.c.b16 %v4762, %v2309
      %v4779 = vpack.c.b16 %v4763, %v2310
      %v4780 = vpack.c.b16 %v4764, %v2311
      %v4781 = vpack.c.b16 %v4765, %v2312
      %v4782 = vpack.c.b16 %v4766, %v2313
      %v4783 = vpack.c.b16 %v4767, %v2314
      %v4784 = vpack.c.b16 %v4768, %v2315
      %v4785 = vpack.c.b16 %v4769, %v2316
      %v4786 = vpack.c.b16 %v4770, %v2317
      %4787 = vrot.lane.b32.xlu0 %v4771, 16
      %v4788 = vpop.permute.xlu0 %4787
      %4789 = vrot.lane.b32.xlu0 %v4772, 16
      %v4790 = vpop.permute.xlu0 %4789
      %4791 = vrot.lane.b32.xlu0 %v4773, 16
      %v4792 = vpop.permute.xlu0 %4791
      %4793 = vrot.lane.b32.xlu0 %v4774, 16
      %v4794 = vpop.permute.xlu0 %4793
      %4795 = vrot.lane.b32.xlu0 %v4775, 16
      %v4796 = vpop.permute.xlu0 %4795
      %4797 = vrot.lane.b32.xlu0 %v4776, 16
      %v4798 = vpop.permute.xlu0 %4797
      %4799 = vrot.lane.b32.xlu0 %v4777, 16
      %v4800 = vpop.permute.xlu0 %4799
      %4801 = vrot.lane.b32.xlu0 %v4778, 16
      %v4802 = vpop.permute.xlu0 %4801
      %4803 = vrot.lane.b32.xlu0 %v4779, 16
      %v4804 = vpop.permute.xlu0 %4803
      %4805 = vrot.lane.b32.xlu0 %v4780, 16
      %v4806 = vpop.permute.xlu0 %4805
      %4807 = vrot.lane.b32.xlu0 %v4781, 16
      %v4808 = vpop.permute.xlu0 %4807
      %4809 = vrot.lane.b32.xlu0 %v4782, 16
      %v4810 = vpop.permute.xlu0 %4809
      %4811 = vrot.lane.b32.xlu0 %v4783, 16
      %v4812 = vpop.permute.xlu0 %4811
      %4813 = vrot.lane.b32.xlu0 %v4784, 16
      %v4814 = vpop.permute.xlu0 %4813
      %4815 = vrot.lane.b32.xlu0 %v4785, 16
      %v4816 = vpop.permute.xlu0 %4815
      %4817 = vrot.lane.b32.xlu0 %v4786, 16
      %v4818 = vpop.permute.xlu0 %4817
      %v4820 = vshrl.u32 %v2595, 16
      %v4822 = vrot.slane %v4820, 7
      %v4823 = vshll.u32 %v2595, 16
      %v4825 = vor.u32 %v4822, %v4823
      %4826 = vrot.lane.b32.xlu0 %v4576, 20
      %v4827 = vpop.permute.xlu0 %4826
      %4828 = vrot.lane.b32.xlu0 %v4583, 20
      %v4829 = vpop.permute.xlu0 %4828
      %4830 = vrot.lane.b32.xlu0 %v4590, 20
      %v4831 = vpop.permute.xlu0 %4830
      %4832 = vrot.lane.b32.xlu0 %v4597, 20
      %v4833 = vpop.permute.xlu0 %4832
      %4834 = vrot.lane.b32.xlu0 %v4604, 20
      %v4835 = vpop.permute.xlu0 %4834
      %4836 = vrot.lane.b32.xlu0 %v4611, 20
      %v4837 = vpop.permute.xlu0 %4836
      %4838 = vrot.lane.b32.xlu0 %v4618, 20
      %v4839 = vpop.permute.xlu0 %4838
      %4840 = vrot.lane.b32.xlu0 %v4625, 20
      %v4841 = vpop.permute.xlu0 %4840
      %4842 = vrot.lane.b32.xlu0 %v4632, 20
      %v4843 = vpop.permute.xlu0 %4842
      %4844 = vrot.lane.b32.xlu0 %v4639, 20
      %v4845 = vpop.permute.xlu0 %4844
      %4846 = vrot.lane.b32.xlu0 %v4646, 20
      %v4847 = vpop.permute.xlu0 %4846
      %4848 = vrot.lane.b32.xlu0 %v4653, 20
      %v4849 = vpop.permute.xlu0 %4848
      %4850 = vrot.lane.b32.xlu0 %v4660, 20
      %v4851 = vpop.permute.xlu0 %4850
      %4852 = vrot.lane.b32.xlu0 %v4667, 20
      %v4853 = vpop.permute.xlu0 %4852
      %4854 = vrot.lane.b32.xlu0 %v4674, 20
      %v4855 = vpop.permute.xlu0 %4854
      %4856 = vrot.lane.b32.xlu0 %v4825, 20
      %v4857 = vpop.permute.xlu0 %4856
      %4858 = vrot.lane.b32.xlu0 %v2399, 24
      %v4859 = vpop.permute.xlu0 %4858
      %4860 = vrot.lane.b32.xlu0 %v2400, 24
      %v4861 = vpop.permute.xlu0 %4860
      %4862 = vrot.lane.b32.xlu0 %v2401, 24
      %v4863 = vpop.permute.xlu0 %4862
      %4864 = vrot.lane.b32.xlu0 %v2402, 24
      %v4865 = vpop.permute.xlu0 %4864
      %4866 = vrot.lane.b32.xlu0 %v2403, 24
      %v4867 = vpop.permute.xlu0 %4866
      %4868 = vrot.lane.b32.xlu0 %v2404, 24
      %v4869 = vpop.permute.xlu0 %4868
      %4870 = vrot.lane.b32.xlu0 %v2405, 24
      %v4871 = vpop.permute.xlu0 %4870
      %4872 = vrot.lane.b32.xlu0 %v2406, 24
      %v4873 = vpop.permute.xlu0 %4872
      %4874 = vrot.lane.b32.xlu0 %v2407, 24
      %v4875 = vpop.permute.xlu0 %4874
      %4876 = vrot.lane.b32.xlu0 %v2408, 24
      %v4877 = vpop.permute.xlu0 %4876
      %4878 = vrot.lane.b32.xlu0 %v2409, 24
      %v4879 = vpop.permute.xlu0 %4878
      %4880 = vrot.lane.b32.xlu0 %v2410, 24
      %v4881 = vpop.permute.xlu0 %4880
      %4882 = vrot.lane.b32.xlu0 %v2411, 24
      %v4883 = vpop.permute.xlu0 %4882
      %4884 = vrot.lane.b32.xlu0 %v2412, 24
      %v4885 = vpop.permute.xlu0 %4884
      %4886 = vrot.lane.b32.xlu0 %v2413, 24
      %v4887 = vpop.permute.xlu0 %4886
      %4888 = vrot.lane.b32.xlu0 %v2630, 24
      %v4889 = vpop.permute.xlu0 %4888
      %v4891 = vunpack.c.l.b16 %v608
      %v4892 = vpack.c.b16 %v4891, %v2594
      %4893 = vrot.lane.b32.xlu0 %v4772, 28
      %v4894 = vpop.permute.xlu0 %4893
      %4895 = vrot.lane.b32.xlu0 %v4773, 28
      %v4896 = vpop.permute.xlu0 %4895
      %4897 = vrot.lane.b32.xlu0 %v4774, 28
      %v4898 = vpop.permute.xlu0 %4897
      %4899 = vrot.lane.b32.xlu0 %v4775, 28
      %v4900 = vpop.permute.xlu0 %4899
      %4901 = vrot.lane.b32.xlu0 %v4776, 28
      %v4902 = vpop.permute.xlu0 %4901
      %4903 = vrot.lane.b32.xlu0 %v4777, 28
      %v4904 = vpop.permute.xlu0 %4903
      %4905 = vrot.lane.b32.xlu0 %v4778, 28
      %v4906 = vpop.permute.xlu0 %4905
      %4907 = vrot.lane.b32.xlu0 %v4779, 28
      %v4908 = vpop.permute.xlu0 %4907
      %4909 = vrot.lane.b32.xlu0 %v4780, 28
      %v4910 = vpop.permute.xlu0 %4909
      %4911 = vrot.lane.b32.xlu0 %v4781, 28
      %v4912 = vpop.permute.xlu0 %4911
      %4913 = vrot.lane.b32.xlu0 %v4782, 28
      %v4914 = vpop.permute.xlu0 %4913
      %4915 = vrot.lane.b32.xlu0 %v4783, 28
      %v4916 = vpop.permute.xlu0 %4915
      %4917 = vrot.lane.b32.xlu0 %v4784, 28
      %v4918 = vpop.permute.xlu0 %4917
      %4919 = vrot.lane.b32.xlu0 %v4785, 28
      %v4920 = vpop.permute.xlu0 %4919
      %4921 = vrot.lane.b32.xlu0 %v4786, 28
      %v4922 = vpop.permute.xlu0 %4921
      %4923 = vrot.lane.b32.xlu0 %v4892, 28
      %v4924 = vpop.permute.xlu0 %4923
      %v4926 = vshrl.u32 %v2707, 16
      %v4928 = vrot.slane %v4926, 7
      %v4929 = vshll.u32 %v2707, 16
      %v4931 = vor.u32 %v4928, %v4929
      %4932 = vrot.lane.b32.xlu0 %v4583, 32
      %v4933 = vpop.permute.xlu0 %4932
      %4934 = vrot.lane.b32.xlu0 %v4590, 32
      %v4935 = vpop.permute.xlu0 %4934
      %4936 = vrot.lane.b32.xlu0 %v4597, 32
      %v4937 = vpop.permute.xlu0 %4936
      %4938 = vrot.lane.b32.xlu0 %v4604, 32
      %v4939 = vpop.permute.xlu0 %4938
      %4940 = vrot.lane.b32.xlu0 %v4611, 32
      %v4941 = vpop.permute.xlu0 %4940
      %4942 = vrot.lane.b32.xlu0 %v4618, 32
      %v4943 = vpop.permute.xlu0 %4942
      %4944 = vrot.lane.b32.xlu0 %v4625, 32
      %v4945 = vpop.permute.xlu0 %4944
      %4946 = vrot.lane.b32.xlu0 %v4632, 32
      %v4947 = vpop.permute.xlu0 %4946
      %4948 = vrot.lane.b32.xlu0 %v4639, 32
      %v4949 = vpop.permute.xlu0 %4948
      %4950 = vrot.lane.b32.xlu0 %v4646, 32
      %v4951 = vpop.permute.xlu0 %4950
      %4952 = vrot.lane.b32.xlu0 %v4653, 32
      %v4953 = vpop.permute.xlu0 %4952
      %4954 = vrot.lane.b32.xlu0 %v4660, 32
      %v4955 = vpop.permute.xlu0 %4954
      %4956 = vrot.lane.b32.xlu0 %v4667, 32
      %v4957 = vpop.permute.xlu0 %4956
      %4958 = vrot.lane.b32.xlu0 %v4674, 32
      %v4959 = vpop.permute.xlu0 %4958
      %4960 = vrot.lane.b32.xlu0 %v4825, 32
      %v4961 = vpop.permute.xlu0 %4960
      %4962 = vrot.lane.b32.xlu0 %v4931, 32
      %v4963 = vpop.permute.xlu0 %4962
      %4964 = vrot.lane.b32.xlu0 %v2400, 36
      %v4965 = vpop.permute.xlu0 %4964
      %4966 = vrot.lane.b32.xlu0 %v2401, 36
      %v4967 = vpop.permute.xlu0 %4966
      %4968 = vrot.lane.b32.xlu0 %v2402, 36
      %v4969 = vpop.permute.xlu0 %4968
      %4970 = vrot.lane.b32.xlu0 %v2403, 36
      %v4971 = vpop.permute.xlu0 %4970
      %4972 = vrot.lane.b32.xlu0 %v2404, 36
      %v4973 = vpop.permute.xlu0 %4972
      %4974 = vrot.lane.b32.xlu0 %v2405, 36
      %v4975 = vpop.permute.xlu0 %4974
      %4976 = vrot.lane.b32.xlu0 %v2406, 36
      %v4977 = vpop.permute.xlu0 %4976
      %4978 = vrot.lane.b32.xlu0 %v2407, 36
      %v4979 = vpop.permute.xlu0 %4978
      %4980 = vrot.lane.b32.xlu0 %v2408, 36
      %v4981 = vpop.permute.xlu0 %4980
      %4982 = vrot.lane.b32.xlu0 %v2409, 36
      %v4983 = vpop.permute.xlu0 %4982
      %4984 = vrot.lane.b32.xlu0 %v2410, 36
      %v4985 = vpop.permute.xlu0 %4984
      %4986 = vrot.lane.b32.xlu0 %v2411, 36
      %v4987 = vpop.permute.xlu0 %4986
      %4988 = vrot.lane.b32.xlu0 %v2412, 36
      %v4989 = vpop.permute.xlu0 %4988
      %4990 = vrot.lane.b32.xlu0 %v2413, 36
      %v4991 = vpop.permute.xlu0 %4990
      %4992 = vrot.lane.b32.xlu0 %v2630, 36
      %v4993 = vpop.permute.xlu0 %4992
      %4994 = vrot.lane.b32.xlu0 %v2742, 36
      %v4995 = vpop.permute.xlu0 %4994
      %v4997 = vunpack.c.l.b16 %v610
      %v4998 = vpack.c.b16 %v4997, %v2706
      %4999 = vrot.lane.b32.xlu0 %v4773, 40
      %v5000 = vpop.permute.xlu0 %4999
      %5001 = vrot.lane.b32.xlu0 %v4774, 40
      %v5002 = vpop.permute.xlu0 %5001
      %5003 = vrot.lane.b32.xlu0 %v4775, 40
      %v5004 = vpop.permute.xlu0 %5003
      %5005 = vrot.lane.b32.xlu0 %v4776, 40
      %v5006 = vpop.permute.xlu0 %5005
      %5007 = vrot.lane.b32.xlu0 %v4777, 40
      %v5008 = vpop.permute.xlu0 %5007
      %5009 = vrot.lane.b32.xlu0 %v4778, 40
      %v5010 = vpop.permute.xlu0 %5009
      %5011 = vrot.lane.b32.xlu0 %v4779, 40
      %v5012 = vpop.permute.xlu0 %5011
      %5013 = vrot.lane.b32.xlu0 %v4780, 40
      %v5014 = vpop.permute.xlu0 %5013
      %5015 = vrot.lane.b32.xlu0 %v4781, 40
      %v5016 = vpop.permute.xlu0 %5015
      %5017 = vrot.lane.b32.xlu0 %v4782, 40
      %v5018 = vpop.permute.xlu0 %5017
      %5019 = vrot.lane.b32.xlu0 %v4783, 40
      %v5020 = vpop.permute.xlu0 %5019
      %5021 = vrot.lane.b32.xlu0 %v4784, 40
      %v5022 = vpop.permute.xlu0 %5021
      %5023 = vrot.lane.b32.xlu0 %v4785, 40
      %v5024 = vpop.permute.xlu0 %5023
      %5025 = vrot.lane.b32.xlu0 %v4786, 40
      %v5026 = vpop.permute.xlu0 %5025
      %5027 = vrot.lane.b32.xlu0 %v4892, 40
      %v5028 = vpop.permute.xlu0 %5027
      %5029 = vrot.lane.b32.xlu0 %v4998, 40
      %v5030 = vpop.permute.xlu0 %5029
      %v5032 = vsel %vm1653, %v1348, %v4532
      %v5034 = vsel %vm1653, %v1349, %v4534
      %v5036 = vsel %vm1653, %v1350, %v4536
      %v5038 = vsel %vm1653, %v1351, %v4538
      %v5040 = vsel %vm1653, %v1352, %v4540
      %v5042 = vsel %vm1653, %v1353, %v4542
      %v5044 = vsel %vm1653, %v1354, %v4544
      %v5046 = vsel %vm1653, %v1355, %v4546
      %v5048 = vsel %vm1653, %v1356, %v4548
      %v5050 = vsel %vm1653, %v1357, %v4550
      %v5052 = vsel %vm1653, %v1358, %v4552
      %v5054 = vsel %vm1653, %v1359, %v4554
      %v5056 = vsel %vm1653, %v1360, %v4556
      %v5058 = vsel %vm1653, %v1361, %v4558
      %v5060 = vsel %vm1653, %v1578, %v4560
      %v5062 = vsel %vm1653, %v2166, %v4562
      %v5064 = vsel %vm1702, %v5032, %v4676
      %v5066 = vsel %vm1702, %v5034, %v4678
      %v5068 = vsel %vm1702, %v5036, %v4680
      %v5070 = vsel %vm1702, %v5038, %v4682
      %v5072 = vsel %vm1702, %v5040, %v4684
      %v5074 = vsel %vm1702, %v5042, %v4686
      %v5076 = vsel %vm1702, %v5044, %v4688
      %v5078 = vsel %vm1702, %v5046, %v4690
      %v5080 = vsel %vm1702, %v5048, %v4692
      %v5082 = vsel %vm1702, %v5050, %v4694
      %v5084 = vsel %vm1702, %v5052, %v4696
      %v5086 = vsel %vm1702, %v5054, %v4698
      %v5088 = vsel %vm1702, %v5056, %v4700
      %v5090 = vsel %vm1702, %v5058, %v4702
      %v5092 = vsel %vm1702, %v5060, %v4704
      %v5094 = vsel %vm1702, %v5062, %v4706
      %v5096 = vsel %vm1735, %v5064, %v4708
      %v5098 = vsel %vm1735, %v5066, %v4710
      %v5100 = vsel %vm1735, %v5068, %v4712
      %v5102 = vsel %vm1735, %v5070, %v4714
      %v5104 = vsel %vm1735, %v5072, %v4716
      %v5106 = vsel %vm1735, %v5074, %v4718
      %v5108 = vsel %vm1735, %v5076, %v4720
      %v5110 = vsel %vm1735, %v5078, %v4722
      %v5112 = vsel %vm1735, %v5080, %v4724
      %v5114 = vsel %vm1735, %v5082, %v4726
      %v5116 = vsel %vm1735, %v5084, %v4728
      %v5118 = vsel %vm1735, %v5086, %v4730
      %v5120 = vsel %vm1735, %v5088, %v4732
      %v5122 = vsel %vm1735, %v5090, %v4734
      %v5124 = vsel %vm1735, %v5092, %v4736
      %v5126 = vsel %vm1735, %v5094, %v4738
      %v5128 = vsel %vm1768, %v5096, %v4788
      %v5130 = vsel %vm1768, %v5098, %v4790
      %v5132 = vsel %vm1768, %v5100, %v4792
      %v5134 = vsel %vm1768, %v5102, %v4794
      %v5136 = vsel %vm1768, %v5104, %v4796
      %v5138 = vsel %vm1768, %v5106, %v4798
      %v5140 = vsel %vm1768, %v5108, %v4800
      %v5142 = vsel %vm1768, %v5110, %v4802
      %v5144 = vsel %vm1768, %v5112, %v4804
      %v5146 = vsel %vm1768, %v5114, %v4806
      %v5148 = vsel %vm1768, %v5116, %v4808
      %v5150 = vsel %vm1768, %v5118, %v4810
      %v5152 = vsel %vm1768, %v5120, %v4812
      %v5154 = vsel %vm1768, %v5122, %v4814
      %v5156 = vsel %vm1768, %v5124, %v4816
      %v5158 = vsel %vm1768, %v5126, %v4818
      %v5160 = vsel %vm1801, %v5128, %v4827
      %v5162 = vsel %vm1801, %v5130, %v4829
      %v5164 = vsel %vm1801, %v5132, %v4831
      %v5166 = vsel %vm1801, %v5134, %v4833
      %v5168 = vsel %vm1801, %v5136, %v4835
      %v5170 = vsel %vm1801, %v5138, %v4837
      %v5172 = vsel %vm1801, %v5140, %v4839
      %v5174 = vsel %vm1801, %v5142, %v4841
      %v5176 = vsel %vm1801, %v5144, %v4843
      %v5178 = vsel %vm1801, %v5146, %v4845
      %v5180 = vsel %vm1801, %v5148, %v4847
      %v5182 = vsel %vm1801, %v5150, %v4849
      %v5184 = vsel %vm1801, %v5152, %v4851
      %v5186 = vsel %vm1801, %v5154, %v4853
      %v5188 = vsel %vm1801, %v5156, %v4855
      %v5190 = vsel %vm1801, %v5158, %v4857
      %v5192 = vsel %vm1834, %v5160, %v4859
      %v5194 = vsel %vm1834, %v5162, %v4861
      %v5196 = vsel %vm1834, %v5164, %v4863
      %v5198 = vsel %vm1834, %v5166, %v4865
      %v5200 = vsel %vm1834, %v5168, %v4867
      %v5202 = vsel %vm1834, %v5170, %v4869
      %v5204 = vsel %vm1834, %v5172, %v4871
      %v5206 = vsel %vm1834, %v5174, %v4873
      %v5208 = vsel %vm1834, %v5176, %v4875
      %v5210 = vsel %vm1834, %v5178, %v4877
      %v5212 = vsel %vm1834, %v5180, %v4879
      %v5214 = vsel %vm1834, %v5182, %v4881
      %v5216 = vsel %vm1834, %v5184, %v4883
      %v5218 = vsel %vm1834, %v5186, %v4885
      %v5220 = vsel %vm1834, %v5188, %v4887
      %v5222 = vsel %vm1834, %v5190, %v4889
      %v5224 = vsel %vm1867, %v5192, %v4894
      %v5226 = vsel %vm1867, %v5194, %v4896
      %v5228 = vsel %vm1867, %v5196, %v4898
      %v5230 = vsel %vm1867, %v5198, %v4900
      %v5232 = vsel %vm1867, %v5200, %v4902
      %v5234 = vsel %vm1867, %v5202, %v4904
      %v5236 = vsel %vm1867, %v5204, %v4906
      %v5238 = vsel %vm1867, %v5206, %v4908
      %v5240 = vsel %vm1867, %v5208, %v4910
      %v5242 = vsel %vm1867, %v5210, %v4912
      %v5244 = vsel %vm1867, %v5212, %v4914
      %v5246 = vsel %vm1867, %v5214, %v4916
      %v5248 = vsel %vm1867, %v5216, %v4918
      %v5250 = vsel %vm1867, %v5218, %v4920
      %v5252 = vsel %vm1867, %v5220, %v4922
      %v5254 = vsel %vm1867, %v5222, %v4924
      %v5256 = vsel %vm1900, %v5224, %v4933
      %v5258 = vsel %vm1900, %v5226, %v4935
      %v5260 = vsel %vm1900, %v5228, %v4937
      %v5262 = vsel %vm1900, %v5230, %v4939
      %v5264 = vsel %vm1900, %v5232, %v4941
      %v5266 = vsel %vm1900, %v5234, %v4943
      %v5268 = vsel %vm1900, %v5236, %v4945
      %v5270 = vsel %vm1900, %v5238, %v4947
      %v5272 = vsel %vm1900, %v5240, %v4949
      %v5274 = vsel %vm1900, %v5242, %v4951
      %v5276 = vsel %vm1900, %v5244, %v4953
      %v5278 = vsel %vm1900, %v5246, %v4955
      %v5280 = vsel %vm1900, %v5248, %v4957
      %v5282 = vsel %vm1900, %v5250, %v4959
      %v5284 = vsel %vm1900, %v5252, %v4961
      %v5286 = vsel %vm1900, %v5254, %v4963
      %v5288 = vsel %vm1933, %v5256, %v4965
      %v5290 = vsel %vm1933, %v5258, %v4967
      %v5292 = vsel %vm1933, %v5260, %v4969
      %v5294 = vsel %vm1933, %v5262, %v4971
      %v5296 = vsel %vm1933, %v5264, %v4973
      %v5298 = vsel %vm1933, %v5266, %v4975
      %v5300 = vsel %vm1933, %v5268, %v4977
      %v5302 = vsel %vm1933, %v5270, %v4979
      %v5304 = vsel %vm1933, %v5272, %v4981
      %v5306 = vsel %vm1933, %v5274, %v4983
      %v5308 = vsel %vm1933, %v5276, %v4985
      %v5310 = vsel %vm1933, %v5278, %v4987
      %v5312 = vsel %vm1933, %v5280, %v4989
      %v5314 = vsel %vm1933, %v5282, %v4991
      %v5316 = vsel %vm1933, %v5284, %v4993
      %v5318 = vsel %vm1933, %v5286, %v4995
      %v5320 = vsel %vm1966, %v5288, %v5000
      %v5322 = vsel %vm1966, %v5290, %v5002
      %v5324 = vsel %vm1966, %v5292, %v5004
      %v5326 = vsel %vm1966, %v5294, %v5006
      %v5328 = vsel %vm1966, %v5296, %v5008
      %v5330 = vsel %vm1966, %v5298, %v5010
      %v5332 = vsel %vm1966, %v5300, %v5012
      %v5334 = vsel %vm1966, %v5302, %v5014
      %v5336 = vsel %vm1966, %v5304, %v5016
      %v5338 = vsel %vm1966, %v5306, %v5018
      %v5340 = vsel %vm1966, %v5308, %v5020
      %v5342 = vsel %vm1966, %v5310, %v5022
      %v5344 = vsel %vm1966, %v5312, %v5024
      %v5346 = vsel %vm1966, %v5314, %v5026
      %v5348 = vsel %vm1966, %v5316, %v5028
      %v5350 = vsel %vm1966, %v5318, %v5030
      %v5351 = vshrl.u32 %v5320, 16
      %v5353 = vshll.u32 %v5320, 16
      %v5355 = vrot.slane %v5353, 1
      %v5356 = vor.u32 %v5351, %v5355
      %v5357 = vshrl.u32 %v5322, 16
      %v5359 = vshll.u32 %v5322, 16
      %v5361 = vrot.slane %v5359, 1
      %v5362 = vor.u32 %v5357, %v5361
      %v5363 = vshrl.u32 %v5324, 16
      %v5365 = vshll.u32 %v5324, 16
      %v5367 = vrot.slane %v5365, 1
      %v5368 = vor.u32 %v5363, %v5367
      %v5369 = vshrl.u32 %v5326, 16
      %v5371 = vshll.u32 %v5326, 16
      %v5373 = vrot.slane %v5371, 1
      %v5374 = vor.u32 %v5369, %v5373
      %v5375 = vshrl.u32 %v5328, 16
      %v5377 = vshll.u32 %v5328, 16
      %v5379 = vrot.slane %v5377, 1
      %v5380 = vor.u32 %v5375, %v5379
      %v5381 = vshrl.u32 %v5330, 16
      %v5383 = vshll.u32 %v5330, 16
      %v5385 = vrot.slane %v5383, 1
      %v5386 = vor.u32 %v5381, %v5385
      %v5387 = vshrl.u32 %v5332, 16
      %v5389 = vshll.u32 %v5332, 16
      %v5391 = vrot.slane %v5389, 1
      %v5392 = vor.u32 %v5387, %v5391
      %v5393 = vshrl.u32 %v5334, 16
      %v5395 = vshll.u32 %v5334, 16
      %v5397 = vrot.slane %v5395, 1
      %v5398 = vor.u32 %v5393, %v5397
      %v5399 = vshrl.u32 %v5336, 16
      %v5401 = vshll.u32 %v5336, 16
      %v5403 = vrot.slane %v5401, 1
      %v5404 = vor.u32 %v5399, %v5403
      %v5405 = vshrl.u32 %v5338, 16
      %v5407 = vshll.u32 %v5338, 16
      %v5409 = vrot.slane %v5407, 1
      %v5410 = vor.u32 %v5405, %v5409
      %v5411 = vshrl.u32 %v5340, 16
      %v5413 = vshll.u32 %v5340, 16
      %v5415 = vrot.slane %v5413, 1
      %v5416 = vor.u32 %v5411, %v5415
      %v5417 = vshrl.u32 %v5342, 16
      %v5419 = vshll.u32 %v5342, 16
      %v5421 = vrot.slane %v5419, 1
      %v5422 = vor.u32 %v5417, %v5421
      %v5423 = vshrl.u32 %v5344, 16
      %v5425 = vshll.u32 %v5344, 16
      %v5427 = vrot.slane %v5425, 1
      %v5428 = vor.u32 %v5423, %v5427
      %v5429 = vshrl.u32 %v5346, 16
      %v5431 = vshll.u32 %v5346, 16
      %v5433 = vrot.slane %v5431, 1
      %v5434 = vor.u32 %v5429, %v5433
      %v5435 = vshrl.u32 %v5348, 16
      %v5437 = vshll.u32 %v5348, 16
      %v5439 = vrot.slane %v5437, 1
      %v5440 = vor.u32 %v5435, %v5439
      %v5441 = vshrl.u32 %v5350, 16
      %v5443 = vshll.u32 %v5350, 16
      %v5445 = vrot.slane %v5443, 1
      %v5446 = vor.u32 %v5441, %v5445
      %5447 = vrot.lane.b32.xlu0 %v5356, 64
      %v5448 = vpop.permute.xlu0 %5447
      %5449 = vrot.lane.b32.xlu0 %v5362, 64
      %v5450 = vpop.permute.xlu0 %5449
      %5451 = vrot.lane.b32.xlu0 %v5368, 64
      %v5452 = vpop.permute.xlu0 %5451
      %5453 = vrot.lane.b32.xlu0 %v5374, 64
      %v5454 = vpop.permute.xlu0 %5453
      %5455 = vrot.lane.b32.xlu0 %v5380, 64
      %v5456 = vpop.permute.xlu0 %5455
      %5457 = vrot.lane.b32.xlu0 %v5386, 64
      %v5458 = vpop.permute.xlu0 %5457
      %5459 = vrot.lane.b32.xlu0 %v5392, 64
      %v5460 = vpop.permute.xlu0 %5459
      %5461 = vrot.lane.b32.xlu0 %v5398, 64
      %v5462 = vpop.permute.xlu0 %5461
      %5463 = vrot.lane.b32.xlu0 %v5404, 64
      %v5464 = vpop.permute.xlu0 %5463
      %5465 = vrot.lane.b32.xlu0 %v5410, 64
      %v5466 = vpop.permute.xlu0 %5465
      %5467 = vrot.lane.b32.xlu0 %v5416, 64
      %v5468 = vpop.permute.xlu0 %5467
      %5469 = vrot.lane.b32.xlu0 %v5422, 64
      %v5470 = vpop.permute.xlu0 %5469
      %5471 = vrot.lane.b32.xlu0 %v5428, 64
      %v5472 = vpop.permute.xlu0 %5471
      %5473 = vrot.lane.b32.xlu0 %v5434, 64
      %v5474 = vpop.permute.xlu0 %5473
      %5475 = vrot.lane.b32.xlu0 %v5440, 64
      %v5476 = vpop.permute.xlu0 %5475
      %5477 = vrot.lane.b32.xlu0 %v5446, 64
      %v5478 = vpop.permute.xlu0 %5477
      %v5480 = vsel %vm3166, %v4497, %v5448
      %v5482 = vsel %vm3166, %v4499, %v5450
      %v5484 = vsel %vm3166, %v4501, %v5452
      %v5486 = vsel %vm3166, %v4503, %v5454
      %v5488 = vsel %vm3166, %v4505, %v5456
      %v5490 = vsel %vm3166, %v4507, %v5458
      %v5492 = vsel %vm3166, %v4509, %v5460
      %v5494 = vsel %vm3166, %v4511, %v5462
      %v5496 = vsel %vm3166, %v4513, %v5464
      %v5498 = vsel %vm3166, %v4515, %v5466
      %v5500 = vsel %vm3166, %v4517, %v5468
      %v5502 = vsel %vm3166, %v4519, %v5470
      %v5504 = vsel %vm3166, %v4521, %v5472
      %v5506 = vsel %vm3166, %v4523, %v5474
      %v5508 = vsel %vm3166, %v4525, %v5476
      %v5510 = vsel %vm3166, %v4527, %v5478
      %v5527 = vunpack.c.l.b16 %v3168
      %v5528 = vunpack.c.l.b16 %v3170
      %v5529 = vunpack.c.l.b16 %v3172
      %v5530 = vunpack.c.l.b16 %v3174
      %v5531 = vunpack.c.l.b16 %v3176
      %v5532 = vunpack.c.l.b16 %v3178
      %v5533 = vunpack.c.l.b16 %v3180
      %v5534 = vunpack.c.l.b16 %v3182
      %v5535 = vunpack.c.l.b16 %v3184
      %v5536 = vunpack.c.l.b16 %v3186
      %v5537 = vunpack.c.l.b16 %v3188
      %v5538 = vunpack.c.l.b16 %v3190
      %v5539 = vunpack.c.l.b16 %v3192
      %v5540 = vunpack.c.l.b16 %v3194
      %v5541 = vunpack.c.l.b16 %v3196
      %v5542 = vunpack.c.l.b16 %v3198
      %v5543 = vpack.c.b16 %v5528, %v5527
      %v5544 = vpack.c.b16 %v5530, %v5529
      %v5545 = vpack.c.b16 %v5532, %v5531
      %v5546 = vpack.c.b16 %v5534, %v5533
      %v5547 = vpack.c.b16 %v5536, %v5535
      %v5548 = vpack.c.b16 %v5538, %v5537
      %v5549 = vpack.c.b16 %v5540, %v5539
      %v5550 = vpack.c.b16 %v5542, %v5541
      %v5567 = vunpack.c.l.b16 %v5480
      %v5568 = vunpack.c.l.b16 %v5482
      %v5569 = vunpack.c.l.b16 %v5484
      %v5570 = vunpack.c.l.b16 %v5486
      %v5571 = vunpack.c.l.b16 %v5488
      %v5572 = vunpack.c.l.b16 %v5490
      %v5573 = vunpack.c.l.b16 %v5492
      %v5574 = vunpack.c.l.b16 %v5494
      %v5575 = vunpack.c.l.b16 %v5496
      %v5576 = vunpack.c.l.b16 %v5498
      %v5577 = vunpack.c.l.b16 %v5500
      %v5578 = vunpack.c.l.b16 %v5502
      %v5579 = vunpack.c.l.b16 %v5504
      %v5580 = vunpack.c.l.b16 %v5506
      %v5581 = vunpack.c.l.b16 %v5508
      %v5582 = vunpack.c.l.b16 %v5510
      %v5583 = vpack.c.b16 %v5568, %v5567
      %v5584 = vpack.c.b16 %v5570, %v5569
      %v5585 = vpack.c.b16 %v5572, %v5571
      %v5586 = vpack.c.b16 %v5574, %v5573
      %v5587 = vpack.c.b16 %v5576, %v5575
      %v5588 = vpack.c.b16 %v5578, %v5577
      %v5589 = vpack.c.b16 %v5580, %v5579
      %v5590 = vpack.c.b16 %v5582, %v5581
      %v5591 = vld [vmem:[%s3] sm:$0xf]
      %v5592 = vld [vmem:[%s3 + $0x4] sm:$0xf]
      %v5593 = vld [vmem:[%s3 + $0x8] sm:$0xf]
      %v5594 = vld [vmem:[%s3 + $0xc] sm:$0xf]
      %v5595 = vld [vmem:[%s3 + $0x10] sm:$0xf]
      %v5596 = vld [vmem:[%s3 + $0x14] sm:$0xf]
      %v5597 = vld [vmem:[%s3 + $0x18] sm:$0xf]
      %v5598 = vld [vmem:[%s3 + $0x1c] sm:$0xf]
      %v5599 = vld [vmem:[%s3 + $0x20] sm:$0xf]
      %v5600 = vld [vmem:[%s3 + $0x24] sm:$0xf]
      %v5601 = vld [vmem:[%s3 + $0x28] sm:$0xf]
      %v5602 = vld [vmem:[%s3 + $0x2c] sm:$0xf]
      %v5603 = vld [vmem:[%s3 + $0x30] sm:$0xf]
      %v5604 = vld [vmem:[%s3 + $0x34] sm:$0x3]
      %v5605 = vld [vmem:[%s4] sm:$0x1]
      %v5607 = vlaneseq
      %v5608 = vshrl.u32 %v5607, 7
      %v5609 = vsub.s32 0, %v5608
      %v5610 = vrot.slane %v5605, %v5609
      %v5626 = vunpack.c.l.b16 %v5591
      %v5627 = vunpack.c.l.b16 %v5592
      %v5628 = vunpack.c.l.b16 %v5593
      %v5629 = vunpack.c.l.b16 %v5594
      %v5630 = vunpack.c.l.b16 %v5595
      %v5631 = vunpack.c.l.b16 %v5596
      %v5632 = vunpack.c.l.b16 %v5597
      %v5633 = vunpack.c.l.b16 %v5598
      %v5634 = vunpack.c.l.b16 %v5599
      %v5635 = vunpack.c.l.b16 %v5600
      %v5636 = vunpack.c.l.b16 %v5601
      %v5637 = vunpack.c.l.b16 %v5602
      %v5638 = vunpack.c.l.b16 %v5603
      %v5639 = vunpack.c.l.b16 %v5604
      %v5640 = vpack.c.b16 %v5627, %v5626
      %v5641 = vpack.c.b16 %v5629, %v5628
      %v5642 = vpack.c.b16 %v5631, %v5630
      %v5643 = vpack.c.b16 %v5633, %v5632
      %v5644 = vpack.c.b16 %v5635, %v5634
      %v5645 = vpack.c.b16 %v5637, %v5636
      %v5646 = vpack.c.b16 %v5639, %v5638
      %vm5653 = vcmask 883712
      %v5655 = vsel %vm5653, %v5543, 0
      %v5658 = vsel %vm5653, %v5544, 0
      %v5661 = vsel %vm5653, %v5545, 0
      %v5664 = vsel %vm5653, %v5546, 0
      %v5667 = vsel %vm5653, %v5547, 0
      %v5670 = vsel %vm5653, %v5548, 0
      %v5673 = vsel %vm5653, %v5549, 0
      %v5676 = vsel %vm5653, %v5550, 0
      %v5679 = vsel %vm5653, %v5583, 0
      %v5682 = vsel %vm5653, %v5584, 0
      %v5685 = vsel %vm5653, %v5585, 0
      %v5688 = vsel %vm5653, %v5586, 0
      %v5691 = vsel %vm5653, %v5587, 0
      %v5694 = vsel %vm5653, %v5588, 0
      %v5697 = vsel %vm5653, %v5589, 0
      %v5700 = vsel %vm5653, %v5590, 0
      %vm5702 = vcmask 1045504
      %v5704 = vsel %vm5702, %v5646, 0
      %5706 = vmatprep.subr.bf16.mxu0 0
      %5707 = vmatpush1.bf16.msra.mxu0 %v5640
      %5708 = vmatprep.subr.bf16.mxu0 0
      %5709 = vmatpush1.bf16.msra.mxu0 %v5641
      %5710 = vmatprep.subr.bf16.mxu0 0
      %5711 = vmatpush1.bf16.msra.mxu0 %v5642
      %5712 = vmatprep.subr.bf16.mxu0 0
      %5713 = vmatpush1.bf16.msra.mxu0 %v5643
      %5714 = vmatprep.subr.bf16.mxu0 0
      %5715 = vmatpush1.bf16.msra.mxu0 %v5644
      %5716 = vmatprep.subr.bf16.mxu0 0
      %5717 = vmatpush1.bf16.msra.mxu0 %v5645
      %5718 = vmatprep.subr.bf16.mxu0 0
      %5719 = vmatpush1.bf16.msra.mxu0 %v5704
      %5720 = vmatprep.subr.bf16.mxu0 0
      %5721 = vmatpush1.bf16.msra.mxu0 0
      %5722 = vmatprep.subr.bf16.mxu0 0
      %5723 = vmatpush1.bf16.msra.mxu0 0
      %5724 = vmatprep.subr.bf16.mxu0 0
      %5725 = vmatpush1.bf16.msra.mxu0 0
      %5726 = vmatprep.subr.bf16.mxu0 0
      %5727 = vmatpush1.bf16.msra.mxu0 0
      %5728 = vmatprep.subr.bf16.mxu0 0
      %5729 = vmatpush1.bf16.msra.mxu0 0
      %5730 = vmatprep.subr.bf16.mxu0 0
      %5731 = vmatpush1.bf16.msra.mxu0 0
      %5732 = vmatprep.subr.bf16.mxu0 0
      %5733 = vmatpush1.bf16.msra.mxu0 0
      %5734 = vmatprep.subr.bf16.mxu0 0
      %5735 = vmatpush1.bf16.msra.mxu0 0
      %5736 = vmatprep.subr.bf16.mxu0 0
      %5737 = vmatpush1.bf16.msra.mxu0 0
      %5738 = vmatprep.mubr.bf16.mxu0 0
      %5739 = vmatmul.mubr.bf16.gmra.mrb[0].mxu0 %v5655
      %v5740 = vpop.f32.mrb[0].mxu0
      %v5741 = vadd.f32 %v5610, %v5740
      %v5742 = vpop.f32.mrb[0].mxu0
      %v5743 = vpop.f32.mrb[0].mxu0
      %v5744 = vadd.f32 %v5610, %v5743
      %v5745 = vpop.f32.mrb[0].mxu0
      %5746 = vmatprep.mubr.bf16.mxu0 0
      %5747 = vmatmul.mubr.bf16.gmra.mrb[0].mxu0 %v5658
      %v5748 = vpop.f32.mrb[0].mxu0
      %v5749 = vadd.f32 %v5610, %v5748
      %v5750 = vpop.f32.mrb[0].mxu0
      %v5751 = vpop.f32.mrb[0].mxu0
      %v5752 = vadd.f32 %v5610, %v5751
      %v5753 = vpop.f32.mrb[0].mxu0
      %5754 = vmatprep.mubr.bf16.mxu0 0
      %5755 = vmatmul.mubr.bf16.gmra.mrb[0].mxu0 %v5661
      %v5756 = vpop.f32.mrb[0].mxu0
      %v5757 = vadd.f32 %v5610, %v5756
      %v5758 = vpop.f32.mrb[0].mxu0
      %v5759 = vpop.f32.mrb[0].mxu0
      %v5760 = vadd.f32 %v5610, %v5759
      %v5761 = vpop.f32.mrb[0].mxu0
      %5762 = vmatprep.mubr.bf16.mxu0 0
      %5763 = vmatmul.mubr.bf16.gmra.mrb[0].mxu0 %v5664
      %v5764 = vpop.f32.mrb[0].mxu0
      %v5765 = vadd.f32 %v5610, %v5764
      %v5766 = vpop.f32.mrb[0].mxu0
      %v5767 = vpop.f32.mrb[0].mxu0
      %v5768 = vadd.f32 %v5610, %v5767
      %v5769 = vpop.f32.mrb[0].mxu0
      %5770 = vmatprep.mubr.bf16.mxu0 0
      %5771 = vmatmul.mubr.bf16.gmra.mrb[0].mxu0 %v5667
      %v5772 = vpop.f32.mrb[0].mxu0
      %v5773 = vadd.f32 %v5610, %v5772
      %v5774 = vpop.f32.mrb[0].mxu0
      %v5775 = vpop.f32.mrb[0].mxu0
      %v5776 = vadd.f32 %v5610, %v5775
      %v5777 = vpop.f32.mrb[0].mxu0
      %5778 = vmatprep.mubr.bf16.mxu0 0
      %5779 = vmatmul.mubr.bf16.gmra.mrb[0].mxu0 %v5670
      %v5780 = vpop.f32.mrb[0].mxu0
      %v5781 = vadd.f32 %v5610, %v5780
      %v5782 = vpop.f32.mrb[0].mxu0
      %v5783 = vpop.f32.mrb[0].mxu0
      %v5784 = vadd.f32 %v5610, %v5783
      %v5785 = vpop.f32.mrb[0].mxu0
      %5786 = vmatprep.mubr.bf16.mxu0 0
      %5787 = vmatmul.mubr.bf16.gmra.mrb[0].mxu0 %v5673
      %v5788 = vpop.f32.mrb[0].mxu0
      %v5789 = vadd.f32 %v5610, %v5788
      %v5790 = vpop.f32.mrb[0].mxu0
      %v5791 = vpop.f32.mrb[0].mxu0
      %v5792 = vadd.f32 %v5610, %v5791
      %v5793 = vpop.f32.mrb[0].mxu0
      %5794 = vmatprep.mubr.bf16.mxu0 0
      %5795 = vmatmul.mubr.bf16.gmra.mrb[0].mxu0 %v5676
      %v5796 = vpop.f32.mrb[0].mxu0
      %v5797 = vadd.f32 %v5610, %v5796
      %v5798 = vpop.f32.mrb[0].mxu0
      %v5799 = vpop.f32.mrb[0].mxu0
      %v5800 = vadd.f32 %v5610, %v5799
      %v5801 = vpop.f32.mrb[0].mxu0
      %5802 = vmatprep.mubr.bf16.mxu0 0
      %5803 = vmatmul.mubr.bf16.gmra.mrb[0].mxu0 %v5679
      %v5804 = vpop.f32.mrb[0].mxu0
      %v5805 = vadd.f32 %v5610, %v5804
      %v5806 = vpop.f32.mrb[0].mxu0
      %v5807 = vpop.f32.mrb[0].mxu0
      %v5808 = vadd.f32 %v5610, %v5807
      %v5809 = vpop.f32.mrb[0].mxu0
      %5810 = vmatprep.mubr.bf16.mxu0 0
      %5811 = vmatmul.mubr.bf16.gmra.mrb[0].mxu0 %v5682
      %v5812 = vpop.f32.mrb[0].mxu0
      %v5813 = vadd.f32 %v5610, %v5812
      %v5814 = vpop.f32.mrb[0].mxu0
      %v5815 = vpop.f32.mrb[0].mxu0
      %v5816 = vadd.f32 %v5610, %v5815
      %v5817 = vpop.f32.mrb[0].mxu0
      %5818 = vmatprep.mubr.bf16.mxu0 0
      %5819 = vmatmul.mubr.bf16.gmra.mrb[0].mxu0 %v5685
      %v5820 = vpop.f32.mrb[0].mxu0
      %v5821 = vadd.f32 %v5610, %v5820
      %v5822 = vpop.f32.mrb[0].mxu0
      %v5823 = vpop.f32.mrb[0].mxu0
      %v5824 = vadd.f32 %v5610, %v5823
      %v5825 = vpop.f32.mrb[0].mxu0
      %5826 = vmatprep.mubr.bf16.mxu0 0
      %5827 = vmatmul.mubr.bf16.gmra.mrb[0].mxu0 %v5688
      %v5828 = vpop.f32.mrb[0].mxu0
      %v5829 = vadd.f32 %v5610, %v5828
      %v5830 = vpop.f32.mrb[0].mxu0
      %v5831 = vpop.f32.mrb[0].mxu0
      %v5832 = vadd.f32 %v5610, %v5831
      %v5833 = vpop.f32.mrb[0].mxu0
      %5834 = vmatprep.mubr.bf16.mxu0 0
      %5835 = vmatmul.mubr.bf16.gmra.mrb[0].mxu0 %v5691
      %v5836 = vpop.f32.mrb[0].mxu0
      %v5837 = vadd.f32 %v5610, %v5836
      %v5838 = vpop.f32.mrb[0].mxu0
      %v5839 = vpop.f32.mrb[0].mxu0
      %v5840 = vadd.f32 %v5610, %v5839
      %v5841 = vpop.f32.mrb[0].mxu0
      %5842 = vmatprep.mubr.bf16.mxu0 0
      %5843 = vmatmul.mubr.bf16.gmra.mrb[0].mxu0 %v5694
      %v5844 = vpop.f32.mrb[0].mxu0
      %v5845 = vadd.f32 %v5610, %v5844
      %v5846 = vpop.f32.mrb[0].mxu0
      %v5847 = vpop.f32.mrb[0].mxu0
      %v5848 = vadd.f32 %v5610, %v5847
      %v5849 = vpop.f32.mrb[0].mxu0
      %5850 = vmatprep.mubr.bf16.mxu0 0
      %5851 = vmatmul.mubr.bf16.gmra.mrb[0].mxu0 %v5697
      %v5852 = vpop.f32.mrb[0].mxu0
      %v5853 = vadd.f32 %v5610, %v5852
      %v5854 = vpop.f32.mrb[0].mxu0
      %v5855 = vpop.f32.mrb[0].mxu0
      %v5856 = vadd.f32 %v5610, %v5855
      %v5857 = vpop.f32.mrb[0].mxu0
      %5858 = vmatprep.mubr.bf16.mxu0 0
      %5859 = vmatmul.mubr.bf16.gmra.mrb[0].mxu0 %v5700
      %v5860 = vpop.f32.mrb[0].mxu0
      %v5861 = vadd.f32 %v5610, %v5860
      %v5862 = vpop.f32.mrb[0].mxu0
      %v5863 = vpop.f32.mrb[0].mxu0
      %v5864 = vadd.f32 %v5610, %v5863
      %v5865 = vpop.f32.mrb[0].mxu0
      %5866 = vdwg.mxu0
      %v5867 = vpack.c.bf16 %v5744, %v5741
      %v5868 = vpack.c.bf16 %v5752, %v5749
      %v5869 = vpack.c.bf16 %v5760, %v5757
      %v5870 = vpack.c.bf16 %v5768, %v5765
      %v5871 = vpack.c.bf16 %v5776, %v5773
      %v5872 = vpack.c.bf16 %v5784, %v5781
      %v5873 = vpack.c.bf16 %v5792, %v5789
      %v5874 = vpack.c.bf16 %v5800, %v5797
      %v5875 = vpack.c.bf16 %v5808, %v5805
      %v5876 = vpack.c.bf16 %v5816, %v5813
      %v5877 = vpack.c.bf16 %v5824, %v5821
      %v5878 = vpack.c.bf16 %v5832, %v5829
      %v5879 = vpack.c.bf16 %v5840, %v5837
      %v5880 = vpack.c.bf16 %v5848, %v5845
      %v5881 = vpack.c.bf16 %v5856, %v5853
      %v5882 = vpack.c.bf16 %v5864, %v5861
      %v5899 = vunpack.c.l.b16 %v5867
      %v5900 = vunpack.c.h.b16 %v5867
      %v5901 = vunpack.c.l.b16 %v5868
      %v5902 = vunpack.c.h.b16 %v5868
      %v5903 = vunpack.c.l.b16 %v5869
      %v5904 = vunpack.c.h.b16 %v5869
      %v5905 = vunpack.c.l.b16 %v5870
      %v5906 = vunpack.c.h.b16 %v5870
      %v5907 = vunpack.c.l.b16 %v5871
      %v5908 = vunpack.c.h.b16 %v5871
      %v5909 = vunpack.c.l.b16 %v5872
      %v5910 = vunpack.c.h.b16 %v5872
      %v5911 = vunpack.c.l.b16 %v5873
      %v5912 = vunpack.c.h.b16 %v5873
      %v5913 = vunpack.c.l.b16 %v5874
      %v5914 = vunpack.c.h.b16 %v5874
      %v5915 = vunpack.c.l.b16 %v5875
      %v5916 = vunpack.c.h.b16 %v5875
      %v5917 = vunpack.c.l.b16 %v5876
      %v5918 = vunpack.c.h.b16 %v5876
      %v5919 = vunpack.c.l.b16 %v5877
      %v5920 = vunpack.c.h.b16 %v5877
      %v5921 = vunpack.c.l.b16 %v5878
      %v5922 = vunpack.c.h.b16 %v5878
      %v5923 = vunpack.c.l.b16 %v5879
      %v5924 = vunpack.c.h.b16 %v5879
      %v5925 = vunpack.c.l.b16 %v5880
      %v5926 = vunpack.c.h.b16 %v5880
      %v5927 = vunpack.c.l.b16 %v5881
      %v5928 = vunpack.c.h.b16 %v5881
      %v5929 = vunpack.c.l.b16 %v5882
      %v5930 = vunpack.c.h.b16 %v5882
      %v5931 = vpack.c.b16 %v5899, %v5899
      %v5932 = vpack.c.b16 %v5900, %v5900
      %v5933 = vpack.c.b16 %v5901, %v5901
      %v5934 = vpack.c.b16 %v5902, %v5902
      %v5935 = vpack.c.b16 %v5903, %v5903
      %v5936 = vpack.c.b16 %v5904, %v5904
      %v5937 = vpack.c.b16 %v5905, %v5905
      %v5938 = vpack.c.b16 %v5906, %v5906
      %v5939 = vpack.c.b16 %v5907, %v5907
      %v5940 = vpack.c.b16 %v5908, %v5908
      %v5941 = vpack.c.b16 %v5909, %v5909
      %v5942 = vpack.c.b16 %v5910, %v5910
      %v5943 = vpack.c.b16 %v5911, %v5911
      %v5944 = vpack.c.b16 %v5912, %v5912
      %v5945 = vpack.c.b16 %v5913, %v5913
      %v5946 = vpack.c.b16 %v5914, %v5914
      %v5947 = vpack.c.b16 %v5915, %v5915
      %v5948 = vpack.c.b16 %v5916, %v5916
      %v5949 = vpack.c.b16 %v5917, %v5917
      %v5950 = vpack.c.b16 %v5918, %v5918
      %v5951 = vpack.c.b16 %v5919, %v5919
      %v5952 = vpack.c.b16 %v5920, %v5920
      %v5953 = vpack.c.b16 %v5921, %v5921
      %v5954 = vpack.c.b16 %v5922, %v5922
      %v5955 = vpack.c.b16 %v5923, %v5923
      %v5956 = vpack.c.b16 %v5924, %v5924
      %v5957 = vpack.c.b16 %v5925, %v5925
      %v5958 = vpack.c.b16 %v5926, %v5926
      %v5959 = vpack.c.b16 %v5927, %v5927
      %v5960 = vpack.c.b16 %v5928, %v5928
      %v5961 = vpack.c.b16 %v5929, %v5929
      %v5962 = vpack.c.b16 %v5930, %v5930
      %5995 = vst [vmem:[%s382] sm:$0xf] %v5931
      %5996 = vst [vmem:[%s382 + $0x4] sm:$0xf] %v5932
      %5997 = vst [vmem:[%s382 + $0x8] sm:$0xf] %v5933
      %5998 = vst [vmem:[%s382 + $0xc] sm:$0xf] %v5934
      %5999 = vst [vmem:[%s382 + $0x10] sm:$0xf] %v5935
      %6000 = vst [vmem:[%s382 + $0x14] sm:$0xf] %v5936
      %6001 = vst [vmem:[%s382 + $0x18] sm:$0xf] %v5937
      %6002 = vst [vmem:[%s382 + $0x1c] sm:$0xf] %v5938
      %6003 = vst [vmem:[%s382 + $0x20] sm:$0xf] %v5939
      %6004 = vst [vmem:[%s382 + $0x24] sm:$0xf] %v5940
      %6005 = vst [vmem:[%s382 + $0x28] sm:$0xf] %v5941
      %6006 = vst [vmem:[%s382 + $0x2c] sm:$0xf] %v5942
      %6007 = vst [vmem:[%s382 + $0x30] sm:$0xf] %v5943
      %6008 = vst [vmem:[%s382 + $0x34] sm:$0xf] %v5944
      %6009 = vst [vmem:[%s382 + $0x38] sm:$0xf] %v5945
      %6010 = vst [vmem:[%s382 + $0x3c] sm:$0xf] %v5946
      %6011 = vst [vmem:[%s382 + $0x40] sm:$0xf] %v5947
      %6012 = vst [vmem:[%s382 + $0x44] sm:$0xf] %v5948
      %6013 = vst [vmem:[%s382 + $0x48] sm:$0xf] %v5949
      %6014 = vst [vmem:[%s382 + $0x4c] sm:$0xf] %v5950
      %6015 = vst [vmem:[%s382 + $0x50] sm:$0xf] %v5951
      %6016 = vst [vmem:[%s382 + $0x54] sm:$0xf] %v5952
      %6017 = vst [vmem:[%s382 + $0x58] sm:$0xf] %v5953
      %6018 = vst [vmem:[%s382 + $0x5c] sm:$0xf] %v5954
      %6019 = vst [vmem:[%s382 + $0x60] sm:$0xf] %v5955
      %6020 = vst [vmem:[%s382 + $0x64] sm:$0xf] %v5956
      %6021 = vst [vmem:[%s382 + $0x68] sm:$0xf] %v5957
      %6022 = vst [vmem:[%s382 + $0x6c] sm:$0xf] %v5958
      %6023 = vst [vmem:[%s382 + $0x70] sm:$0xf] %v5959
      %6024 = vst [vmem:[%s382 + $0x74] sm:$0xf] %v5960
      %6025 = vst [vmem:[%s382 + $0x78] sm:$0xf] %v5961
      %6026 = vst [vmem:[%s382 + $0x7c] sm:$0xf] %v5962
      %v6027 = vunpack.c.l.bf16 %v5867
      %v6028 = vunpack.c.h.bf16 %v5867
      %v6029 = vunpack.c.l.bf16 %v5868
      %v6030 = vunpack.c.h.bf16 %v5868
      %v6031 = vunpack.c.l.bf16 %v5869
      %v6032 = vunpack.c.h.bf16 %v5869
      %v6033 = vunpack.c.l.bf16 %v5870
      %v6034 = vunpack.c.h.bf16 %v5870
      %v6035 = vunpack.c.l.bf16 %v5871
      %v6036 = vunpack.c.h.bf16 %v5871
      %v6037 = vunpack.c.l.bf16 %v5872
      %v6038 = vunpack.c.h.bf16 %v5872
      %v6039 = vunpack.c.l.bf16 %v5873
      %v6040 = vunpack.c.h.bf16 %v5873
      %v6041 = vunpack.c.l.bf16 %v5874
      %v6042 = vunpack.c.h.bf16 %v5874
      %v6043 = vunpack.c.l.bf16 %v5875
      %v6044 = vunpack.c.h.bf16 %v5875
      %v6045 = vunpack.c.l.bf16 %v5876
      %v6046 = vunpack.c.h.bf16 %v5876
      %v6047 = vunpack.c.l.bf16 %v5877
      %v6048 = vunpack.c.h.bf16 %v5877
      %v6049 = vunpack.c.l.bf16 %v5878
      %v6050 = vunpack.c.h.bf16 %v5878
      %v6051 = vunpack.c.l.bf16 %v5879
      %v6052 = vunpack.c.h.bf16 %v5879
      %v6053 = vunpack.c.l.bf16 %v5880
      %v6054 = vunpack.c.h.bf16 %v5880
      %v6055 = vunpack.c.l.bf16 %v5881
      %v6056 = vunpack.c.h.bf16 %v5881
      %v6057 = vunpack.c.l.bf16 %v5882
      %v6058 = vunpack.c.h.bf16 %v5882
      %v6059 = vadd.f32 %v6027, %v6028
      %v6060 = vadd.f32 %v6059, %v6029
      %v6061 = vadd.f32 %v6060, %v6030
      %v6062 = vadd.f32 %v6061, %v6031
      %v6063 = vadd.f32 %v6062, %v6032
      %v6064 = vadd.f32 %v6063, %v6033
      %v6065 = vadd.f32 %v6064, %v6034
      %v6066 = vadd.f32 %v6065, %v6035
      %v6067 = vadd.f32 %v6066, %v6036
      %v6068 = vadd.f32 %v6067, %v6037
      %v6069 = vadd.f32 %v6068, %v6038
      %v6070 = vadd.f32 %v6069, %v6039
      %v6071 = vadd.f32 %v6070, %v6040
      %v6072 = vadd.f32 %v6071, %v6041
      %v6073 = vadd.f32 %v6072, %v6042
      %v6074 = vadd.f32 %v6073, %v6043
      %v6075 = vadd.f32 %v6074, %v6044
      %v6076 = vadd.f32 %v6075, %v6045
      %v6077 = vadd.f32 %v6076, %v6046
      %v6078 = vadd.f32 %v6077, %v6047
      %v6079 = vadd.f32 %v6078, %v6048
      %v6080 = vadd.f32 %v6079, %v6049
      %v6081 = vadd.f32 %v6080, %v6050
      %v6082 = vadd.f32 %v6081, %v6051
      %v6083 = vadd.f32 %v6082, %v6052
      %v6084 = vadd.f32 %v6083, %v6053
      %v6085 = vadd.f32 %v6084, %v6054
      %v6086 = vadd.f32 %v6085, %v6055
      %v6087 = vadd.f32 %v6086, %v6056
      %v6088 = vadd.f32 %v6087, %v6057
      %v6089 = vadd.f32 %v6088, %v6058
      %v6090 = vrot.slane %v6089, 4
      %v6091 = vadd.f32 %v6089, %v6090
      %v6092 = vrot.slane %v6091, 2
      %v6093 = vadd.f32 %v6091, %v6092
      %v6094 = vrot.slane %v6093, 1
      %v6095 = vadd.f32 %v6093, %v6094
      %v6096 = vmul.f32 %v6027, %v6027
      %v6097 = vmul.f32 %v6028, %v6028
      %v6098 = vmul.f32 %v6029, %v6029
      %v6099 = vmul.f32 %v6030, %v6030
      %v6100 = vmul.f32 %v6031, %v6031
      %v6101 = vmul.f32 %v6032, %v6032
      %v6102 = vmul.f32 %v6033, %v6033
      %v6103 = vmul.f32 %v6034, %v6034
      %v6104 = vmul.f32 %v6035, %v6035
      %v6105 = vmul.f32 %v6036, %v6036
      %v6106 = vmul.f32 %v6037, %v6037
      %v6107 = vmul.f32 %v6038, %v6038
      %v6108 = vmul.f32 %v6039, %v6039
      %v6109 = vmul.f32 %v6040, %v6040
      %v6110 = vmul.f32 %v6041, %v6041
      %v6111 = vmul.f32 %v6042, %v6042
      %v6112 = vmul.f32 %v6043, %v6043
      %v6113 = vmul.f32 %v6044, %v6044
      %v6114 = vmul.f32 %v6045, %v6045
      %v6115 = vmul.f32 %v6046, %v6046
      %v6116 = vmul.f32 %v6047, %v6047
      %v6117 = vmul.f32 %v6048, %v6048
      %v6118 = vmul.f32 %v6049, %v6049
      %v6119 = vmul.f32 %v6050, %v6050
      %v6120 = vmul.f32 %v6051, %v6051
      %v6121 = vmul.f32 %v6052, %v6052
      %v6122 = vmul.f32 %v6053, %v6053
      %v6123 = vmul.f32 %v6054, %v6054
      %v6124 = vmul.f32 %v6055, %v6055
      %v6125 = vmul.f32 %v6056, %v6056
      %v6126 = vmul.f32 %v6057, %v6057
      %v6127 = vmul.f32 %v6058, %v6058
      %v6128 = vadd.f32 %v6096, %v6097
      %v6129 = vadd.f32 %v6128, %v6098
      %v6130 = vadd.f32 %v6129, %v6099
      %v6131 = vadd.f32 %v6130, %v6100
      %v6132 = vadd.f32 %v6131, %v6101
      %v6133 = vadd.f32 %v6132, %v6102
      %v6134 = vadd.f32 %v6133, %v6103
      %v6135 = vadd.f32 %v6134, %v6104
      %v6136 = vadd.f32 %v6135, %v6105
      %v6137 = vadd.f32 %v6136, %v6106
      %v6138 = vadd.f32 %v6137, %v6107
      %v6139 = vadd.f32 %v6138, %v6108
      %v6140 = vadd.f32 %v6139, %v6109
      %v6141 = vadd.f32 %v6140, %v6110
      %v6142 = vadd.f32 %v6141, %v6111
      %v6143 = vadd.f32 %v6142, %v6112
      %v6144 = vadd.f32 %v6143, %v6113
      %v6145 = vadd.f32 %v6144, %v6114
      %v6146 = vadd.f32 %v6145, %v6115
      %v6147 = vadd.f32 %v6146, %v6116
      %v6148 = vadd.f32 %v6147, %v6117
      %v6149 = vadd.f32 %v6148, %v6118
      %v6150 = vadd.f32 %v6149, %v6119
      %v6151 = vadd.f32 %v6150, %v6120
      %v6152 = vadd.f32 %v6151, %v6121
      %v6153 = vadd.f32 %v6152, %v6122
      %v6154 = vadd.f32 %v6153, %v6123
      %v6155 = vadd.f32 %v6154, %v6124
      %v6156 = vadd.f32 %v6155, %v6125
      %v6157 = vadd.f32 %v6156, %v6126
      %v6158 = vadd.f32 %v6157, %v6127
      %v6159 = vrot.slane %v6158, 4
      %v6160 = vadd.f32 %v6158, %v6159
      %v6161 = vrot.slane %v6160, 2
      %v6162 = vadd.f32 %v6160, %v6161
      %v6163 = vrot.slane %v6162, 1
      %v6164 = vadd.f32 %v6162, %v6163
      %vm6165 = vcmask 1040384
      %v6166 = vsel %vm6165, %v6095, %v6164
      %6167 = vst [vmem:[%s390] sm:$0x3] %v6166
      %p6168 = scmp.lt.s32.totalorder %s22, 1
      %s6169 = scalar_select %p6168, %s22, 1
      %p6170 = scmp.lt.s32.totalorder %s23, 3
      %s6171 = scalar_select %p6170, %s23, 3
      %s6172 = smul.addr %s6171, 32
      %s6173 = smul.addr %s6169, 128
      %s6174 = sadd.s32 %s6172, %s6173
      %s6175 = smul.addr %s6174, 4
      %s6176 = scalar_lea.vmem %s5, %s6175
      %p6177 = scmp.lt.s32.totalorder %s22, 1
      %s6178 = scalar_select %p6177, %s22, 1
      %p6179 = scmp.lt.s32.totalorder %s23, 3
      %s6180 = scalar_select %p6179, %s23, 3
      %s6181 = smul.addr %s6178, 4
      %s6182 = sadd.s32 %s6180, %s6181
      %s6183 = smul.addr %s6182, 2
      %s6184 = scalar_lea.vmem %s6, %s6183
      // Predicated region
      $region41: #{down_block_3d.2} parent=39 // pred_check
        %p6185 = pneg %p180
      $region42: #{down_block_3d.2} parent=39 // pred_check_branch
        %6187 = sbr.rel (%p6185) target = $region44
      $region43: #{down_block_3d.2} parent=39 // pred_region
        _
      $region44: #{down_block_3d.2} parent=39 // pred_fallthru
        _
      // Predicated region
      $region45: #{down_block_3d.2} parent=39 // pred_check
        %p6188 = pneg %p208
      $region46: #{down_block_3d.2} parent=39 // pred_check_branch
        %6190 = sbr.rel (%p6188) target = $region48
      $region47: #{down_block_3d.2} parent=39 // pred_region
        _
      $region48: #{down_block_3d.2} parent=39 // pred_fallthru
        _
    $region40: #{down_block_3d.2} parent=5 // pred_fallthru
      _
    %p6191 = scmp.le.s32.totalorder 2, %s13
    // Predicated region
    $region49: #{down_block_3d.2} parent=5 // pred_check
      %p6192 = pneg %p6191
    $region50: #{down_block_3d.2} parent=5 // pred_check_branch
      %6194 = sbr.rel (%p6192) target = $region52
    $region51: #{down_block_3d.2} parent=5 // pred_region
      %s6195 = ssub.s32 %s13, 2
      // Predicated region
      $region53: #{down_block_3d.2} parent=51 // pred_check
        %p6196 = pneg %p186
      $region54: #{down_block_3d.2} parent=51 // pred_check_branch
        %6198 = sbr.rel (%p6196) target = $region56
      $region55: #{down_block_3d.2} parent=51 // pred_region
        %p6199 = scmp.lt.s32.totalorder %s24, 1
        %s6200 = scalar_select %p6199, %s24, 1
        %p6201 = scmp.lt.s32.totalorder %s25, 3
        %s6202 = scalar_select %p6201, %s25, 3
        %s6203 = smul.addr %s6202, 32
        %s6204 = smul.addr %s6200, 128
        %s6205 = sadd.s32 %s6203, %s6204
        %s6206 = smul.addr %s6205, 4
        %s6207 = scalar_lea.vmem %s5, %s6206
      $region56: #{down_block_3d.2} parent=51 // pred_fallthru
        _
      // Predicated region
      $region57: #{down_block_3d.2} parent=51 // pred_check
        %p6208 = pneg %p214
      $region58: #{down_block_3d.2} parent=51 // pred_check_branch
        %6210 = sbr.rel (%p6208) target = $region60
      $region59: #{down_block_3d.2} parent=51 // pred_region
        %p6211 = scmp.lt.s32.totalorder %s24, 1
        %s6212 = scalar_select %p6211, %s24, 1
        %p6213 = scmp.lt.s32.totalorder %s25, 3
        %s6214 = scalar_select %p6213, %s25, 3
        %s6215 = smul.addr %s6212, 4
        %s6216 = sadd.s32 %s6214, %s6215
        %s6217 = smul.addr %s6216, 2
        %s6218 = scalar_lea.vmem %s6, %s6217
      $region60: #{down_block_3d.2} parent=51 // pred_fallthru
        _
    $region52: #{down_block_3d.2} parent=5 // pred_fallthru
      _
  $region6: #{down_block_3d.2} parent=0 // loop_footer
    %s17 = sadd.s32 1, %s13
  $region7: #{down_block_3d.2} parent=0 // loop_footer_branch
    %12 = sbr.rel target = $region3
  $region8: #{down_block_3d.2} parent=0 // loop_exit
    _

</llo_original>
